<compile_context>
chip_gen: v7x
topology: tpu7x:2x2x1
jax: 0.10.0
libtpu: 0.0.40
codegen_flags: <defaults>
</compile_context>

<pallas_src>
import functools

import jax
import jax.numpy as jnp
from jax.experimental import pallas as pl
from jax.experimental.pallas import tpu as pltpu


def _round_up(v, m):
    return -(-v // m) * m


def _const_index_map(ndim):
    def im(*_):
        return (0,) * ndim
    return im


# ---------------------------------------------------------------------------
# Flat "plane" geometry
#
# A feature map of logical size (H, W) with C channels is stored channel-major as
# (C, Lpad) where index p < Hp*Wp maps to the zero-padded spatial position
# (p // Wp, p % Wp) with Wp = W + 2, Hp = H + 2 (3x3/pad-1 halo baked in); the rest
# of the row is zero.  A 3x3 stride-1 conv then becomes 9 lane-shifted windows of
# length M = H*Wp, which we stack along the contraction dim into one MXU matmul.
# ---------------------------------------------------------------------------
def _plane_geom(h, w):
    wp, hp = w + 2, h + 2
    m = h * wp                                  # conv output window length
    lpad = _round_up(hp * wp + 2, 128)          # +2 slack for the deepest tap read
    return wp, hp, m, lpad


def _phase_geom(h_out, w_out):
    """Geometry of the 2x2 phase planes feeding a stride-2 conv -> (h_out, w_out)."""
    wq = w_out + 2                              # phase pitch == output plane pitch
    rows = h_out + 1
    lq = _round_up(rows * wq + 2, 128)
    return wq, rows, h_out * wq, lq


# ---------------------------------------------------------------------------
# In-kernel helpers (trace-time Python, all shapes static)
# ---------------------------------------------------------------------------
def _conv_taps(plane, taps, m, wmat, bcol):
    """One fused matmul: (Cout, T*Cin) @ (T*Cin, M) with taps folded into K."""
    patches = jnp.concatenate([plane[:, r:r + m] for r in taps], axis=0)
    return jnp.dot(wmat, patches, preferred_element_type=jnp.float32) + bcol


def _conv_phase_taps(phases, taps, m, wmat, bcol):
    """Stride-2 3x3 conv as a 2x2 stride-1 conv over the 4 phase planes."""
    patches = jnp.concatenate([phases[p][:, r:r + m] for (p, r) in taps], axis=0)
    return jnp.dot(wmat, patches, preferred_element_type=jnp.float32) + bcol


def _seal_plane(y_f32, mask, pitch, lpad, act_dtype):
    """Mask spill columns, insert the (pitch+1)-wide zero halo, return a (C, Lpad) plane."""
    c, m = y_f32.shape
    y = (y_f32 * mask).astype(act_dtype)
    parts = [jnp.zeros((c, pitch + 1), act_dtype), y]
    tail_w = lpad - (pitch + 1) - m
    if tail_w:
        parts.append(jnp.zeros((c, tail_w), act_dtype))
    return jnp.concatenate(parts, axis=1)


# ---------------------------------------------------------------------------
# Stage 1 kernel: stem conv + layer1 (all stride-1, 16 channels)
# ---------------------------------------------------------------------------
def _stage1_kernel(x_ref, mask_ref, w_ref, b_ref, o_ref, *, bt, n_size, h, w, act_dtype):
    wp, _, m, lpad = _plane_geom(h, w)
    taps = [i * wp + j for i in range(3) for j in range(3)]
    mask = mask_ref[...]
    nconv = 1 + 2 * n_size
    wmats = [w_ref[k] for k in range(nconv)]
    bcols = [b_ref[k] for k in range(nconv)]
    for b in range(bt):
        plane = x_ref[b]
        y = jnp.maximum(_conv_taps(plane, taps, m, wmats[0], bcols[0]), 0.0)   # stem
        plane = _seal_plane(y, mask, wp, lpad, act_dtype)
        for k in range(n_size):                                                # layer1
            y1 = jnp.maximum(_conv_taps(plane, taps, m, wmats[1 + 2 * k], bcols[1 + 2 * k]), 0.0)
            p1 = _seal_plane(y1, mask, wp, lpad, act_dtype)
            y2 = _conv_taps(p1, taps, m, wmats[2 + 2 * k], bcols[2 + 2 * k])
            sc = plane[:, wp + 1: wp + 1 + m].astype(jnp.float32)              # identity shortcut
            plane = _seal_plane(jnp.maximum(y2 + sc, 0.0), mask, wp, lpad, act_dtype)
        o_ref[b] = plane


def _stage1_call(x_plane, ws, bs, *, h, w, n_size, act_dtype, bt):
    B = x_plane.shape[0]
    lpad = x_plane.shape[-1]
    wp, _, m, _ = _plane_geom(h, w)
    nc = ws.shape[0]
    mask = (jnp.arange(m) % wp < w).astype(jnp.float32).reshape(1, m)
    kernel = functools.partial(_stage1_kernel, bt=bt, n_size=n_size, h=h, w=w,
                               act_dtype=act_dtype)
    return pl.pallas_call(
        kernel,
        out_shape=jax.ShapeDtypeStruct((B, 16, lpad), act_dtype),
        grid=(B // bt,),
        in_specs=[
            pl.BlockSpec((bt, 16, lpad), lambda s: (s, 0, 0)),
            pl.BlockSpec((1, m), _const_index_map(2)),
            pl.BlockSpec((nc, 16, 9 * 16), _const_index_map(3)),
            pl.BlockSpec((nc, 16, 1), _const_index_map(3)),
        ],
        out_specs=pl.BlockSpec((bt, 16, lpad), lambda s: (s, 0, 0)),
        compiler_params=pltpu.CompilerParams(
            dimension_semantics=("parallel",),
            vmem_limit_bytes=32 * 1024 * 1024),
    )(x_plane, mask, ws, bs)


# ---------------------------------------------------------------------------
# Stage 2/3 kernel: one stride-2 BasicBlock (+downsample) + (n-1) stride-1 blocks,
# optionally followed by the fused GAP -> mv -> reparameterize -> fc head.
# ---------------------------------------------------------------------------
def _stage_s2_kernel(x_ref, mask_ref, *args, bt, n_blocks, cout, h, w, act_dtype, with_head):
    wp, _, m, lpad = _plane_geom(h, w)
    s1taps = [i * wp + j for i in range(3) for j in range(3)]
    s2taps = [((i % 2) * 2 + (j % 2), (i // 2) * wp + (j // 2))
              for i in range(3) for j in range(3)]
    mask = mask_ref[...]
    nw = 6 + 4 * (n_blocks - 1)
    wvals = [args[k][...] for k in range(nw)]
    if with_head:
        mvw, mvb, fcw, fcb = [args[nw + k][...] for k in range(4)]
        eps_ref = args[nw + 4]
        mv_out, log_out = args[nw + 5], args[nw + 6]
    else:
        o_ref = args[nw]

    for b in range(bt):
        phases = [x_ref[b, p] for p in range(4)]
        w1, b1, wd, bd, w2, b2 = wvals[:6]
        # stride-2 conv1 + BN + ReLU (taps folded into K over the 4 phase planes)
        y1 = jnp.maximum(_conv_phase_taps(phases, s2taps, m, w1, b1), 0.0)
        p1 = _seal_plane(y1, mask, wp, lpad, act_dtype)
        # stride-1 conv2 + BN
        y2 = _conv_taps(p1, s1taps, m, w2, b2)
        # 1x1 stride-2 downsample + BN: reads only phase (1,1)
        sc = jnp.dot(wd, phases[3][:, :m], preferred_element_type=jnp.float32) + bd
        out = jnp.maximum(y2 + sc, 0.0)
        # remaining stride-1 blocks
        for k in range(n_blocks - 1):
            wa, ba, wb, bb = wvals[6 + 4 * k: 10 + 4 * k]
            plane = _seal_plane(out, mask, wp, lpad, act_dtype)
            ya = jnp.maximum(_conv_taps(plane, s1taps, m, wa, ba), 0.0)
            pa = _seal_plane(ya, mask, wp, lpad, act_dtype)
            yb = _conv_taps(pa, s1taps, m, wb, bb)
            sc2 = plane[:, wp + 1: wp + 1 + m].astype(jnp.float32)
            out = jnp.maximum(yb + sc2, 0.0)

        if with_head:
            # Global average pool over the H*W valid positions (spill columns masked).
            feat = jnp.sum(out * mask, axis=1, keepdims=True) * (1.0 / (h * w))   # (64, 1)
            mv = jnp.dot(mvw, feat, preferred_element_type=jnp.float32) + mvb     # (128, 1)
            mean = mv[:cout]
            logvar = mv[cout:]
            code = eps_ref[0, :, b:b + 1] * jnp.exp(0.5 * logvar) + mean          # reparameterize
            logits = jnp.dot(fcw, code, preferred_element_type=jnp.float32) + fcb
            mv_out[0, :, b:b + 1] = mv
            log_out[0, :, b:b + 1] = logits
        else:
            o_ref[b] = _seal_plane(out, mask, wp, lpad, act_dtype)


def _stage_s2_call(xph, blocks, *, cin, cout, h, w, act_dtype, bt,
                   head_params=None, num_classes=None):
    B = xph.shape[0]
    lq = xph.shape[-1]
    wp, _, m, lpad = _plane_geom(h, w)
    n_blocks = len(blocks)
    nsteps = B // bt
    mask = (jnp.arange(m) % wp < w).astype(jnp.float32).reshape(1, m)

    inputs = [xph, mask]
    in_specs = [pl.BlockSpec((bt, 4, cin, lq), lambda s: (s, 0, 0, 0)),
                pl.BlockSpec((1, m), _const_index_map(2))]

    def add_const(arr):
        inputs.append(arr)
        in_specs.append(pl.BlockSpec(arr.shape, _const_index_map(arr.ndim)))

    blk0 = blocks[0]
    w1, b1 = _prep_conv3x3(blk0["conv1"], blk0["bn1"], cin, act_dtype)
    dw, dbn = blk0["downsample"]
    wd, bd = _prep_conv1x1(dw, dbn, act_dtype)
    w2, b2 = _prep_conv3x3(blk0["conv2"], blk0["bn2"], cout, act_dtype)
    for a in (w1, b1, wd, bd, w2, b2):
        add_const(a)
    for blk in blocks[1:]:
        wa, ba = _prep_conv3x3(blk["conv1"], blk["bn1"], cout, act_dtype)
        wb, bb = _prep_conv3x3(blk["conv2"], blk["bn2"], cout, act_dtype)
        for a in (wa, ba, wb, bb):
            add_const(a)

    if head_params is not None:
        mv_w, mv_b, fc_w, fc_b, eps = head_params
        ncp = _round_up(max(num_classes, 8), 8)
        mvw = mv_w.astype(jnp.float32)                                   # (128, 64)
        mvb = mv_b.reshape(2 * cout, 1).astype(jnp.float32)
        fcw = jnp.zeros((ncp, cout), jnp.float32).at[:num_classes].set(fc_w.astype(jnp.float32))
        fcb = jnp.zeros((ncp, 1), jnp.float32).at[:num_classes, 0].set(fc_b.astype(jnp.float32))
        for a in (mvw, mvb, fcw, fcb):
            add_const(a)
        eps_slab = eps.astype(jnp.float32).reshape(nsteps, bt, cout).transpose(0, 2, 1)
        inputs.append(eps_slab)
        in_specs.append(pl.BlockSpec((1, cout, bt), lambda s: (s, 0, 0)))
        out_shape = (jax.ShapeDtypeStruct((nsteps, 2 * cout, bt), jnp.float32),
                     jax.ShapeDtypeStruct((nsteps, ncp, bt), jnp.float32))
        out_specs = (pl.BlockSpec((1, 2 * cout, bt), lambda s: (s, 0, 0)),
                     pl.BlockSpec((1, ncp, bt), lambda s: (s, 0, 0)))
    else:
        out_shape = jax.ShapeDtypeStruct((B, cout, lpad), act_dtype)
        out_specs = pl.BlockSpec((bt, cout, lpad), lambda s: (s, 0, 0))

    kernel = functools.partial(
        _stage_s2_kernel, bt=bt, n_blocks=n_blocks, cout=cout, h=h, w=w,
        act_dtype=act_dtype, with_head=head_params is not None)
    return pl.pallas_call(
        kernel, out_shape=out_shape, grid=(nsteps,),
        in_specs=in_specs, out_specs=out_specs,
        compiler_params=pltpu.CompilerParams(
            dimension_semantics=("parallel",),
            vmem_limit_bytes=32 * 1024 * 1024),
    )(*inputs)


# ---------------------------------------------------------------------------
# Host-side layout / weight preparation (tiny XLA ops, traced inside the same jit)
# ---------------------------------------------------------------------------
def _image_to_plane(x_nchw, act_dtype):
    B, C, H, W = x_nchw.shape
    assert C <= 16
    wp, hp, _, lpad = _plane_geom(H, W)
    xp = jnp.pad(x_nchw, ((0, 0), (0, 16 - C), (1, 1), (1, 1)))
    xp = xp.reshape(B, 16, hp * wp)
    xp = jnp.pad(xp, ((0, 0), (0, 0), (0, lpad - hp * wp)))
    return xp.astype(act_dtype)


def _plane_to_phases(plane, h, w):
    """(B, C, Lpad) plane of an (h, w) map -> (B, 4, C, Lq) 2x2 phase planes (h, w even)."""
    B, C, _ = plane.shape
    wp, hp, _, _ = _plane_geom(h, w)
    wq, rows, _, lq = _phase_geom(h // 2, w // 2)
    xp = plane[:, :, :hp * wp].reshape(B, C, hp, wp)
    ph = xp.reshape(B, C, hp // 2, 2, wp // 2, 2).transpose(0, 3, 5, 1, 2, 4)
    ph = jnp.pad(ph, ((0, 0),) * 5 + ((0, wq - wp // 2),))          # pitch -> w/2 + 2
    ph = ph.reshape(B, 4, C, rows * wq)
    return jnp.pad(ph, ((0, 0), (0, 0), (0, 0), (0, lq - rows * wq)))


def _fold_bn(bn):
    gamma, beta, rmean, rvar = bn
    scale = gamma / jnp.sqrt(rvar + 1e-5)
    return scale, beta - rmean * scale


def _prep_conv3x3(w_oihw, bn, cin_pad, act_dtype):
    cout, cin = w_oihw.shape[0], w_oihw.shape[1]
    scale, bias = _fold_bn(bn)
    wt = jnp.transpose(w_oihw, (0, 2, 3, 1))                        # (O, 3, 3, Cin)
    wt = jnp.pad(wt, ((0, 0), (0, 0), (0, 0), (0, cin_pad - cin)))
    wt = wt.reshape(cout, 9 * cin_pad) * scale[:, None]             # fold BN scale
    return wt.astype(act_dtype), bias.reshape(cout, 1).astype(jnp.float32)


def _prep_conv1x1(w, bn, act_dtype):
    cout, cin = w.shape[0], w.shape[1]
    scale, bias = _fold_bn(bn)
    wt = w.reshape(cout, cin) * scale[:, None]
    return wt.astype(act_dtype), bias.reshape(cout, 1).astype(jnp.float32)


def _stage1_weights(params, act_dtype):
    ws, bs = [], []
    w0, b0 = _prep_conv3x3(params["conv1"], params["bn1"], 16, act_dtype)
    ws.append(w0); bs.append(b0)
    for blk in params["layer1"]:
        for cw, cb in (("conv1", "bn1"), ("conv2", "bn2")):
            wk, bk = _prep_conv3x3(blk[cw], blk[cb], 16, act_dtype)
            ws.append(wk); bs.append(bk)
    return jnp.stack(ws), jnp.stack(bs)


# ---------------------------------------------------------------------------
# Full forward pass (3 pallas_calls)
# ---------------------------------------------------------------------------
def resnet_vib_forward(params, x_nchw, eps, *, n_size, num_classes,
                       act_dtype=jnp.bfloat16, bt=None):
    B, _, H, W = x_nchw.shape
    assert n_size >= 1 and H % 4 == 0 and W % 4 == 0
    if bt is None:
        bt = 2 if (B % 2 == 0 and B >= 4) else 1
    assert B % bt == 0

    # Stage 1: stem + layer1 (stride 1 @ 16 ch) -- one fused kernel.
    xpl = _image_to_plane(x_nchw.astype(jnp.float32), act_dtype)
    ws, bs = _stage1_weights(params, act_dtype)
    p1 = _stage1_call(xpl, ws, bs, h=H, w=W, n_size=n_size, act_dtype=act_dtype, bt=bt)

    # Stage 2: layer2 (stride-2 block + stride-1 blocks @ 32 ch) -- one fused kernel.
    ph2 = _plane_to_phases(p1, H, W)
    p2 = _stage_s2_call(ph2, params["layer2"], cin=16, cout=32, h=H // 2, w=W // 2,
                        act_dtype=act_dtype, bt=bt)

    # Stage 3 + VIB head: layer3 + GAP + mv + reparameterize + fc -- one fused kernel.
    ph3 = _plane_to_phases(p2, H // 2, W // 2)
    mv_w, mv_b = params["mv"]
    fc_w, fc_b = params["fc"]
    mv_slab, logit_slab = _stage_s2_call(
        ph3, params["layer3"], cin=32, cout=64, h=H // 4, w=W // 4,
        act_dtype=act_dtype, bt=bt,
        head_params=(mv_w, mv_b, fc_w, fc_b, eps), num_classes=num_classes)

    mv = mv_slab.transpose(0, 2, 1).reshape(B, 2 * 64)
    logits = logit_slab.transpose(0, 2, 1).reshape(B, -1)[:, :num_classes]
    return logits, mv[:, :64], mv[:, 64:]


# ---------------------------------------------------------------------------
# Parameters (torch layouts, kaiming/default-BN init like the PyTorch module)
# ---------------------------------------------------------------------------
LAYER_SPECS = ((16, 1), (32, 2), (64, 2))


def kaiming_conv(key, cout, cin, kh, kw):
    fan_in = cin * kh * kw
    return jax.random.normal(key, (cout, cin, kh, kw), jnp.float32) * (2.0 / fan_in) ** 0.5


def default_bn(c):
    return (jnp.ones((c,), jnp.float32), jnp.zeros((c,), jnp.float32),
            jnp.zeros((c,), jnp.float32), jnp.ones((c,), jnp.float32))


def linear_params(key, in_f, out_f):
    k1, k2 = jax.random.split(key)
    bound = 1.0 / (in_f ** 0.5)
    w = jax.random.uniform(k1, (out_f, in_f), jnp.float32, -bound, bound)
    b = jax.random.uniform(k2, (out_f,), jnp.float32, -bound, bound)
    return w, b


def make_basic_block_params(key, inplane, planes, stride):
    k1, k2, k3 = jax.random.split(key, 3)
    p = {"conv1": kaiming_conv(k1, planes, inplane, 3, 3), "bn1": default_bn(planes),
         "conv2": kaiming_conv(k2, planes, planes, 3, 3), "bn2": default_bn(planes),
         "downsample": None}
    if stride != 1 or inplane != planes:
        p["downsample"] = (kaiming_conv(k3, planes, inplane, 1, 1), default_bn(planes))
    return p


def make_resnet_vib_params(key, n_size=1, num_classes=10):
    keys = jax.random.split(key, 3 + 3 * n_size)
    params = {"conv1": kaiming_conv(keys[0], 16, 3, 3, 3), "bn1": default_bn(16)}
    inplane, ki = 16, 1
    for li, (planes, stride) in enumerate(LAYER_SPECS, start=1):
        blocks = []
        for s in [stride] + [1] * (n_size - 1):
            blocks.append(make_basic_block_params(keys[ki], inplane, planes, s))
            inplane = planes
            ki += 1
        params[f"layer{li}"] = blocks
    params["fc"] = linear_params(keys[ki], 64, num_classes)
    params["mv"] = linear_params(keys[ki + 1], 64, 64 * 2)
    return params


# ---------------------------------------------------------------------------
# Pure-JAX reference (lax.conv) used for a numerical sanity check of the f32 path
# ---------------------------------------------------------------------------
def _ref_conv(x, w_oihw, bn, stride, pad, relu):
    gamma, beta, rmean, rvar = bn
    scale = gamma / jnp.sqrt(rvar + 1e-5)
    bias = beta - rmean * scale
    y = jax.lax.conv_general_dilated(
        x, jnp.transpose(w_oihw, (2, 3, 1, 0)),
        window_strides=(stride, stride), padding=((pad, pad), (pad, pad)),
        dimension_numbers=("NHWC", "HWIO", "NHWC"))
    y = y * scale + bias
    return jnp.maximum(y, 0.0) if relu else y


def _ref_forward(params, x_nchw, eps, *, n_size, num_classes):
    x = jnp.transpose(x_nchw, (0, 2, 3, 1)).astype(jnp.float32)
    x = _ref_conv(x, params["conv1"], params["bn1"], 1, 1, True)
    for li, (planes, stride) in enumerate(LAYER_SPECS, start=1):
        for bi, s in enumerate([stride] + [1] * (n_size - 1)):
            p = params[f"layer{li}"][bi]
            out = _ref_conv(x, p["conv1"], p["bn1"], s, 1, True)
            out = _ref_conv(out, p["conv2"], p["bn2"], 1, 1, False)
            if p["downsample"] is not None:
                dw, dbn = p["downsample"]
                sc = _ref_conv(x, dw, dbn, s, 0, False)
            else:
                sc = x
            x = jnp.maximum(out + sc, 0.0)
    feat = jnp.mean(x, axis=(1, 2))
    mv_w, mv_b = params["mv"]
    fc_w, fc_b = params["fc"]
    mv = feat @ mv_w.T + mv_b
    mean, logvar = mv[:, :64], mv[:, 64:]
    code = eps * jnp.exp(logvar / 2) + mean
    return code @ fc_w.T + fc_b, mean, logvar


# ---------------------------------------------------------------------------
if __name__ == "__main__":
    key = jax.random.PRNGKey(0)
    kp, kx, keps = jax.random.split(key, 3)

    n_size, num_classes = 1, 10
    B, C, H, W = 2, 3, 16, 16

    params = make_resnet_vib_params(kp, n_size=n_size, num_classes=num_classes)
    x = jax.random.normal(kx, (B, C, H, W), jnp.float32)
    eps = jax.random.normal(keps, (B, 64), jnp.float32)   # deterministic reparam noise

    # Numerical sanity check of the Pallas path (f32 activations) vs plain-JAX reference.
    p32 = jax.jit(functools.partial(resnet_vib_forward, n_size=n_size,
                                    num_classes=num_classes,
                                    act_dtype=jnp.float32))(params, x, eps)
    ref = jax.jit(functools.partial(_ref_forward, n_size=n_size,
                                    num_classes=num_classes))(params, x, eps)
    for a, b in zip(p32, ref):
        assert jnp.allclose(a, b, atol=5e-2, rtol=5e-2), float(jnp.max(jnp.abs(a - b)))

    # Production path: bf16 activation/weight storage, f32 accumulation + epilogue.
    fwd = jax.jit(functools.partial(resnet_vib_forward, n_size=n_size,
                                    num_classes=num_classes,
                                    act_dtype=jnp.bfloat16))
    out, mean, logvar = fwd(params, x, eps)
    jax.block_until_ready((out, mean, logvar))

    assert out.shape == (B, num_classes)
    assert mean.shape == (B, 64)
    assert logvar.shape == (B, 64)
    assert bool(jnp.all(jnp.isfinite(out)))
    print("KERNEL_OK")
</pallas_src>

<mosaic_0001>
module attributes {stable_mosaic.version = 11 : i64} {
  func.func @_stage1_kernel(%arg0: i32, %arg1: memref<1x16x384xf32, #tpu.memory_space<vmem>>, %arg2: memref<1x288xf32, #tpu.memory_space<vmem>>, %arg3: memref<3x16x144xf32, #tpu.memory_space<vmem>>, %arg4: memref<3x16x1xf32, #tpu.memory_space<vmem>>, %arg5: memref<1x16x384xf32, #tpu.memory_space<vmem>>) attributes {dimension_semantics = [#tpu.dimension_semantics<parallel>], iteration_bounds = array<i64: 2>, scalar_prefetch = 0 : i64, scratch_operands = 0 : i64, tpu.core_type = #tpu.core_type<tc>, window_params = [{transform_indices = @transform_0, window_bounds = array<i64: 1, 16, 384>}, {pipeline_mode = #tpu.pipeline_mode<synchronous>, transform_indices = @transform_1, window_bounds = array<i64: 1, 288>}, {pipeline_mode = #tpu.pipeline_mode<synchronous>, transform_indices = @transform_2, window_bounds = array<i64: 3, 16, 144>}, {pipeline_mode = #tpu.pipeline_mode<synchronous>, transform_indices = @transform_3, window_bounds = array<i64: 3, 16, 1>}, {transform_indices = @transform_4, window_bounds = array<i64: 1, 16, 384>}]} {
    %c0 = arith.constant 0 : index
    %c0_0 = arith.constant 0 : index
    %0 = vector.load %arg2[%c0, %c0_0] : memref<1x288xf32, #tpu.memory_space<vmem>>, vector<1x288xf32>
    %c0_1 = arith.constant 0 : index
    %c0_2 = arith.constant 0 : index
    %c0_3 = arith.constant 0 : index
    %1 = vector.load %arg3[%c0_1, %c0_2, %c0_3] : memref<3x16x144xf32, #tpu.memory_space<vmem>>, vector<1x16x144xf32>
    %2 = vector.shape_cast %1 : vector<1x16x144xf32> to vector<16x144xf32>
    %c1 = arith.constant 1 : index
    %c0_4 = arith.constant 0 : index
    %c0_5 = arith.constant 0 : index
    %3 = vector.load %arg3[%c1, %c0_4, %c0_5] : memref<3x16x144xf32, #tpu.memory_space<vmem>>, vector<1x16x144xf32>
    %4 = vector.shape_cast %3 : vector<1x16x144xf32> to vector<16x144xf32>
    %c2 = arith.constant 2 : index
    %c0_6 = arith.constant 0 : index
    %c0_7 = arith.constant 0 : index
    %5 = vector.load %arg3[%c2, %c0_6, %c0_7] : memref<3x16x144xf32, #tpu.memory_space<vmem>>, vector<1x16x144xf32>
    %6 = vector.shape_cast %5 : vector<1x16x144xf32> to vector<16x144xf32>
    %c0_8 = arith.constant 0 : index
    %c0_9 = arith.constant 0 : index
    %c0_10 = arith.constant 0 : index
    %7 = vector.load %arg4[%c0_8, %c0_9, %c0_10] : memref<3x16x1xf32, #tpu.memory_space<vmem>>, vector<1x16x1xf32>
    %8 = vector.shape_cast %7 : vector<1x16x1xf32> to vector<16x1xf32>
    %c1_11 = arith.constant 1 : index
    %c0_12 = arith.constant 0 : index
    %c0_13 = arith.constant 0 : index
    %9 = vector.load %arg4[%c1_11, %c0_12, %c0_13] : memref<3x16x1xf32, #tpu.memory_space<vmem>>, vector<1x16x1xf32>
    %10 = vector.shape_cast %9 : vector<1x16x1xf32> to vector<16x1xf32>
    %c2_14 = arith.constant 2 : index
    %c0_15 = arith.constant 0 : index
    %c0_16 = arith.constant 0 : index
    %11 = vector.load %arg4[%c2_14, %c0_15, %c0_16] : memref<3x16x1xf32, #tpu.memory_space<vmem>>, vector<1x16x1xf32>
    %12 = vector.shape_cast %11 : vector<1x16x1xf32> to vector<16x1xf32>
    %c0_17 = arith.constant 0 : index
    %c0_18 = arith.constant 0 : index
    %c0_19 = arith.constant 0 : index
    %13 = vector.load %arg1[%c0_17, %c0_18, %c0_19] : memref<1x16x384xf32, #tpu.memory_space<vmem>>, vector<1x16x384xf32>
    %14 = vector.shape_cast %13 : vector<1x16x384xf32> to vector<16x384xf32>
    %15 = vector.extract_strided_slice %14 {offsets = [0, 0], sizes = [16, 288], strides = [1, 1]} : vector<16x384xf32> to vector<16x288xf32>
    %16 = vector.extract_strided_slice %14 {offsets = [0, 1], sizes = [16, 288], strides = [1, 1]} : vector<16x384xf32> to vector<16x288xf32>
    %17 = vector.extract_strided_slice %14 {offsets = [0, 2], sizes = [16, 288], strides = [1, 1]} : vector<16x384xf32> to vector<16x288xf32>
    %18 = vector.extract_strided_slice %14 {offsets = [0, 18], sizes = [16, 288], strides = [1, 1]} : vector<16x384xf32> to vector<16x288xf32>
    %19 = vector.extract_strided_slice %14 {offsets = [0, 19], sizes = [16, 288], strides = [1, 1]} : vector<16x384xf32> to vector<16x288xf32>
    %20 = vector.extract_strided_slice %14 {offsets = [0, 20], sizes = [16, 288], strides = [1, 1]} : vector<16x384xf32> to vector<16x288xf32>
    %21 = vector.extract_strided_slice %14 {offsets = [0, 36], sizes = [16, 288], strides = [1, 1]} : vector<16x384xf32> to vector<16x288xf32>
    %22 = vector.extract_strided_slice %14 {offsets = [0, 37], sizes = [16, 288], strides = [1, 1]} : vector<16x384xf32> to vector<16x288xf32>
    %23 = vector.extract_strided_slice %14 {offsets = [0, 38], sizes = [16, 288], strides = [1, 1]} : vector<16x384xf32> to vector<16x288xf32>
    %24 = tpu.concatenate %15, %16, %17, %18, %19, %20, %21, %22, %23 in 0 : vector<16x288xf32>, vector<16x288xf32>, vector<16x288xf32>, vector<16x288xf32>, vector<16x288xf32>, vector<16x288xf32>, vector<16x288xf32>, vector<16x288xf32>, vector<16x288xf32> -> vector<144x288xf32>
    %cst = arith.constant dense<0.000000e+00> : vector<16x288xf32>
    %25 = tpu.matmul %2, %24, %cst {dimension_numbers = #tpu.dot_dimension_numbers<[1], [0], [0], [1], [0, 0, 1, 1], [], []>} : vector<16x144xf32>, vector<144x288xf32>, vector<16x288xf32> -> vector<16x288xf32>
    %26 = vector.broadcast %8 : vector<16x1xf32> to vector<16x288xf32>
    %27 = arith.addf %25, %26 : vector<16x288xf32>
    %cst_20 = arith.constant 0.000000e+00 : f32
    %28 = vector.broadcast %cst_20 : f32 to vector<16x288xf32>
    %29 = arith.maximumf %27, %28 : vector<16x288xf32>
    %30 = vector.broadcast %0 : vector<1x288xf32> to vector<16x288xf32>
    %31 = arith.mulf %29, %30 : vector<16x288xf32>
    %cst_21 = arith.constant 0.000000e+00 : f32
    %32 = vector.broadcast %cst_21 : f32 to vector<16x19xf32>
    %cst_22 = arith.constant 0.000000e+00 : f32
    %33 = vector.broadcast %cst_22 : f32 to vector<16x77xf32>
    %34 = tpu.concatenate %32, %31, %33 in 1 : vector<16x19xf32>, vector<16x288xf32>, vector<16x77xf32> -> vector<16x384xf32>
    %35 = vector.extract_strided_slice %34 {offsets = [0, 0], sizes = [16, 288], strides = [1, 1]} : vector<16x384xf32> to vector<16x288xf32>
    %36 = vector.extract_strided_slice %34 {offsets = [0, 1], sizes = [16, 288], strides = [1, 1]} : vector<16x384xf32> to vector<16x288xf32>
    %37 = vector.extract_strided_slice %34 {offsets = [0, 2], sizes = [16, 288], strides = [1, 1]} : vector<16x384xf32> to vector<16x288xf32>
    %38 = vector.extract_strided_slice %34 {offsets = [0, 18], sizes = [16, 288], strides = [1, 1]} : vector<16x384xf32> to vector<16x288xf32>
    %39 = vector.extract_strided_slice %34 {offsets = [0, 19], sizes = [16, 288], strides = [1, 1]} : vector<16x384xf32> to vector<16x288xf32>
    %40 = vector.extract_strided_slice %34 {offsets = [0, 20], sizes = [16, 288], strides = [1, 1]} : vector<16x384xf32> to vector<16x288xf32>
    %41 = vector.extract_strided_slice %34 {offsets = [0, 36], sizes = [16, 288], strides = [1, 1]} : vector<16x384xf32> to vector<16x288xf32>
    %42 = vector.extract_strided_slice %34 {offsets = [0, 37], sizes = [16, 288], strides = [1, 1]} : vector<16x384xf32> to vector<16x288xf32>
    %43 = vector.extract_strided_slice %34 {offsets = [0, 38], sizes = [16, 288], strides = [1, 1]} : vector<16x384xf32> to vector<16x288xf32>
    %44 = tpu.concatenate %35, %36, %37, %38, %39, %40, %41, %42, %43 in 0 : vector<16x288xf32>, vector<16x288xf32>, vector<16x288xf32>, vector<16x288xf32>, vector<16x288xf32>, vector<16x288xf32>, vector<16x288xf32>, vector<16x288xf32>, vector<16x288xf32> -> vector<144x288xf32>
    %cst_23 = arith.constant dense<0.000000e+00> : vector<16x288xf32>
    %45 = tpu.matmul %4, %44, %cst_23 {dimension_numbers = #tpu.dot_dimension_numbers<[1], [0], [0], [1], [0, 0, 1, 1], [], []>} : vector<16x144xf32>, vector<144x288xf32>, vector<16x288xf32> -> vector<16x288xf32>
    %46 = vector.broadcast %10 : vector<16x1xf32> to vector<16x288xf32>
    %47 = arith.addf %45, %46 : vector<16x288xf32>
    %cst_24 = arith.constant 0.000000e+00 : f32
    %48 = vector.broadcast %cst_24 : f32 to vector<16x288xf32>
    %49 = arith.maximumf %47, %48 : vector<16x288xf32>
    %50 = vector.broadcast %0 : vector<1x288xf32> to vector<16x288xf32>
    %51 = arith.mulf %49, %50 : vector<16x288xf32>
    %cst_25 = arith.constant 0.000000e+00 : f32
    %52 = vector.broadcast %cst_25 : f32 to vector<16x19xf32>
    %cst_26 = arith.constant 0.000000e+00 : f32
    %53 = vector.broadcast %cst_26 : f32 to vector<16x77xf32>
    %54 = tpu.concatenate %52, %51, %53 in 1 : vector<16x19xf32>, vector<16x288xf32>, vector<16x77xf32> -> vector<16x384xf32>
    %55 = vector.extract_strided_slice %54 {offsets = [0, 0], sizes = [16, 288], strides = [1, 1]} : vector<16x384xf32> to vector<16x288xf32>
    %56 = vector.extract_strided_slice %54 {offsets = [0, 1], sizes = [16, 288], strides = [1, 1]} : vector<16x384xf32> to vector<16x288xf32>
    %57 = vector.extract_strided_slice %54 {offsets = [0, 2], sizes = [16, 288], strides = [1, 1]} : vector<16x384xf32> to vector<16x288xf32>
    %58 = vector.extract_strided_slice %54 {offsets = [0, 18], sizes = [16, 288], strides = [1, 1]} : vector<16x384xf32> to vector<16x288xf32>
    %59 = vector.extract_strided_slice %54 {offsets = [0, 19], sizes = [16, 288], strides = [1, 1]} : vector<16x384xf32> to vector<16x288xf32>
    %60 = vector.extract_strided_slice %54 {offsets = [0, 20], sizes = [16, 288], strides = [1, 1]} : vector<16x384xf32> to vector<16x288xf32>
    %61 = vector.extract_strided_slice %54 {offsets = [0, 36], sizes = [16, 288], strides = [1, 1]} : vector<16x384xf32> to vector<16x288xf32>
    %62 = vector.extract_strided_slice %54 {offsets = [0, 37], sizes = [16, 288], strides = [1, 1]} : vector<16x384xf32> to vector<16x288xf32>
    %63 = vector.extract_strided_slice %54 {offsets = [0, 38], sizes = [16, 288], strides = [1, 1]} : vector<16x384xf32> to vector<16x288xf32>
    %64 = tpu.concatenate %55, %56, %57, %58, %59, %60, %61, %62, %63 in 0 : vector<16x288xf32>, vector<16x288xf32>, vector<16x288xf32>, vector<16x288xf32>, vector<16x288xf32>, vector<16x288xf32>, vector<16x288xf32>, vector<16x288xf32>, vector<16x288xf32> -> vector<144x288xf32>
    %cst_27 = arith.constant dense<0.000000e+00> : vector<16x288xf32>
    %65 = tpu.matmul %6, %64, %cst_27 {dimension_numbers = #tpu.dot_dimension_numbers<[1], [0], [0], [1], [0, 0, 1, 1], [], []>} : vector<16x144xf32>, vector<144x288xf32>, vector<16x288xf32> -> vector<16x288xf32>
    %66 = vector.broadcast %12 : vector<16x1xf32> to vector<16x288xf32>
    %67 = arith.addf %65, %66 : vector<16x288xf32>
    %68 = vector.extract_strided_slice %34 {offsets = [0, 19], sizes = [16, 288], strides = [1, 1]} : vector<16x384xf32> to vector<16x288xf32>
    %69 = arith.addf %67, %68 : vector<16x288xf32>
    %cst_28 = arith.constant 0.000000e+00 : f32
    %70 = vector.broadcast %cst_28 : f32 to vector<16x288xf32>
    %71 = arith.maximumf %69, %70 : vector<16x288xf32>
    %72 = vector.broadcast %0 : vector<1x288xf32> to vector<16x288xf32>
    %73 = arith.mulf %71, %72 : vector<16x288xf32>
    %cst_29 = arith.constant 0.000000e+00 : f32
    %74 = vector.broadcast %cst_29 : f32 to vector<16x19xf32>
    %cst_30 = arith.constant 0.000000e+00 : f32
    %75 = vector.broadcast %cst_30 : f32 to vector<16x77xf32>
    %76 = tpu.concatenate %74, %73, %75 in 1 : vector<16x19xf32>, vector<16x288xf32>, vector<16x77xf32> -> vector<16x384xf32>
    %c0_31 = arith.constant 0 : index
    %c0_32 = arith.constant 0 : index
    %c0_33 = arith.constant 0 : index
    %77 = vector.load %arg5[%c0_31, %c0_32, %c0_33] : memref<1x16x384xf32, #tpu.memory_space<vmem>>, vector<1x16x384xf32>
    %78 = vector.shape_cast %77 : vector<1x16x384xf32> to vector<16x384xf32>
    %79 = vector.shape_cast %76 : vector<16x384xf32> to vector<1x16x384xf32>
    tpu.vector_store %arg5[%c0_31, %c0_32, %c0_33], %79 {strides = array<i32>} : memref<1x16x384xf32, #tpu.memory_space<vmem>>, vector<1x16x384xf32>,
    return
  }
  func.func @transform_0(%arg0: i32) -> (i32, i32, i32) {
    %c0_i32 = arith.constant 0 : i32
    %c0_i32_0 = arith.constant 0 : i32
    %c0_i32_1 = arith.constant 0 : i32
    return %arg0, %c0_i32, %c0_i32_0 : i32, i32, i32
  }
  func.func @transform_1(%arg0: i32) -> (i32, i32) {
    %c0_i32 = arith.constant 0 : i32
    %c0_i32_0 = arith.constant 0 : i32
    %c0_i32_1 = arith.constant 0 : i32
    return %c0_i32, %c0_i32_0 : i32, i32
  }
  func.func @transform_2(%arg0: i32) -> (i32, i32, i32) {
    %c0_i32 = arith.constant 0 : i32
    %c0_i32_0 = arith.constant 0 : i32
    %c0_i32_1 = arith.constant 0 : i32
    %c0_i32_2 = arith.constant 0 : i32
    return %c0_i32, %c0_i32_0, %c0_i32_1 : i32, i32, i32
  }
  func.func @transform_3(%arg0: i32) -> (i32, i32, i32) {
    %c0_i32 = arith.constant 0 : i32
    %c0_i32_0 = arith.constant 0 : i32
    %c0_i32_1 = arith.constant 0 : i32
    %c0_i32_2 = arith.constant 0 : i32
    return %c0_i32, %c0_i32_0, %c0_i32_1 : i32, i32, i32
  }
  func.func @transform_4(%arg0: i32) -> (i32, i32, i32) {
    %c0_i32 = arith.constant 0 : i32
    %c0_i32_0 = arith.constant 0 : i32
    %c0_i32_1 = arith.constant 0 : i32
    return %arg0, %c0_i32, %c0_i32_0 : i32, i32, i32
  }
}

module attributes {stable_mosaic.version = 11 : i64} {
  func.func @_stage_s2_kernel(%arg0: i32, %arg1: memref<1x4x16x128xf32, #tpu.memory_space<vmem>>, %arg2: memref<1x80xf32, #tpu.memory_space<vmem>>, %arg3: memref<32x144xf32, #tpu.memory_space<vmem>>, %arg4: memref<32x1xf32, #tpu.memory_space<vmem>>, %arg5: memref<32x16xf32, #tpu.memory_space<vmem>>, %arg6: memref<32x1xf32, #tpu.memory_space<vmem>>, %arg7: memref<32x288xf32, #tpu.memory_space<vmem>>, %arg8: memref<32x1xf32, #tpu.memory_space<vmem>>, %arg9: memref<1x32x128xf32, #tpu.memory_space<vmem>>) attributes {dimension_semantics = [#tpu.dimension_semantics<parallel>], iteration_bounds = array<i64: 2>, scalar_prefetch = 0 : i64, scratch_operands = 0 : i64, tpu.core_type = #tpu.core_type<tc>, window_params = [{transform_indices = @transform_0, window_bounds = array<i64: 1, 4, 16, 128>}, {pipeline_mode = #tpu.pipeline_mode<synchronous>, transform_indices = @transform_1, window_bounds = array<i64: 1, 80>}, {pipeline_mode = #tpu.pipeline_mode<synchronous>, transform_indices = @transform_2, window_bounds = array<i64: 32, 144>}, {pipeline_mode = #tpu.pipeline_mode<synchronous>, transform_indices = @transform_3, window_bounds = array<i64: 32, 1>}, {pipeline_mode = #tpu.pipeline_mode<synchronous>, transform_indices = @transform_4, window_bounds = array<i64: 32, 16>}, {pipeline_mode = #tpu.pipeline_mode<synchronous>, transform_indices = @transform_5, window_bounds = array<i64: 32, 1>}, {pipeline_mode = #tpu.pipeline_mode<synchronous>, transform_indices = @transform_6, window_bounds = array<i64: 32, 288>}, {pipeline_mode = #tpu.pipeline_mode<synchronous>, transform_indices = @transform_7, window_bounds = array<i64: 32, 1>}, {transform_indices = @transform_8, window_bounds = array<i64: 1, 32, 128>}]} {
    %c0 = arith.constant 0 : index
    %c0_0 = arith.constant 0 : index
    %0 = vector.load %arg2[%c0, %c0_0] : memref<1x80xf32, #tpu.memory_space<vmem>>, vector<1x80xf32>
    %c0_1 = arith.constant 0 : index
    %c0_2 = arith.constant 0 : index
    %1 = vector.load %arg3[%c0_1, %c0_2] : memref<32x144xf32, #tpu.memory_space<vmem>>, vector<32x144xf32>
    %c0_3 = arith.constant 0 : index
    %c0_4 = arith.constant 0 : index
    %2 = vector.load %arg4[%c0_3, %c0_4] : memref<32x1xf32, #tpu.memory_space<vmem>>, vector<32x1xf32>
    %c0_5 = arith.constant 0 : index
    %c0_6 = arith.constant 0 : index
    %3 = vector.load %arg5[%c0_5, %c0_6] : memref<32x16xf32, #tpu.memory_space<vmem>>, vector<32x16xf32>
    %c0_7 = arith.constant 0 : index
    %c0_8 = arith.constant 0 : index
    %4 = vector.load %arg6[%c0_7, %c0_8] : memref<32x1xf32, #tpu.memory_space<vmem>>, vector<32x1xf32>
    %c0_9 = arith.constant 0 : index
    %c0_10 = arith.constant 0 : index
    %5 = vector.load %arg7[%c0_9, %c0_10] : memref<32x288xf32, #tpu.memory_space<vmem>>, vector<32x288xf32>
    %c0_11 = arith.constant 0 : index
    %c0_12 = arith.constant 0 : index
    %6 = vector.load %arg8[%c0_11, %c0_12] : memref<32x1xf32, #tpu.memory_space<vmem>>, vector<32x1xf32>
    %c0_13 = arith.constant 0 : index
    %c0_14 = arith.constant 0 : index
    %c0_15 = arith.constant 0 : index
    %c0_16 = arith.constant 0 : index
    %7 = vector.load %arg1[%c0_13, %c0_14, %c0_15, %c0_16] : memref<1x4x16x128xf32, #tpu.memory_space<vmem>>, vector<1x1x16x128xf32>
    %8 = vector.shape_cast %7 : vector<1x1x16x128xf32> to vector<16x128xf32>
    %c0_17 = arith.constant 0 : index
    %c1 = arith.constant 1 : index
    %c0_18 = arith.constant 0 : index
    %c0_19 = arith.constant 0 : index
    %9 = vector.load %arg1[%c0_17, %c1, %c0_18, %c0_19] : memref<1x4x16x128xf32, #tpu.memory_space<vmem>>, vector<1x1x16x128xf32>
    %10 = vector.shape_cast %9 : vector<1x1x16x128xf32> to vector<16x128xf32>
    %c0_20 = arith.constant 0 : index
    %c2 = arith.constant 2 : index
    %c0_21 = arith.constant 0 : index
    %c0_22 = arith.constant 0 : index
    %11 = vector.load %arg1[%c0_20, %c2, %c0_21, %c0_22] : memref<1x4x16x128xf32, #tpu.memory_space<vmem>>, vector<1x1x16x128xf32>
    %12 = vector.shape_cast %11 : vector<1x1x16x128xf32> to vector<16x128xf32>
    %c0_23 = arith.constant 0 : index
    %c3 = arith.constant 3 : index
    %c0_24 = arith.constant 0 : index
    %c0_25 = arith.constant 0 : index
    %13 = vector.load %arg1[%c0_23, %c3, %c0_24, %c0_25] : memref<1x4x16x128xf32, #tpu.memory_space<vmem>>, vector<1x1x16x128xf32>
    %14 = vector.shape_cast %13 : vector<1x1x16x128xf32> to vector<16x128xf32>
    %15 = vector.extract_strided_slice %8 {offsets = [0, 0], sizes = [16, 80], strides = [1, 1]} : vector<16x128xf32> to vector<16x80xf32>
    %16 = vector.extract_strided_slice %10 {offsets = [0, 0], sizes = [16, 80], strides = [1, 1]} : vector<16x128xf32> to vector<16x80xf32>
    %17 = vector.extract_strided_slice %8 {offsets = [0, 1], sizes = [16, 80], strides = [1, 1]} : vector<16x128xf32> to vector<16x80xf32>
    %18 = vector.extract_strided_slice %12 {offsets = [0, 0], sizes = [16, 80], strides = [1, 1]} : vector<16x128xf32> to vector<16x80xf32>
    %19 = vector.extract_strided_slice %14 {offsets = [0, 0], sizes = [16, 80], strides = [1, 1]} : vector<16x128xf32> to vector<16x80xf32>
    %20 = vector.extract_strided_slice %12 {offsets = [0, 1], sizes = [16, 80], strides = [1, 1]} : vector<16x128xf32> to vector<16x80xf32>
    %21 = vector.extract_strided_slice %8 {offsets = [0, 10], sizes = [16, 80], strides = [1, 1]} : vector<16x128xf32> to vector<16x80xf32>
    %22 = vector.extract_strided_slice %10 {offsets = [0, 10], sizes = [16, 80], strides = [1, 1]} : vector<16x128xf32> to vector<16x80xf32>
    %23 = vector.extract_strided_slice %8 {offsets = [0, 11], sizes = [16, 80], strides = [1, 1]} : vector<16x128xf32> to vector<16x80xf32>
    %24 = tpu.concatenate %15, %16, %17, %18, %19, %20, %21, %22, %23 in 0 : vector<16x80xf32>, vector<16x80xf32>, vector<16x80xf32>, vector<16x80xf32>, vector<16x80xf32>, vector<16x80xf32>, vector<16x80xf32>, vector<16x80xf32>, vector<16x80xf32> -> vector<144x80xf32>
    %cst = arith.constant dense<0.000000e+00> : vector<32x80xf32>
    %25 = tpu.matmul %1, %24, %cst {dimension_numbers = #tpu.dot_dimension_numbers<[1], [0], [0], [1], [0, 0, 1, 1], [], []>} : vector<32x144xf32>, vector<144x80xf32>, vector<32x80xf32> -> vector<32x80xf32>
    %26 = vector.broadcast %2 : vector<32x1xf32> to vector<32x80xf32>
    %27 = arith.addf %25, %26 : vector<32x80xf32>
    %cst_26 = arith.constant 0.000000e+00 : f32
    %28 = vector.broadcast %cst_26 : f32 to vector<32x80xf32>
    %29 = arith.maximumf %27, %28 : vector<32x80xf32>
    %30 = vector.broadcast %0 : vector<1x80xf32> to vector<32x80xf32>
    %31 = arith.mulf %29, %30 : vector<32x80xf32>
    %cst_27 = arith.constant 0.000000e+00 : f32
    %32 = vector.broadcast %cst_27 : f32 to vector<32x11xf32>
    %cst_28 = arith.constant 0.000000e+00 : f32
    %33 = vector.broadcast %cst_28 : f32 to vector<32x37xf32>
    %34 = tpu.concatenate %32, %31, %33 in 1 : vector<32x11xf32>, vector<32x80xf32>, vector<32x37xf32> -> vector<32x128xf32>
    %35 = vector.extract_strided_slice %34 {offsets = [0, 0], sizes = [32, 80], strides = [1, 1]} : vector<32x128xf32> to vector<32x80xf32>
    %36 = vector.extract_strided_slice %34 {offsets = [0, 1], sizes = [32, 80], strides = [1, 1]} : vector<32x128xf32> to vector<32x80xf32>
    %37 = vector.extract_strided_slice %34 {offsets = [0, 2], sizes = [32, 80], strides = [1, 1]} : vector<32x128xf32> to vector<32x80xf32>
    %38 = vector.extract_strided_slice %34 {offsets = [0, 10], sizes = [32, 80], strides = [1, 1]} : vector<32x128xf32> to vector<32x80xf32>
    %39 = vector.extract_strided_slice %34 {offsets = [0, 11], sizes = [32, 80], strides = [1, 1]} : vector<32x128xf32> to vector<32x80xf32>
    %40 = vector.extract_strided_slice %34 {offsets = [0, 12], sizes = [32, 80], strides = [1, 1]} : vector<32x128xf32> to vector<32x80xf32>
    %41 = vector.extract_strided_slice %34 {offsets = [0, 20], sizes = [32, 80], strides = [1, 1]} : vector<32x128xf32> to vector<32x80xf32>
    %42 = vector.extract_strided_slice %34 {offsets = [0, 21], sizes = [32, 80], strides = [1, 1]} : vector<32x128xf32> to vector<32x80xf32>
    %43 = vector.extract_strided_slice %34 {offsets = [0, 22], sizes = [32, 80], strides = [1, 1]} : vector<32x128xf32> to vector<32x80xf32>
    %44 = tpu.concatenate %35, %36, %37, %38, %39, %40, %41, %42, %43 in 0 : vector<32x80xf32>, vector<32x80xf32>, vector<32x80xf32>, vector<32x80xf32>, vector<32x80xf32>, vector<32x80xf32>, vector<32x80xf32>, vector<32x80xf32>, vector<32x80xf32> -> vector<288x80xf32>
    %cst_29 = arith.constant dense<0.000000e+00> : vector<32x80xf32>
    %45 = tpu.matmul %5, %44, %cst_29 {dimension_numbers = #tpu.dot_dimension_numbers<[1], [0], [0], [1], [0, 0, 1, 1], [], []>} : vector<32x288xf32>, vector<288x80xf32>, vector<32x80xf32> -> vector<32x80xf32>
    %46 = vector.broadcast %6 : vector<32x1xf32> to vector<32x80xf32>
    %47 = arith.addf %45, %46 : vector<32x80xf32>
    %48 = vector.extract_strided_slice %14 {offsets = [0, 0], sizes = [16, 80], strides = [1, 1]} : vector<16x128xf32> to vector<16x80xf32>
    %cst_30 = arith.constant dense<0.000000e+00> : vector<32x80xf32>
    %49 = tpu.matmul %3, %48, %cst_30 {dimension_numbers = #tpu.dot_dimension_numbers<[1], [0], [0], [1], [0, 0, 1, 1], [], []>} : vector<32x16xf32>, vector<16x80xf32>, vector<32x80xf32> -> vector<32x80xf32>
    %50 = vector.broadcast %4 : vector<32x1xf32> to vector<32x80xf32>
    %51 = arith.addf %49, %50 : vector<32x80xf32>
    %52 = arith.addf %47, %51 : vector<32x80xf32>
    %cst_31 = arith.constant 0.000000e+00 : f32
    %53 = vector.broadcast %cst_31 : f32 to vector<32x80xf32>
    %54 = arith.maximumf %52, %53 : vector<32x80xf32>
    %55 = vector.broadcast %0 : vector<1x80xf32> to vector<32x80xf32>
    %56 = arith.mulf %54, %55 : vector<32x80xf32>
    %cst_32 = arith.constant 0.000000e+00 : f32
    %57 = vector.broadcast %cst_32 : f32 to vector<32x11xf32>
    %cst_33 = arith.constant 0.000000e+00 : f32
    %58 = vector.broadcast %cst_33 : f32 to vector<32x37xf32>
    %59 = tpu.concatenate %57, %56, %58 in 1 : vector<32x11xf32>, vector<32x80xf32>, vector<32x37xf32> -> vector<32x128xf32>
    %c0_34 = arith.constant 0 : index
    %c0_35 = arith.constant 0 : index
    %c0_36 = arith.constant 0 : index
    %60 = vector.load %arg9[%c0_34, %c0_35, %c0_36] : memref<1x32x128xf32, #tpu.memory_space<vmem>>, vector<1x32x128xf32>
    %61 = vector.shape_cast %60 : vector<1x32x128xf32> to vector<32x128xf32>
    %62 = vector.shape_cast %59 : vector<32x128xf32> to vector<1x32x128xf32>
    tpu.vector_store %arg9[%c0_34, %c0_35, %c0_36], %62 {strides = array<i32>} : memref<1x32x128xf32, #tpu.memory_space<vmem>>, vector<1x32x128xf32>,
    return
  }
  func.func @transform_0(%arg0: i32) -> (i32, i32, i32, i32) {
    %c0_i32 = arith.constant 0 : i32
    %c0_i32_0 = arith.constant 0 : i32
    %c0_i32_1 = arith.constant 0 : i32
    %c0_i32_2 = arith.constant 0 : i32
    return %arg0, %c0_i32, %c0_i32_0, %c0_i32_1 : i32, i32, i32, i32
  }
  func.func @transform_1(%arg0: i32) -> (i32, i32) {
    %c0_i32 = arith.constant 0 : i32
    %c0_i32_0 = arith.constant 0 : i32
    %c0_i32_1 = arith.constant 0 : i32
    return %c0_i32, %c0_i32_0 : i32, i32
  }
  func.func @transform_2(%arg0: i32) -> (i32, i32) {
    %c0_i32 = arith.constant 0 : i32
    %c0_i32_0 = arith.constant 0 : i32
    %c0_i32_1 = arith.constant 0 : i32
    return %c0_i32, %c0_i32_0 : i32, i32
  }
  func.func @transform_3(%arg0: i32) -> (i32, i32) {
    %c0_i32 = arith.constant 0 : i32
    %c0_i32_0 = arith.constant 0 : i32
    %c0_i32_1 = arith.constant 0 : i32
    return %c0_i32, %c0_i32_0 : i32, i32
  }
  func.func @transform_4(%arg0: i32) -> (i32, i32) {
    %c0_i32 = arith.constant 0 : i32
    %c0_i32_0 = arith.constant 0 : i32
    %c0_i32_1 = arith.constant 0 : i32
    return %c0_i32, %c0_i32_0 : i32, i32
  }
  func.func @transform_5(%arg0: i32) -> (i32, i32) {
    %c0_i32 = arith.constant 0 : i32
    %c0_i32_0 = arith.constant 0 : i32
    %c0_i32_1 = arith.constant 0 : i32
    return %c0_i32, %c0_i32_0 : i32, i32
  }
  func.func @transform_6(%arg0: i32) -> (i32, i32) {
    %c0_i32 = arith.constant 0 : i32
    %c0_i32_0 = arith.constant 0 : i32
    %c0_i32_1 = arith.constant 0 : i32
    return %c0_i32, %c0_i32_0 : i32, i32
  }
  func.func @transform_7(%arg0: i32) -> (i32, i32) {
    %c0_i32 = arith.constant 0 : i32
    %c0_i32_0 = arith.constant 0 : i32
    %c0_i32_1 = arith.constant 0 : i32
    return %c0_i32, %c0_i32_0 : i32, i32
  }
  func.func @transform_8(%arg0: i32) -> (i32, i32, i32) {
    %c0_i32 = arith.constant 0 : i32
    %c0_i32_0 = arith.constant 0 : i32
    %c0_i32_1 = arith.constant 0 : i32
    return %arg0, %c0_i32, %c0_i32_0 : i32, i32, i32
  }
}

module attributes {stable_mosaic.version = 11 : i64} {
  func.func @_stage_s2_kernel(%arg0: i32, %arg1: memref<1x4x32x128xf32, #tpu.memory_space<vmem>>, %arg2: memref<1x24xf32, #tpu.memory_space<vmem>>, %arg3: memref<64x288xf32, #tpu.memory_space<vmem>>, %arg4: memref<64x1xf32, #tpu.memory_space<vmem>>, %arg5: memref<64x32xf32, #tpu.memory_space<vmem>>, %arg6: memref<64x1xf32, #tpu.memory_space<vmem>>, %arg7: memref<64x576xf32, #tpu.memory_space<vmem>>, %arg8: memref<64x1xf32, #tpu.memory_space<vmem>>, %arg9: memref<128x64xf32, #tpu.memory_space<vmem>>, %arg10: memref<128x1xf32, #tpu.memory_space<vmem>>, %arg11: memref<16x64xf32, #tpu.memory_space<vmem>>, %arg12: memref<16x1xf32, #tpu.memory_space<vmem>>, %arg13: memref<1x64x1xf32, #tpu.memory_space<vmem>>, %arg14: memref<1x128x1xf32, #tpu.memory_space<vmem>>, %arg15: memref<1x16x1xf32, #tpu.memory_space<vmem>>) attributes {dimension_semantics = [#tpu.dimension_semantics<parallel>], iteration_bounds = array<i64: 2>, scalar_prefetch = 0 : i64, scratch_operands = 0 : i64, tpu.core_type = #tpu.core_type<tc>, window_params = [{transform_indices = @transform_0, window_bounds = array<i64: 1, 4, 32, 128>}, {pipeline_mode = #tpu.pipeline_mode<synchronous>, transform_indices = @transform_1, window_bounds = array<i64: 1, 24>}, {pipeline_mode = #tpu.pipeline_mode<synchronous>, transform_indices = @transform_2, window_bounds = array<i64: 64, 288>}, {pipeline_mode = #tpu.pipeline_mode<synchronous>, transform_indices = @transform_3, window_bounds = array<i64: 64, 1>}, {pipeline_mode = #tpu.pipeline_mode<synchronous>, transform_indices = @transform_4, window_bounds = array<i64: 64, 32>}, {pipeline_mode = #tpu.pipeline_mode<synchronous>, transform_indices = @transform_5, window_bounds = array<i64: 64, 1>}, {pipeline_mode = #tpu.pipeline_mode<synchronous>, transform_indices = @transform_6, window_bounds = array<i64: 64, 576>}, {pipeline_mode = #tpu.pipeline_mode<synchronous>, transform_indices = @transform_7, window_bounds = array<i64: 64, 1>}, {pipeline_mode = #tpu.pipeline_mode<synchronous>, transform_indices = @transform_8, window_bounds = array<i64: 128, 64>}, {pipeline_mode = #tpu.pipeline_mode<synchronous>, transform_indices = @transform_9, window_bounds = array<i64: 128, 1>}, {pipeline_mode = #tpu.pipeline_mode<synchronous>, transform_indices = @transform_10, window_bounds = array<i64: 16, 64>}, {pipeline_mode = #tpu.pipeline_mode<synchronous>, transform_indices = @transform_11, window_bounds = array<i64: 16, 1>}, {transform_indices = @transform_12, window_bounds = array<i64: 1, 64, 1>}, {transform_indices = @transform_13, window_bounds = array<i64: 1, 128, 1>}, {transform_indices = @transform_14, window_bounds = array<i64: 1, 16, 1>}]} {
    %c0 = arith.constant 0 : index
    %c0_0 = arith.constant 0 : index
    %0 = vector.load %arg2[%c0, %c0_0] : memref<1x24xf32, #tpu.memory_space<vmem>>, vector<1x24xf32>
    %c0_1 = arith.constant 0 : index
    %c0_2 = arith.constant 0 : index
    %1 = vector.load %arg3[%c0_1, %c0_2] : memref<64x288xf32, #tpu.memory_space<vmem>>, vector<64x288xf32>
    %c0_3 = arith.constant 0 : index
    %c0_4 = arith.constant 0 : index
    %2 = vector.load %arg4[%c0_3, %c0_4] : memref<64x1xf32, #tpu.memory_space<vmem>>, vector<64x1xf32>
    %c0_5 = arith.constant 0 : index
    %c0_6 = arith.constant 0 : index
    %3 = vector.load %arg5[%c0_5, %c0_6] : memref<64x32xf32, #tpu.memory_space<vmem>>, vector<64x32xf32>
    %c0_7 = arith.constant 0 : index
    %c0_8 = arith.constant 0 : index
    %4 = vector.load %arg6[%c0_7, %c0_8] : memref<64x1xf32, #tpu.memory_space<vmem>>, vector<64x1xf32>
    %c0_9 = arith.constant 0 : index
    %c0_10 = arith.constant 0 : index
    %5 = vector.load %arg7[%c0_9, %c0_10] : memref<64x576xf32, #tpu.memory_space<vmem>>, vector<64x576xf32>
    %c0_11 = arith.constant 0 : index
    %c0_12 = arith.constant 0 : index
    %6 = vector.load %arg8[%c0_11, %c0_12] : memref<64x1xf32, #tpu.memory_space<vmem>>, vector<64x1xf32>
    %c0_13 = arith.constant 0 : index
    %c0_14 = arith.constant 0 : index
    %7 = vector.load %arg9[%c0_13, %c0_14] : memref<128x64xf32, #tpu.memory_space<vmem>>, vector<128x64xf32>
    %c0_15 = arith.constant 0 : index
    %c0_16 = arith.constant 0 : index
    %8 = vector.load %arg10[%c0_15, %c0_16] : memref<128x1xf32, #tpu.memory_space<vmem>>, vector<128x1xf32>
    %c0_17 = arith.constant 0 : index
    %c0_18 = arith.constant 0 : index
    %9 = vector.load %arg11[%c0_17, %c0_18] : memref<16x64xf32, #tpu.memory_space<vmem>>, vector<16x64xf32>
    %c0_19 = arith.constant 0 : index
    %c0_20 = arith.constant 0 : index
    %10 = vector.load %arg12[%c0_19, %c0_20] : memref<16x1xf32, #tpu.memory_space<vmem>>, vector<16x1xf32>
    %c0_21 = arith.constant 0 : index
    %c0_22 = arith.constant 0 : index
    %c0_23 = arith.constant 0 : index
    %c0_24 = arith.constant 0 : index
    %11 = vector.load %arg1[%c0_21, %c0_22, %c0_23, %c0_24] : memref<1x4x32x128xf32, #tpu.memory_space<vmem>>, vector<1x1x32x128xf32>
    %12 = vector.shape_cast %11 : vector<1x1x32x128xf32> to vector<32x128xf32>
    %c0_25 = arith.constant 0 : index
    %c1 = arith.constant 1 : index
    %c0_26 = arith.constant 0 : index
    %c0_27 = arith.constant 0 : index
    %13 = vector.load %arg1[%c0_25, %c1, %c0_26, %c0_27] : memref<1x4x32x128xf32, #tpu.memory_space<vmem>>, vector<1x1x32x128xf32>
    %14 = vector.shape_cast %13 : vector<1x1x32x128xf32> to vector<32x128xf32>
    %c0_28 = arith.constant 0 : index
    %c2 = arith.constant 2 : index
    %c0_29 = arith.constant 0 : index
    %c0_30 = arith.constant 0 : index
    %15 = vector.load %arg1[%c0_28, %c2, %c0_29, %c0_30] : memref<1x4x32x128xf32, #tpu.memory_space<vmem>>, vector<1x1x32x128xf32>
    %16 = vector.shape_cast %15 : vector<1x1x32x128xf32> to vector<32x128xf32>
    %c0_31 = arith.constant 0 : index
    %c3 = arith.constant 3 : index
    %c0_32 = arith.constant 0 : index
    %c0_33 = arith.constant 0 : index
    %17 = vector.load %arg1[%c0_31, %c3, %c0_32, %c0_33] : memref<1x4x32x128xf32, #tpu.memory_space<vmem>>, vector<1x1x32x128xf32>
    %18 = vector.shape_cast %17 : vector<1x1x32x128xf32> to vector<32x128xf32>
    %19 = vector.extract_strided_slice %12 {offsets = [0, 0], sizes = [32, 24], strides = [1, 1]} : vector<32x128xf32> to vector<32x24xf32>
    %20 = vector.extract_strided_slice %14 {offsets = [0, 0], sizes = [32, 24], strides = [1, 1]} : vector<32x128xf32> to vector<32x24xf32>
    %21 = vector.extract_strided_slice %12 {offsets = [0, 1], sizes = [32, 24], strides = [1, 1]} : vector<32x128xf32> to vector<32x24xf32>
    %22 = vector.extract_strided_slice %16 {offsets = [0, 0], sizes = [32, 24], strides = [1, 1]} : vector<32x128xf32> to vector<32x24xf32>
    %23 = vector.extract_strided_slice %18 {offsets = [0, 0], sizes = [32, 24], strides = [1, 1]} : vector<32x128xf32> to vector<32x24xf32>
    %24 = vector.extract_strided_slice %16 {offsets = [0, 1], sizes = [32, 24], strides = [1, 1]} : vector<32x128xf32> to vector<32x24xf32>
    %25 = vector.extract_strided_slice %12 {offsets = [0, 6], sizes = [32, 24], strides = [1, 1]} : vector<32x128xf32> to vector<32x24xf32>
    %26 = vector.extract_strided_slice %14 {offsets = [0, 6], sizes = [32, 24], strides = [1, 1]} : vector<32x128xf32> to vector<32x24xf32>
    %27 = vector.extract_strided_slice %12 {offsets = [0, 7], sizes = [32, 24], strides = [1, 1]} : vector<32x128xf32> to vector<32x24xf32>
    %28 = tpu.concatenate %19, %20, %21, %22, %23, %24, %25, %26, %27 in 0 : vector<32x24xf32>, vector<32x24xf32>, vector<32x24xf32>, vector<32x24xf32>, vector<32x24xf32>, vector<32x24xf32>, vector<32x24xf32>, vector<32x24xf32>, vector<32x24xf32> -> vector<288x24xf32>
    %cst = arith.constant dense<0.000000e+00> : vector<64x24xf32>
    %29 = tpu.matmul %1, %28, %cst {dimension_numbers = #tpu.dot_dimension_numbers<[1], [0], [0], [1], [0, 0, 1, 1], [], []>} : vector<64x288xf32>, vector<288x24xf32>, vector<64x24xf32> -> vector<64x24xf32>
    %30 = vector.broadcast %2 : vector<64x1xf32> to vector<64x24xf32>
    %31 = arith.addf %29, %30 : vector<64x24xf32>
    %cst_34 = arith.constant 0.000000e+00 : f32
    %32 = vector.broadcast %cst_34 : f32 to vector<64x24xf32>
    %33 = arith.maximumf %31, %32 : vector<64x24xf32>
    %34 = vector.broadcast %0 : vector<1x24xf32> to vector<64x24xf32>
    %35 = arith.mulf %33, %34 : vector<64x24xf32>
    %cst_35 = arith.constant 0.000000e+00 : f32
    %36 = vector.broadcast %cst_35 : f32 to vector<64x7xf32>
    %cst_36 = arith.constant 0.000000e+00 : f32
    %37 = vector.broadcast %cst_36 : f32 to vector<64x97xf32>
    %38 = tpu.concatenate %36, %35, %37 in 1 : vector<64x7xf32>, vector<64x24xf32>, vector<64x97xf32> -> vector<64x128xf32>
    %39 = vector.extract_strided_slice %38 {offsets = [0, 0], sizes = [64, 24], strides = [1, 1]} : vector<64x128xf32> to vector<64x24xf32>
    %40 = vector.extract_strided_slice %38 {offsets = [0, 1], sizes = [64, 24], strides = [1, 1]} : vector<64x128xf32> to vector<64x24xf32>
    %41 = vector.extract_strided_slice %38 {offsets = [0, 2], sizes = [64, 24], strides = [1, 1]} : vector<64x128xf32> to vector<64x24xf32>
    %42 = vector.extract_strided_slice %38 {offsets = [0, 6], sizes = [64, 24], strides = [1, 1]} : vector<64x128xf32> to vector<64x24xf32>
    %43 = vector.extract_strided_slice %38 {offsets = [0, 7], sizes = [64, 24], strides = [1, 1]} : vector<64x128xf32> to vector<64x24xf32>
    %44 = vector.extract_strided_slice %38 {offsets = [0, 8], sizes = [64, 24], strides = [1, 1]} : vector<64x128xf32> to vector<64x24xf32>
    %45 = vector.extract_strided_slice %38 {offsets = [0, 12], sizes = [64, 24], strides = [1, 1]} : vector<64x128xf32> to vector<64x24xf32>
    %46 = vector.extract_strided_slice %38 {offsets = [0, 13], sizes = [64, 24], strides = [1, 1]} : vector<64x128xf32> to vector<64x24xf32>
    %47 = vector.extract_strided_slice %38 {offsets = [0, 14], sizes = [64, 24], strides = [1, 1]} : vector<64x128xf32> to vector<64x24xf32>
    %48 = tpu.concatenate %39, %40, %41, %42, %43, %44, %45, %46, %47 in 0 : vector<64x24xf32>, vector<64x24xf32>, vector<64x24xf32>, vector<64x24xf32>, vector<64x24xf32>, vector<64x24xf32>, vector<64x24xf32>, vector<64x24xf32>, vector<64x24xf32> -> vector<576x24xf32>
    %cst_37 = arith.constant dense<0.000000e+00> : vector<64x24xf32>
    %49 = tpu.matmul %5, %48, %cst_37 {dimension_numbers = #tpu.dot_dimension_numbers<[1], [0], [0], [1], [0, 0, 1, 1], [], []>} : vector<64x576xf32>, vector<576x24xf32>, vector<64x24xf32> -> vector<64x24xf32>
    %50 = vector.broadcast %6 : vector<64x1xf32> to vector<64x24xf32>
    %51 = arith.addf %49, %50 : vector<64x24xf32>
    %52 = vector.extract_strided_slice %18 {offsets = [0, 0], sizes = [32, 24], strides = [1, 1]} : vector<32x128xf32> to vector<32x24xf32>
    %cst_38 = arith.constant dense<0.000000e+00> : vector<64x24xf32>
    %53 = tpu.matmul %3, %52, %cst_38 {dimension_numbers = #tpu.dot_dimension_numbers<[1], [0], [0], [1], [0, 0, 1, 1], [], []>} : vector<64x32xf32>, vector<32x24xf32>, vector<64x24xf32> -> vector<64x24xf32>
    %54 = vector.broadcast %4 : vector<64x1xf32> to vector<64x24xf32>
    %55 = arith.addf %53, %54 : vector<64x24xf32>
    %56 = arith.addf %51, %55 : vector<64x24xf32>
    %cst_39 = arith.constant 0.000000e+00 : f32
    %57 = vector.broadcast %cst_39 : f32 to vector<64x24xf32>
    %58 = arith.maximumf %56, %57 : vector<64x24xf32>
    %59 = vector.broadcast %0 : vector<1x24xf32> to vector<64x24xf32>
    %60 = arith.mulf %58, %59 : vector<64x24xf32>
    %cst_40 = arith.constant dense<0.000000e+00> : vector<64xf32>
    %61 = vector.multi_reduction <add>, %60, %cst_40 [1] : vector<64x24xf32> to vector<64xf32>
    %62 = vector.shape_cast %61 : vector<64xf32> to vector<64x1xf32>
    %cst_41 = arith.constant 6.250000e-02 : f32
    %63 = vector.broadcast %cst_41 : f32 to vector<64x1xf32>
    %64 = arith.mulf %62, %63 : vector<64x1xf32>
    %cst_42 = arith.constant dense<0.000000e+00> : vector<128x1xf32>
    %65 = tpu.matmul %7, %64, %cst_42 {dimension_numbers = #tpu.dot_dimension_numbers<[1], [0], [0], [1], [0, 0, 1, 1], [], []>} : vector<128x64xf32>, vector<64x1xf32>, vector<128x1xf32> -> vector<128x1xf32>
    %66 = arith.addf %65, %8 : vector<128x1xf32>
    %67 = vector.extract_strided_slice %66 {offsets = [0, 0], sizes = [64, 1], strides = [1, 1]} : vector<128x1xf32> to vector<64x1xf32>
    %68 = vector.extract_strided_slice %66 {offsets = [64, 0], sizes = [64, 1], strides = [1, 1]} : vector<128x1xf32> to vector<64x1xf32>
    %c0_43 = arith.constant 0 : index
    %c0_44 = arith.constant 0 : index
    %c0_45 = arith.constant 0 : index
    %69 = vector.load %arg13[%c0_43, %c0_44, %c0_45] : memref<1x64x1xf32, #tpu.memory_space<vmem>>, vector<1x64x1xf32>
    %70 = vector.shape_cast %69 : vector<1x64x1xf32> to vector<64x1xf32>
    %cst_46 = arith.constant 5.000000e-01 : f32
    %71 = vector.broadcast %cst_46 : f32 to vector<64x1xf32>
    %72 = arith.mulf %71, %68 : vector<64x1xf32>
    %73 = math.exp %72 : vector<64x1xf32>
    %74 = arith.mulf %70, %73 : vector<64x1xf32>
    %75 = arith.addf %74, %67 : vector<64x1xf32>
    %cst_47 = arith.constant dense<0.000000e+00> : vector<16x1xf32>
    %76 = tpu.matmul %9, %75, %cst_47 {dimension_numbers = #tpu.dot_dimension_numbers<[1], [0], [0], [1], [0, 0, 1, 1], [], []>} : vector<16x64xf32>, vector<64x1xf32>, vector<16x1xf32> -> vector<16x1xf32>
    %77 = arith.addf %76, %10 : vector<16x1xf32>
    %c0_48 = arith.constant 0 : index
    %c0_49 = arith.constant 0 : index
    %c0_50 = arith.constant 0 : index
    %78 = vector.load %arg14[%c0_48, %c0_49, %c0_50] : memref<1x128x1xf32, #tpu.memory_space<vmem>>, vector<1x128x1xf32>
    %79 = vector.shape_cast %78 : vector<1x128x1xf32> to vector<128x1xf32>
    %80 = vector.shape_cast %66 : vector<128x1xf32> to vector<1x128x1xf32>
    tpu.vector_store %arg14[%c0_48, %c0_49, %c0_50], %80 {strides = array<i32>} : memref<1x128x1xf32, #tpu.memory_space<vmem>>, vector<1x128x1xf32>,
    %c0_51 = arith.constant 0 : index
    %c0_52 = arith.constant 0 : index
    %c0_53 = arith.constant 0 : index
    %81 = vector.load %arg15[%c0_51, %c0_52, %c0_53] : memref<1x16x1xf32, #tpu.memory_space<vmem>>, vector<1x16x1xf32>
    %82 = vector.shape_cast %81 : vector<1x16x1xf32> to vector<16x1xf32>
    %83 = vector.shape_cast %77 : vector<16x1xf32> to vector<1x16x1xf32>
    tpu.vector_store %arg15[%c0_51, %c0_52, %c0_53], %83 {strides = array<i32>} : memref<1x16x1xf32, #tpu.memory_space<vmem>>, vector<1x16x1xf32>,
    return
  }
  func.func @transform_0(%arg0: i32) -> (i32, i32, i32, i32) {
    %c0_i32 = arith.constant 0 : i32
    %c0_i32_0 = arith.constant 0 : i32
    %c0_i32_1 = arith.constant 0 : i32
    %c0_i32_2 = arith.constant 0 : i32
    return %arg0, %c0_i32, %c0_i32_0, %c0_i32_1 : i32, i32, i32, i32
  }
  func.func @transform_1(%arg0: i32) -> (i32, i32) {
    %c0_i32 = arith.constant 0 : i32
    %c0_i32_0 = arith.constant 0 : i32
    %c0_i32_1 = arith.constant 0 : i32
    return %c0_i32, %c0_i32_0 : i32, i32
  }
  func.func @transform_2(%arg0: i32) -> (i32, i32) {
    %c0_i32 = arith.constant 0 : i32
    %c0_i32_0 = arith.constant 0 : i32
    %c0_i32_1 = arith.constant 0 : i32
    return %c0_i32, %c0_i32_0 : i32, i32
  }
  func.func @transform_3(%arg0: i32) -> (i32, i32) {
    %c0_i32 = arith.constant 0 : i32
    %c0_i32_0 = arith.constant 0 : i32
    %c0_i32_1 = arith.constant 0 : i32
    return %c0_i32, %c0_i32_0 : i32, i32
  }
  func.func @transform_4(%arg0: i32) -> (i32, i32) {
    %c0_i32 = arith.constant 0 : i32
    %c0_i32_0 = arith.constant 0 : i32
    %c0_i32_1 = arith.constant 0 : i32
    return %c0_i32, %c0_i32_0 : i32, i32
  }
  func.func @transform_5(%arg0: i32) -> (i32, i32) {
    %c0_i32 = arith.constant 0 : i32
    %c0_i32_0 = arith.constant 0 : i32
    %c0_i32_1 = arith.constant 0 : i32
    return %c0_i32, %c0_i32_0 : i32, i32
  }
  func.func @transform_6(%arg0: i32) -> (i32, i32) {
    %c0_i32 = arith.constant 0 : i32
    %c0_i32_0 = arith.constant 0 : i32
    %c0_i32_1 = arith.constant 0 : i32
    return %c0_i32, %c0_i32_0 : i32, i32
  }
  func.func @transform_7(%arg0: i32) -> (i32, i32) {
    %c0_i32 = arith.constant 0 : i32
    %c0_i32_0 = arith.constant 0 : i32
    %c0_i32_1 = arith.constant 0 : i32
    return %c0_i32, %c0_i32_0 : i32, i32
  }
  func.func @transform_8(%arg0: i32) -> (i32, i32) {
    %c0_i32 = arith.constant 0 : i32
    %c0_i32_0 = arith.constant 0 : i32
    %c0_i32_1 = arith.constant 0 : i32
    return %c0_i32, %c0_i32_0 : i32, i32
  }
  func.func @transform_9(%arg0: i32) -> (i32, i32) {
    %c0_i32 = arith.constant 0 : i32
    %c0_i32_0 = arith.constant 0 : i32
    %c0_i32_1 = arith.constant 0 : i32
    return %c0_i32, %c0_i32_0 : i32, i32
  }
  func.func @transform_10(%arg0: i32) -> (i32, i32) {
    %c0_i32 = arith.constant 0 : i32
    %c0_i32_0 = arith.constant 0 : i32
    %c0_i32_1 = arith.constant 0 : i32
    return %c0_i32, %c0_i32_0 : i32, i32
  }
  func.func @transform_11(%arg0: i32) -> (i32, i32) {
    %c0_i32 = arith.constant 0 : i32
    %c0_i32_0 = arith.constant 0 : i32
    %c0_i32_1 = arith.constant 0 : i32
    return %c0_i32, %c0_i32_0 : i32, i32
  }
  func.func @transform_12(%arg0: i32) -> (i32, i32, i32) {
    %c0_i32 = arith.constant 0 : i32
    %c0_i32_0 = arith.constant 0 : i32
    %c0_i32_1 = arith.constant 0 : i32
    return %arg0, %c0_i32, %c0_i32_0 : i32, i32, i32
  }
  func.func @transform_13(%arg0: i32) -> (i32, i32, i32) {
    %c0_i32 = arith.constant 0 : i32
    %c0_i32_0 = arith.constant 0 : i32
    %c0_i32_1 = arith.constant 0 : i32
    return %arg0, %c0_i32, %c0_i32_0 : i32, i32, i32
  }
  func.func @transform_14(%arg0: i32) -> (i32, i32, i32) {
    %c0_i32 = arith.constant 0 : i32
    %c0_i32_0 = arith.constant 0 : i32
    %c0_i32_1 = arith.constant 0 : i32
    return %arg0, %c0_i32, %c0_i32_0 : i32, i32, i32
  }
}

</mosaic_0001>

<llo_original>
// kernel: resnet_vib_forward.3
$region0: #{resnet_vib_forward.3}
  #allocation0 [shape = 'u32[]', space=smem, size = 0x4, offset = 0x4, fixed_abs, tag = 'smem constant byte address 0x4 - core index']
  #allocation1 [shape = 'u32[144,128]{1,0:T(1,128)}', space=vmem, size = 0x12000, scoped, tag = 'internal scratch']
  %s0 = inlined_call_operand.vmem [shape: f32[2,16,384], index: 0, kind: input, shape index: {}]
  %s1 = inlined_call_operand.vmem [shape: f32[1,288], index: 1, kind: input, shape index: {}]
  %s2 = inlined_call_operand.vmem [shape: f32[3,16,144], index: 2, kind: input, shape index: {}]
  %s3 = inlined_call_operand.vmem [shape: f32[3,16,1], index: 3, kind: input, shape index: {}]
  %s4 = inlined_call_operand.vmem [shape: f32[2,16,384], index: 4, kind: output, shape index: {}]
  %s5 = sld [smem:[#allocation0]]
  $region49: #{resnet_vib_forward.3} parent=0
    _
  %s7 = ssub.s32 1, %s5
  %s8 = scalar_select 0, %s7, %s5
  loop: start=0, step=1, limit=4
  $region2: #{resnet_vib_forward.3} parent=0 // loop_pre_header
    _
  $region3: #{resnet_vib_forward.3} parent=0 // loop_header
    %s10 = sphi 0, %s14
    %p11 = scmp.ge.s32.totalorder %s10, 4
    %s20 = sphi 0, %s22
    %s23 = sphi 0, %s20
    %s24 = sphi 0, %s23
    %s40 = sphi 0, %s24
    %s44 = sphi 0, %s44
    %s46 = sphi 0, %s44
    %s47 = sphi 0, %s46
    %s61 = sphi 0, %s47
    %s65 = sphi 0, %s65
    %s67 = sphi 0, %s65
    %s68 = sphi 0, %s67
    %s82 = sphi 0, %s68
    %s86 = sphi 0, %s86
    %s88 = sphi 0, %s86
    %s89 = sphi 0, %s88
    %s103 = sphi 0, %s89
    %s109 = sphi 0, %s111
    %s112 = sphi 0, %s109
    %s113 = sphi 0, %s112
    %s129 = sphi 0, %s113
  $region4: #{resnet_vib_forward.3} parent=0 // loop_header_branch
    %13 = sbr.rel (%p11) target = $region8
  $region5: #{resnet_vib_forward.3} parent=0 // loop_body
    %s15 = ssub.s32 %s10, 1
    %s16 = ssub.s32 %s10, 2
    %s17 = sadd.s32 %s10, 1
    %s18 = ssub.s32 %s10, %s17
    %p19 = scmp.eq.s32.totalorder %s18, 0
    %s21 = sadd.s32 %s20, 1
    %s22 = scalar_select %p19, %s20, %s21
    %p25 = pneg %p19
    %p26 = scmp.eq.s32.totalorder %s10, 1
    %p27 = por %p25, %p26
    %p28 = scmp.ne.s32.totalorder %s20, %s23
    %p29 = scmp.eq.s32.totalorder %s10, 0
    %p30 = por %p28, %p29
    %p31 = scmp.ne.s32.totalorder %s20, %s23
    %p32 = scmp.eq.s32.totalorder %s15, 1
    %p33 = por %p31, %p32
    %p34 = scmp.ne.s32.totalorder %s23, %s24
    %p35 = scmp.eq.s32.totalorder %s15, 0
    %p36 = por %p34, %p35
    %p37 = scmp.ne.s32.totalorder %s23, %s24
    %p38 = scmp.eq.s32.totalorder %s16, 1
    %p39 = por %p37, %p38
    %p41 = scmp.ne.s32.totalorder %s24, %s40
    %p42 = scmp.eq.s32.totalorder %s16, 0
    %p43 = por %p41, %p42
    %s45 = sadd.s32 %s44, 1
    %p48 = scmp.eq.s32.totalorder %s10, 1
    %p49 = scmp.ne.s32.totalorder %s44, %s46
    %p50 = scmp.eq.s32.totalorder %s10, 0
    %p51 = por %p49, %p50
    %p52 = scmp.ne.s32.totalorder %s44, %s46
    %p53 = scmp.eq.s32.totalorder %s15, 1
    %p54 = por %p52, %p53
    %p55 = scmp.ne.s32.totalorder %s46, %s47
    %p56 = scmp.eq.s32.totalorder %s15, 0
    %p57 = por %p55, %p56
    %p58 = scmp.ne.s32.totalorder %s46, %s47
    %p59 = scmp.eq.s32.totalorder %s16, 1
    %p60 = por %p58, %p59
    %p62 = scmp.ne.s32.totalorder %s47, %s61
    %p63 = scmp.eq.s32.totalorder %s16, 0
    %p64 = por %p62, %p63
    %s66 = sadd.s32 %s65, 1
    %p69 = scmp.eq.s32.totalorder %s10, 1
    %p70 = scmp.ne.s32.totalorder %s65, %s67
    %p71 = scmp.eq.s32.totalorder %s10, 0
    %p72 = por %p70, %p71
    %p73 = scmp.ne.s32.totalorder %s65, %s67
    %p74 = scmp.eq.s32.totalorder %s15, 1
    %p75 = por %p73, %p74
    %p76 = scmp.ne.s32.totalorder %s67, %s68
    %p77 = scmp.eq.s32.totalorder %s15, 0
    %p78 = por %p76, %p77
    %p79 = scmp.ne.s32.totalorder %s67, %s68
    %p80 = scmp.eq.s32.totalorder %s16, 1
    %p81 = por %p79, %p80
    %p83 = scmp.ne.s32.totalorder %s68, %s82
    %p84 = scmp.eq.s32.totalorder %s16, 0
    %p85 = por %p83, %p84
    %s87 = sadd.s32 %s86, 1
    %p90 = scmp.eq.s32.totalorder %s10, 1
    %p91 = scmp.ne.s32.totalorder %s86, %s88
    %p92 = scmp.eq.s32.totalorder %s10, 0
    %p93 = por %p91, %p92
    %p94 = scmp.ne.s32.totalorder %s86, %s88
    %p95 = scmp.eq.s32.totalorder %s15, 1
    %p96 = por %p94, %p95
    %p97 = scmp.ne.s32.totalorder %s88, %s89
    %p98 = scmp.eq.s32.totalorder %s15, 0
    %p99 = por %p97, %p98
    %p100 = scmp.ne.s32.totalorder %s88, %s89
    %p101 = scmp.eq.s32.totalorder %s16, 1
    %p102 = por %p100, %p101
    %p104 = scmp.ne.s32.totalorder %s89, %s103
    %p105 = scmp.eq.s32.totalorder %s16, 0
    %p106 = por %p104, %p105
    %s107 = ssub.s32 %s10, %s17
    %p108 = scmp.eq.s32.totalorder %s107, 0
    %s110 = sadd.s32 %s109, 1
    %s111 = scalar_select %p108, %s109, %s110
    %p114 = pneg %p108
    %p115 = scmp.eq.s32.totalorder %s10, 1
    %p116 = por %p114, %p115
    %p117 = scmp.ne.s32.totalorder %s109, %s112
    %p118 = scmp.eq.s32.totalorder %s10, 0
    %p119 = por %p117, %p118
    %p120 = scmp.ne.s32.totalorder %s109, %s112
    %p121 = scmp.eq.s32.totalorder %s15, 1
    %p122 = por %p120, %p121
    %p123 = scmp.ne.s32.totalorder %s112, %s113
    %p124 = scmp.eq.s32.totalorder %s15, 0
    %p125 = por %p123, %p124
    %p126 = scmp.ne.s32.totalorder %s112, %s113
    %p127 = scmp.eq.s32.totalorder %s16, 1
    %p128 = por %p126, %p127
    %p130 = scmp.ne.s32.totalorder %s113, %s129
    %p131 = scmp.eq.s32.totalorder %s16, 0
    %p132 = por %p130, %p131
    %p133 = scmp.le.s32.totalorder 1, %s10
    %p134 = scmp.lt.s32.totalorder %s10, 3
    %p135 = pnand %p133, %p134
    %p136 = pneg %p135
    // Predicated region
    $region9: #{resnet_vib_forward.3} parent=5 // pred_check
      _
    $region10: #{resnet_vib_forward.3} parent=5 // pred_check_branch
      %138 = sbr.rel (%p135) target = $region12
    $region11: #{resnet_vib_forward.3} parent=5 // pred_region
      %s139 = ssub.s32 %s10, 1
      // Predicated region
      $region13: #{resnet_vib_forward.3} parent=11 // pred_check
        %p140 = pneg %p57
      $region14: #{resnet_vib_forward.3} parent=11 // pred_check_branch
        %142 = sbr.rel (%p140) target = $region16
      $region15: #{resnet_vib_forward.3} parent=11 // pred_region
        _
      $region16: #{resnet_vib_forward.3} parent=11 // pred_fallthru
        _
      // Predicated region
      $region17: #{resnet_vib_forward.3} parent=11 // pred_check
        %p143 = pneg %p78
      $region18: #{resnet_vib_forward.3} parent=11 // pred_check_branch
        %145 = sbr.rel (%p143) target = $region20
      $region19: #{resnet_vib_forward.3} parent=11 // pred_region
        _
      $region20: #{resnet_vib_forward.3} parent=11 // pred_fallthru
        _
      // Predicated region
      $region21: #{resnet_vib_forward.3} parent=11 // pred_check
        %p146 = pneg %p99
      $region22: #{resnet_vib_forward.3} parent=11 // pred_check_branch
        %148 = sbr.rel (%p146) target = $region24
      $region23: #{resnet_vib_forward.3} parent=11 // pred_region
        _
      $region24: #{resnet_vib_forward.3} parent=11 // pred_fallthru
        _
    $region12: #{resnet_vib_forward.3} parent=5 // pred_fallthru
      _
    %p149 = scmp.lt.s32.totalorder %s10, 2
    // Predicated region
    $region25: #{resnet_vib_forward.3} parent=5 // pred_check
      %p150 = pneg %p149
    $region26: #{resnet_vib_forward.3} parent=5 // pred_check_branch
      %152 = sbr.rel (%p150) target = $region28
    $region27: #{resnet_vib_forward.3} parent=5 // pred_region
      // Predicated region
      $region29: #{resnet_vib_forward.3} parent=27 // pred_check
        %p153 = pneg %p30
      $region30: #{resnet_vib_forward.3} parent=27 // pred_check_branch
        %155 = sbr.rel (%p153) target = $region32
      $region31: #{resnet_vib_forward.3} parent=27 // pred_region
        %p156 = scmp.lt.s32.totalorder %s10, 1
        %s157 = scalar_select %p156, %s10, 1
        %s158 = smul.addr %s157, 6
        %s159 = smul.addr %s158, 8
        %s160 = scalar_lea.vmem %s0, %s159
      $region32: #{resnet_vib_forward.3} parent=27 // pred_fallthru
        _
    $region28: #{resnet_vib_forward.3} parent=5 // pred_fallthru
      _
    %p161 = scmp.le.s32.totalorder 1, %s10
    %p162 = scmp.lt.s32.totalorder %s10, 3
    %p163 = pnand %p161, %p162
    %p164 = pneg %p163
    // Predicated region
    $region33: #{resnet_vib_forward.3} parent=5 // pred_check
      _
    $region34: #{resnet_vib_forward.3} parent=5 // pred_check_branch
      %166 = sbr.rel (%p163) target = $region36
    $region35: #{resnet_vib_forward.3} parent=5 // pred_region
      %s167 = ssub.s32 %s10, 1
      %p168 = scmp.lt.s32.totalorder %s15, 1
      %s169 = scalar_select %p168, %s15, 1
      %s170 = smul.addr %s169, 6
      %s171 = smul.addr %s170, 8
      %s172 = scalar_lea.vmem %s0, %s171
      %p173 = pneg %p36
      %p174 = pneg %p33
      %p175 = pneg %p57
      %p176 = pneg %p54
      %p177 = pneg %p78
      %p178 = pneg %p75
      %p179 = pneg %p99
      %p180 = pneg %p96
      %p181 = pneg %p125
      %p182 = pneg %p122
      %p183 = scmp.lt.s32.totalorder %s15, 1
      %s184 = scalar_select %p183, %s15, 1
      %s185 = smul.addr %s184, 6
      %s186 = smul.addr %s185, 8
      %s187 = scalar_lea.vmem %s4, %s186
      %p188 = scmp.lt.s32.totalorder %s15, 1
      %s189 = scalar_select %p188, %s15, 1
      %s190 = smul.addr %s189, 6
      %s191 = smul.addr %s190, 8
      %s192 = scalar_lea.vmem %s0, %s191
      %p193 = scmp.lt.s32.totalorder %s15, 1
      %s194 = scalar_select %p193, %s15, 1
      %s195 = smul.addr %s194, 6
      %s196 = smul.addr %s195, 8
      %s197 = scalar_lea.vmem %s4, %s196
      %v198 = vld [vmem:[%s1] sm:$0x7]
      %v199 = vld [vmem:[%s2] sm:$0xff]
      %v200 = vld [vmem:[%s2 + $0x8] sm:$0xff]
      %v201 = vld [vmem:[%s2 + $0x10] sm:$0xff]
      %v202 = vld [vmem:[%s2 + $0x18] sm:$0xff]
      %s203 = scalar_lea.vmem %s2, 32
      %v204 = vld [vmem:[%s203] sm:$0xff]
      %v205 = vld [vmem:[%s203 + $0x8] sm:$0xff]
      %v206 = vld [vmem:[%s203 + $0x10] sm:$0xff]
      %v207 = vld [vmem:[%s203 + $0x18] sm:$0xff]
      %s208 = scalar_lea.vmem %s2, 64
      %v209 = vld [vmem:[%s208] sm:$0xff]
      %v210 = vld [vmem:[%s208 + $0x8] sm:$0xff]
      %v211 = vld [vmem:[%s208 + $0x10] sm:$0xff]
      %v212 = vld [vmem:[%s208 + $0x18] sm:$0xff]
      %v213 = vld [vmem:[%s3] sm:$0xff]
      %v214 = vld [vmem:[%s3 + $0x8] sm:$0xff]
      %s215 = scalar_lea.vmem %s3, 16
      %v216 = vld [vmem:[%s215] sm:$0xff]
      %v217 = vld [vmem:[%s215 + $0x8] sm:$0xff]
      %s218 = scalar_lea.vmem %s3, 32
      %v219 = vld [vmem:[%s218] sm:$0xff]
      %v220 = vld [vmem:[%s218 + $0x8] sm:$0xff]
      %v221 = vld [vmem:[%s192] sm:$0xff]
      %v222 = vld [vmem:[%s192 + $0x8] sm:$0xff]
      %v223 = vld [vmem:[%s192 + $0x10] sm:$0xff]
      %v224 = vld [vmem:[%s192 + $0x18] sm:$0xff]
      %v225 = vld [vmem:[%s192 + $0x20] sm:$0xff]
      %v226 = vld [vmem:[%s192 + $0x28] sm:$0xff]
      %233 = vrot.lane.b32.xlu0 %v221, 127
      %v234 = vpop.permute.xlu0 %233
      %235 = vrot.lane.b32.xlu0 %v222, 127
      %v236 = vpop.permute.xlu0 %235
      %237 = vrot.lane.b32.xlu0 %v223, 127
      %v238 = vpop.permute.xlu0 %237
      %239 = vrot.lane.b32.xlu0 %v224, 127
      %v240 = vpop.permute.xlu0 %239
      %241 = vrot.lane.b32.xlu0 %v225, 127
      %v242 = vpop.permute.xlu0 %241
      %243 = vrot.lane.b32.xlu0 %v226, 127
      %v244 = vpop.permute.xlu0 %243
      %vm245 = vcmask 1039360
      %v246 = vsel %vm245, %v234, %v236
      %v247 = vsel %vm245, %v236, %v238
      %v248 = vsel %vm245, %v240, %v242
      %v249 = vsel %vm245, %v242, %v244
      %256 = vrot.lane.b32.xlu0 %v221, 126
      %v257 = vpop.permute.xlu0 %256
      %258 = vrot.lane.b32.xlu0 %v222, 126
      %v259 = vpop.permute.xlu0 %258
      %260 = vrot.lane.b32.xlu0 %v223, 126
      %v261 = vpop.permute.xlu0 %260
      %262 = vrot.lane.b32.xlu0 %v224, 126
      %v263 = vpop.permute.xlu0 %262
      %264 = vrot.lane.b32.xlu0 %v225, 126
      %v265 = vpop.permute.xlu0 %264
      %266 = vrot.lane.b32.xlu0 %v226, 126
      %v267 = vpop.permute.xlu0 %266
      %vm268 = vcmask 1031168
      %v269 = vsel %vm268, %v257, %v259
      %v270 = vsel %vm268, %v259, %v261
      %v271 = vsel %vm268, %v263, %v265
      %v272 = vsel %vm268, %v265, %v267
      %279 = vrot.lane.b32.xlu0 %v221, 110
      %v280 = vpop.permute.xlu0 %279
      %281 = vrot.lane.b32.xlu0 %v222, 110
      %v282 = vpop.permute.xlu0 %281
      %283 = vrot.lane.b32.xlu0 %v223, 110
      %v284 = vpop.permute.xlu0 %283
      %285 = vrot.lane.b32.xlu0 %v224, 110
      %v286 = vpop.permute.xlu0 %285
      %287 = vrot.lane.b32.xlu0 %v225, 110
      %v288 = vpop.permute.xlu0 %287
      %289 = vrot.lane.b32.xlu0 %v226, 110
      %v290 = vpop.permute.xlu0 %289
      %vm291 = vcmask 900096
      %v292 = vsel %vm291, %v280, %v282
      %v293 = vsel %vm291, %v282, %v284
      %v294 = vsel %vm291, %v286, %v288
      %v295 = vsel %vm291, %v288, %v290
      %302 = vrot.lane.b32.xlu0 %v221, 109
      %v303 = vpop.permute.xlu0 %302
      %304 = vrot.lane.b32.xlu0 %v222, 109
      %v305 = vpop.permute.xlu0 %304
      %306 = vrot.lane.b32.xlu0 %v223, 109
      %v307 = vpop.permute.xlu0 %306
      %308 = vrot.lane.b32.xlu0 %v224, 109
      %v309 = vpop.permute.xlu0 %308
      %310 = vrot.lane.b32.xlu0 %v225, 109
      %v311 = vpop.permute.xlu0 %310
      %312 = vrot.lane.b32.xlu0 %v226, 109
      %v313 = vpop.permute.xlu0 %312
      %vm314 = vcmask 891904
      %v315 = vsel %vm314, %v303, %v305
      %v316 = vsel %vm314, %v305, %v307
      %v317 = vsel %vm314, %v309, %v311
      %v318 = vsel %vm314, %v311, %v313
      %325 = vrot.lane.b32.xlu0 %v221, 108
      %v326 = vpop.permute.xlu0 %325
      %327 = vrot.lane.b32.xlu0 %v222, 108
      %v328 = vpop.permute.xlu0 %327
      %329 = vrot.lane.b32.xlu0 %v223, 108
      %v330 = vpop.permute.xlu0 %329
      %331 = vrot.lane.b32.xlu0 %v224, 108
      %v332 = vpop.permute.xlu0 %331
      %333 = vrot.lane.b32.xlu0 %v225, 108
      %v334 = vpop.permute.xlu0 %333
      %335 = vrot.lane.b32.xlu0 %v226, 108
      %v336 = vpop.permute.xlu0 %335
      %vm337 = vcmask 883712
      %v338 = vsel %vm337, %v326, %v328
      %v339 = vsel %vm337, %v328, %v330
      %v340 = vsel %vm337, %v332, %v334
      %v341 = vsel %vm337, %v334, %v336
      %348 = vrot.lane.b32.xlu0 %v221, 92
      %v349 = vpop.permute.xlu0 %348
      %350 = vrot.lane.b32.xlu0 %v222, 92
      %v351 = vpop.permute.xlu0 %350
      %352 = vrot.lane.b32.xlu0 %v223, 92
      %v353 = vpop.permute.xlu0 %352
      %354 = vrot.lane.b32.xlu0 %v224, 92
      %v355 = vpop.permute.xlu0 %354
      %356 = vrot.lane.b32.xlu0 %v225, 92
      %v357 = vpop.permute.xlu0 %356
      %358 = vrot.lane.b32.xlu0 %v226, 92
      %v359 = vpop.permute.xlu0 %358
      %vm360 = vcmask 752640
      %v361 = vsel %vm360, %v349, %v351
      %v362 = vsel %vm360, %v351, %v353
      %v363 = vsel %vm360, %v355, %v357
      %v364 = vsel %vm360, %v357, %v359
      %371 = vrot.lane.b32.xlu0 %v221, 91
      %v372 = vpop.permute.xlu0 %371
      %373 = vrot.lane.b32.xlu0 %v222, 91
      %v374 = vpop.permute.xlu0 %373
      %375 = vrot.lane.b32.xlu0 %v223, 91
      %v376 = vpop.permute.xlu0 %375
      %377 = vrot.lane.b32.xlu0 %v224, 91
      %v378 = vpop.permute.xlu0 %377
      %379 = vrot.lane.b32.xlu0 %v225, 91
      %v380 = vpop.permute.xlu0 %379
      %381 = vrot.lane.b32.xlu0 %v226, 91
      %v382 = vpop.permute.xlu0 %381
      %vm383 = vcmask 744448
      %v384 = vsel %vm383, %v372, %v374
      %v385 = vsel %vm383, %v374, %v376
      %v386 = vsel %vm383, %v378, %v380
      %v387 = vsel %vm383, %v380, %v382
      %394 = vrot.lane.b32.xlu0 %v221, 90
      %v395 = vpop.permute.xlu0 %394
      %396 = vrot.lane.b32.xlu0 %v222, 90
      %v397 = vpop.permute.xlu0 %396
      %398 = vrot.lane.b32.xlu0 %v223, 90
      %v399 = vpop.permute.xlu0 %398
      %400 = vrot.lane.b32.xlu0 %v224, 90
      %v401 = vpop.permute.xlu0 %400
      %402 = vrot.lane.b32.xlu0 %v225, 90
      %v403 = vpop.permute.xlu0 %402
      %404 = vrot.lane.b32.xlu0 %v226, 90
      %v405 = vpop.permute.xlu0 %404
      %vm406 = vcmask 736256
      %v407 = vsel %vm406, %v395, %v397
      %v408 = vsel %vm406, %v397, %v399
      %v409 = vsel %vm406, %v401, %v403
      %v410 = vsel %vm406, %v403, %v405
      %418 = vset.pattern.permute.xlu0 0
      %419 = vperm.xlu0 %418, %v213
      %v420 = vpop.permute.xlu0 %419
      %423 = vset.pattern.permute.xlu0 0
      %424 = vperm.xlu0 %423, %v214
      %v425 = vpop.permute.xlu0 %424
      %vm427 = vcmask 130048
      %v429 = vsel %vm427, %v200, 0
      %v432 = vsel %vm427, %v202, 0
      %434 = vmatprep.subr.mxu0 %v222
      %435 = vmatpush1.msra.mxu0 %v221
      %436 = vmatprep.subr.mxu0 %v225
      %437 = vmatpush1.msra.mxu0 %v224
      %438 = vmatprep.subr.mxu0 %v247
      %439 = vmatpush1.msra.mxu0 %v246
      %440 = vmatprep.subr.mxu0 %v249
      %441 = vmatpush1.msra.mxu0 %v248
      %442 = vmatprep.subr.mxu0 %v270
      %443 = vmatpush1.msra.mxu0 %v269
      %444 = vmatprep.subr.mxu0 %v272
      %445 = vmatpush1.msra.mxu0 %v271
      %446 = vmatprep.subr.mxu0 %v293
      %447 = vmatpush1.msra.mxu0 %v292
      %448 = vmatprep.subr.mxu0 %v295
      %449 = vmatpush1.msra.mxu0 %v294
      %450 = vmatprep.subr.mxu0 %v316
      %451 = vmatpush1.msra.mxu0 %v315
      %452 = vmatprep.subr.mxu0 %v318
      %453 = vmatpush1.msra.mxu0 %v317
      %454 = vmatprep.subr.mxu0 %v339
      %455 = vmatpush1.msra.mxu0 %v338
      %456 = vmatprep.subr.mxu0 %v341
      %457 = vmatpush1.msra.mxu0 %v340
      %458 = vmatprep.subr.mxu0 %v362
      %459 = vmatpush1.msra.mxu0 %v361
      %460 = vmatprep.subr.mxu0 %v364
      %461 = vmatpush1.msra.mxu0 %v363
      %462 = vmatprep.subr.mxu0 %v385
      %463 = vmatpush1.msra.mxu0 %v384
      %464 = vmatprep.subr.mxu0 %v387
      %465 = vmatpush1.msra.mxu0 %v386
      %466 = vmatprep.subr.mxu0 %v408
      %467 = vmatpush1.msra.mxu0 %v407
      %468 = vmatprep.subr.mxu0 %v410
      %469 = vmatpush1.msra.mxu0 %v409
      %470 = vmatprep.subr.mxu0 0.0
      %471 = vmatpush1.msra.mxu0 0.0
      %472 = vmatprep.subr.mxu0 0.0
      %473 = vmatpush1.msra.mxu0 0.0
      %474 = vmatprep.subr.mxu0 0.0
      %475 = vmatpush1.msra.mxu0 0.0
      %476 = vmatprep.subr.mxu0 0.0
      %477 = vmatpush1.msra.mxu0 0.0
      %478 = vmatprep.subr.mxu0 0.0
      %479 = vmatpush1.msra.mxu0 0.0
      %480 = vmatprep.subr.mxu0 0.0
      %481 = vmatpush1.msra.mxu0 0.0
      %482 = vmatprep.subr.mxu0 0.0
      %483 = vmatpush1.msra.mxu0 0.0
      %484 = vmatprep.subr.mxu0 0.0
      %485 = vmatpush1.msra.mxu0 0.0
      %486 = vmatprep.subr.mxu0 0.0
      %487 = vmatpush1.msra.mxu0 0.0
      %488 = vmatprep.subr.mxu0 0.0
      %489 = vmatpush1.msra.mxu0 0.0
      %490 = vmatprep.subr.mxu0 0.0
      %491 = vmatpush1.msra.mxu0 0.0
      %492 = vmatprep.subr.mxu0 0.0
      %493 = vmatpush1.msra.mxu0 0.0
      %494 = vmatprep.subr.mxu0 0.0
      %495 = vmatpush1.msra.mxu0 0.0
      %496 = vmatprep.subr.mxu0 0.0
      %497 = vmatpush1.msra.mxu0 0.0
      %498 = vmatprep.mubr.f32.mxu0 %v429
      %499 = vmatmul.mubr.f32.gmra.mrb[0].mxu0 %v199
      %v500 = vpop.f32.mrb[0].mxu0
      %v501 = vadd.f32 %v420, %v500
      %v502 = vpop.f32.mrb[0].mxu0
      %v503 = vadd.f32 %v420, %v502
      %504 = vmatprep.mubr.f32.mxu0 %v432
      %505 = vmatmul.mubr.f32.gmra.mrb[0].mxu0 %v201
      %v506 = vpop.f32.mrb[0].mxu0
      %v507 = vadd.f32 %v425, %v506
      %v508 = vpop.f32.mrb[0].mxu0
      %v509 = vadd.f32 %v425, %v508
      %510 = vdwg.mxu0
      %511 = vmatprep.subr.mxu0 0.0
      %512 = vmatpush1.msra.mxu0 %v223
      %513 = vmatprep.subr.mxu0 0.0
      %514 = vmatpush1.msra.mxu0 %v226
      %515 = vmatprep.subr.mxu0 0.0
      %516 = vmatpush1.msra.mxu0 %v238
      %517 = vmatprep.subr.mxu0 0.0
      %518 = vmatpush1.msra.mxu0 %v244
      %519 = vmatprep.subr.mxu0 0.0
      %520 = vmatpush1.msra.mxu0 %v261
      %521 = vmatprep.subr.mxu0 0.0
      %522 = vmatpush1.msra.mxu0 %v267
      %523 = vmatprep.subr.mxu0 0.0
      %524 = vmatpush1.msra.mxu0 %v284
      %525 = vmatprep.subr.mxu0 0.0
      %526 = vmatpush1.msra.mxu0 %v290
      %527 = vmatprep.subr.mxu0 0.0
      %528 = vmatpush1.msra.mxu0 %v307
      %529 = vmatprep.subr.mxu0 0.0
      %530 = vmatpush1.msra.mxu0 %v313
      %531 = vmatprep.subr.mxu0 0.0
      %532 = vmatpush1.msra.mxu0 %v330
      %533 = vmatprep.subr.mxu0 0.0
      %534 = vmatpush1.msra.mxu0 %v336
      %535 = vmatprep.subr.mxu0 0.0
      %536 = vmatpush1.msra.mxu0 %v353
      %537 = vmatprep.subr.mxu0 0.0
      %538 = vmatpush1.msra.mxu0 %v359
      %539 = vmatprep.subr.mxu0 0.0
      %540 = vmatpush1.msra.mxu0 %v376
      %541 = vmatprep.subr.mxu0 0.0
      %542 = vmatpush1.msra.mxu0 %v382
      %543 = vmatprep.subr.mxu0 0.0
      %544 = vmatpush1.msra.mxu0 %v399
      %545 = vmatprep.subr.mxu0 0.0
      %546 = vmatpush1.msra.mxu0 %v405
      %547 = vmatprep.subr.mxu0 0.0
      %548 = vmatpush1.msra.mxu0 0.0
      %549 = vmatprep.subr.mxu0 0.0
      %550 = vmatpush1.msra.mxu0 0.0
      %551 = vmatprep.subr.mxu0 0.0
      %552 = vmatpush1.msra.mxu0 0.0
      %553 = vmatprep.subr.mxu0 0.0
      %554 = vmatpush1.msra.mxu0 0.0
      %555 = vmatprep.subr.mxu0 0.0
      %556 = vmatpush1.msra.mxu0 0.0
      %557 = vmatprep.subr.mxu0 0.0
      %558 = vmatpush1.msra.mxu0 0.0
      %559 = vmatprep.subr.mxu0 0.0
      %560 = vmatpush1.msra.mxu0 0.0
      %561 = vmatprep.subr.mxu0 0.0
      %562 = vmatpush1.msra.mxu0 0.0
      %563 = vmatprep.subr.mxu0 0.0
      %564 = vmatpush1.msra.mxu0 0.0
      %565 = vmatprep.subr.mxu0 0.0
      %566 = vmatpush1.msra.mxu0 0.0
      %567 = vmatprep.subr.mxu0 0.0
      %568 = vmatpush1.msra.mxu0 0.0
      %569 = vmatprep.subr.mxu0 0.0
      %570 = vmatpush1.msra.mxu0 0.0
      %571 = vmatprep.subr.mxu0 0.0
      %572 = vmatpush1.msra.mxu0 0.0
      %573 = vmatprep.subr.mxu0 0.0
      %574 = vmatpush1.msra.mxu0 0.0
      %575 = vmatprep.mubr.f32.mxu0 %v429
      %576 = vmatmul.mubr.f32.gmra.mrb[0].mxu0 %v199
      %v577 = vpop.f32.mrb[0].mxu0
      %v578 = vadd.f32 %v420, %v577
      %v579 = vpop.f32.mrb[0].mxu0
      %580 = vmatprep.mubr.f32.mxu0 %v432
      %581 = vmatmul.mubr.f32.gmra.mrb[0].mxu0 %v201
      %v582 = vpop.f32.mrb[0].mxu0
      %v583 = vadd.f32 %v425, %v582
      %v584 = vpop.f32.mrb[0].mxu0
      %585 = vdwg.mxu0
      %v586 = vmax.f32 %v501, 0.0
      %v587 = vmax.f32 %v503, 0.0
      %v588 = vmax.f32 %v578, 0.0
      %v589 = vmax.f32 %v507, 0.0
      %v590 = vmax.f32 %v509, 0.0
      %v591 = vmax.f32 %v583, 0.0
      %v593 = vlaneseq
      %v594 = vshrl.u32 %v593, 7
      %v595 = vsub.s32 0, %v594
      %v596 = vrot.slane %v198, %v595
      %v597 = vlaneseq
      %v598 = vshrl.u32 %v597, 7
      %v599 = vsub.s32 1, %v598
      %v600 = vrot.slane %v198, %v599
      %v601 = vlaneseq
      %v602 = vshrl.u32 %v601, 7
      %v603 = vsub.s32 2, %v602
      %v604 = vrot.slane %v198, %v603
      %v608 = vmul.f32 %v586, %v596
      %v609 = vmul.f32 %v587, %v600
      %v610 = vmul.f32 %v588, %v604
      %v611 = vmul.f32 %v589, %v596
      %v612 = vmul.f32 %v590, %v600
      %v613 = vmul.f32 %v591, %v604
      %620 = vrot.lane.b32.xlu0 %v608, 19
      %v621 = vpop.permute.xlu0 %620
      %622 = vrot.lane.b32.xlu0 %v609, 19
      %v623 = vpop.permute.xlu0 %622
      %624 = vrot.lane.b32.xlu0 %v610, 19
      %v625 = vpop.permute.xlu0 %624
      %626 = vrot.lane.b32.xlu0 %v611, 19
      %v627 = vpop.permute.xlu0 %626
      %628 = vrot.lane.b32.xlu0 %v612, 19
      %v629 = vpop.permute.xlu0 %628
      %630 = vrot.lane.b32.xlu0 %v613, 19
      %v631 = vpop.permute.xlu0 %630
      %vm632 = vcmask 154624
      %v633 = vsel %vm632, %v621, %v623
      %v634 = vsel %vm632, %v623, %v625
      %v635 = vsel %vm632, %v627, %v629
      %v636 = vsel %vm632, %v629, %v631
      %v643 = vsel %vm632, 0.0, %v621
      %v644 = vsel %vm632, 0.0, %v627
      %vm645 = vcmask 416768
      %v646 = vsel %vm645, %v634, 0.0
      %v647 = vsel %vm645, %v636, 0.0
      %652 = vrot.lane.b32.xlu0 %v643, 127
      %v653 = vpop.permute.xlu0 %652
      %654 = vrot.lane.b32.xlu0 %v633, 127
      %v655 = vpop.permute.xlu0 %654
      %656 = vrot.lane.b32.xlu0 %v646, 127
      %v657 = vpop.permute.xlu0 %656
      %658 = vrot.lane.b32.xlu0 %v644, 127
      %v659 = vpop.permute.xlu0 %658
      %660 = vrot.lane.b32.xlu0 %v635, 127
      %v661 = vpop.permute.xlu0 %660
      %662 = vrot.lane.b32.xlu0 %v647, 127
      %v663 = vpop.permute.xlu0 %662
      %v664 = vsel %vm245, %v653, %v655
      %v665 = vsel %vm245, %v655, %v657
      %v666 = vsel %vm245, %v659, %v661
      %v667 = vsel %vm245, %v661, %v663
      %674 = vrot.lane.b32.xlu0 %v643, 126
      %v675 = vpop.permute.xlu0 %674
      %676 = vrot.lane.b32.xlu0 %v633, 126
      %v677 = vpop.permute.xlu0 %676
      %678 = vrot.lane.b32.xlu0 %v646, 126
      %v679 = vpop.permute.xlu0 %678
      %680 = vrot.lane.b32.xlu0 %v644, 126
      %v681 = vpop.permute.xlu0 %680
      %682 = vrot.lane.b32.xlu0 %v635, 126
      %v683 = vpop.permute.xlu0 %682
      %684 = vrot.lane.b32.xlu0 %v647, 126
      %v685 = vpop.permute.xlu0 %684
      %v686 = vsel %vm268, %v675, %v677
      %v687 = vsel %vm268, %v677, %v679
      %v688 = vsel %vm268, %v681, %v683
      %v689 = vsel %vm268, %v683, %v685
      %696 = vrot.lane.b32.xlu0 %v643, 110
      %v697 = vpop.permute.xlu0 %696
      %698 = vrot.lane.b32.xlu0 %v633, 110
      %v699 = vpop.permute.xlu0 %698
      %700 = vrot.lane.b32.xlu0 %v646, 110
      %v701 = vpop.permute.xlu0 %700
      %702 = vrot.lane.b32.xlu0 %v644, 110
      %v703 = vpop.permute.xlu0 %702
      %704 = vrot.lane.b32.xlu0 %v635, 110
      %v705 = vpop.permute.xlu0 %704
      %706 = vrot.lane.b32.xlu0 %v647, 110
      %v707 = vpop.permute.xlu0 %706
      %v708 = vsel %vm291, %v697, %v699
      %v709 = vsel %vm291, %v699, %v701
      %v710 = vsel %vm291, %v703, %v705
      %v711 = vsel %vm291, %v705, %v707
      %718 = vrot.lane.b32.xlu0 %v643, 109
      %v719 = vpop.permute.xlu0 %718
      %720 = vrot.lane.b32.xlu0 %v633, 109
      %v721 = vpop.permute.xlu0 %720
      %722 = vrot.lane.b32.xlu0 %v646, 109
      %v723 = vpop.permute.xlu0 %722
      %724 = vrot.lane.b32.xlu0 %v644, 109
      %v725 = vpop.permute.xlu0 %724
      %726 = vrot.lane.b32.xlu0 %v635, 109
      %v727 = vpop.permute.xlu0 %726
      %728 = vrot.lane.b32.xlu0 %v647, 109
      %v729 = vpop.permute.xlu0 %728
      %v730 = vsel %vm314, %v719, %v721
      %v731 = vsel %vm314, %v721, %v723
      %v732 = vsel %vm314, %v725, %v727
      %v733 = vsel %vm314, %v727, %v729
      %740 = vrot.lane.b32.xlu0 %v643, 108
      %v741 = vpop.permute.xlu0 %740
      %742 = vrot.lane.b32.xlu0 %v633, 108
      %v743 = vpop.permute.xlu0 %742
      %744 = vrot.lane.b32.xlu0 %v646, 108
      %v745 = vpop.permute.xlu0 %744
      %746 = vrot.lane.b32.xlu0 %v644, 108
      %v747 = vpop.permute.xlu0 %746
      %748 = vrot.lane.b32.xlu0 %v635, 108
      %v749 = vpop.permute.xlu0 %748
      %750 = vrot.lane.b32.xlu0 %v647, 108
      %v751 = vpop.permute.xlu0 %750
      %v752 = vsel %vm337, %v741, %v743
      %v753 = vsel %vm337, %v743, %v745
      %v754 = vsel %vm337, %v747, %v749
      %v755 = vsel %vm337, %v749, %v751
      %762 = vrot.lane.b32.xlu0 %v643, 92
      %v763 = vpop.permute.xlu0 %762
      %764 = vrot.lane.b32.xlu0 %v633, 92
      %v765 = vpop.permute.xlu0 %764
      %766 = vrot.lane.b32.xlu0 %v646, 92
      %v767 = vpop.permute.xlu0 %766
      %768 = vrot.lane.b32.xlu0 %v644, 92
      %v769 = vpop.permute.xlu0 %768
      %770 = vrot.lane.b32.xlu0 %v635, 92
      %v771 = vpop.permute.xlu0 %770
      %772 = vrot.lane.b32.xlu0 %v647, 92
      %v773 = vpop.permute.xlu0 %772
      %v774 = vsel %vm360, %v763, %v765
      %v775 = vsel %vm360, %v765, %v767
      %v776 = vsel %vm360, %v769, %v771
      %v777 = vsel %vm360, %v771, %v773
      %784 = vrot.lane.b32.xlu0 %v643, 91
      %v785 = vpop.permute.xlu0 %784
      %786 = vrot.lane.b32.xlu0 %v633, 91
      %v787 = vpop.permute.xlu0 %786
      %788 = vrot.lane.b32.xlu0 %v646, 91
      %v789 = vpop.permute.xlu0 %788
      %790 = vrot.lane.b32.xlu0 %v644, 91
      %v791 = vpop.permute.xlu0 %790
      %792 = vrot.lane.b32.xlu0 %v635, 91
      %v793 = vpop.permute.xlu0 %792
      %794 = vrot.lane.b32.xlu0 %v647, 91
      %v795 = vpop.permute.xlu0 %794
      %v796 = vsel %vm383, %v785, %v787
      %v797 = vsel %vm383, %v787, %v789
      %v798 = vsel %vm383, %v791, %v793
      %v799 = vsel %vm383, %v793, %v795
      %806 = vrot.lane.b32.xlu0 %v643, 90
      %v807 = vpop.permute.xlu0 %806
      %808 = vrot.lane.b32.xlu0 %v633, 90
      %v809 = vpop.permute.xlu0 %808
      %810 = vrot.lane.b32.xlu0 %v646, 90
      %v811 = vpop.permute.xlu0 %810
      %812 = vrot.lane.b32.xlu0 %v644, 90
      %v813 = vpop.permute.xlu0 %812
      %814 = vrot.lane.b32.xlu0 %v635, 90
      %v815 = vpop.permute.xlu0 %814
      %816 = vrot.lane.b32.xlu0 %v647, 90
      %v817 = vpop.permute.xlu0 %816
      %v818 = vsel %vm406, %v807, %v809
      %v819 = vsel %vm406, %v809, %v811
      %v820 = vsel %vm406, %v813, %v815
      %v821 = vsel %vm406, %v815, %v817
      %829 = vset.pattern.permute.xlu0 0
      %830 = vperm.xlu0 %829, %v216
      %v831 = vpop.permute.xlu0 %830
      %834 = vset.pattern.permute.xlu0 0
      %835 = vperm.xlu0 %834, %v217
      %v836 = vpop.permute.xlu0 %835
      %v839 = vsel %vm427, %v205, 0
      %v842 = vsel %vm427, %v207, 0
      %844 = vmatprep.subr.mxu0 %v633
      %845 = vmatpush1.msra.mxu0 %v643
      %846 = vmatprep.subr.mxu0 %v635
      %847 = vmatpush1.msra.mxu0 %v644
      %848 = vmatprep.subr.mxu0 %v665
      %849 = vmatpush1.msra.mxu0 %v664
      %850 = vmatprep.subr.mxu0 %v667
      %851 = vmatpush1.msra.mxu0 %v666
      %852 = vmatprep.subr.mxu0 %v687
      %853 = vmatpush1.msra.mxu0 %v686
      %854 = vmatprep.subr.mxu0 %v689
      %855 = vmatpush1.msra.mxu0 %v688
      %856 = vmatprep.subr.mxu0 %v709
      %857 = vmatpush1.msra.mxu0 %v708
      %858 = vmatprep.subr.mxu0 %v711
      %859 = vmatpush1.msra.mxu0 %v710
      %860 = vmatprep.subr.mxu0 %v731
      %861 = vmatpush1.msra.mxu0 %v730
      %862 = vmatprep.subr.mxu0 %v733
      %863 = vmatpush1.msra.mxu0 %v732
      %864 = vmatprep.subr.mxu0 %v753
      %865 = vmatpush1.msra.mxu0 %v752
      %866 = vmatprep.subr.mxu0 %v755
      %867 = vmatpush1.msra.mxu0 %v754
      %868 = vmatprep.subr.mxu0 %v775
      %869 = vmatpush1.msra.mxu0 %v774
      %870 = vmatprep.subr.mxu0 %v777
      %871 = vmatpush1.msra.mxu0 %v776
      %872 = vmatprep.subr.mxu0 %v797
      %873 = vmatpush1.msra.mxu0 %v796
      %874 = vmatprep.subr.mxu0 %v799
      %875 = vmatpush1.msra.mxu0 %v798
      %876 = vmatprep.subr.mxu0 %v819
      %877 = vmatpush1.msra.mxu0 %v818
      %878 = vmatprep.subr.mxu0 %v821
      %879 = vmatpush1.msra.mxu0 %v820
      %880 = vmatprep.subr.mxu0 0.0
      %881 = vmatpush1.msra.mxu0 0.0
      %882 = vmatprep.subr.mxu0 0.0
      %883 = vmatpush1.msra.mxu0 0.0
      %884 = vmatprep.subr.mxu0 0.0
      %885 = vmatpush1.msra.mxu0 0.0
      %886 = vmatprep.subr.mxu0 0.0
      %887 = vmatpush1.msra.mxu0 0.0
      %888 = vmatprep.subr.mxu0 0.0
      %889 = vmatpush1.msra.mxu0 0.0
      %890 = vmatprep.subr.mxu0 0.0
      %891 = vmatpush1.msra.mxu0 0.0
      %892 = vmatprep.subr.mxu0 0.0
      %893 = vmatpush1.msra.mxu0 0.0
      %894 = vmatprep.subr.mxu0 0.0
      %895 = vmatpush1.msra.mxu0 0.0
      %896 = vmatprep.subr.mxu0 0.0
      %897 = vmatpush1.msra.mxu0 0.0
      %898 = vmatprep.subr.mxu0 0.0
      %899 = vmatpush1.msra.mxu0 0.0
      %900 = vmatprep.subr.mxu0 0.0
      %901 = vmatpush1.msra.mxu0 0.0
      %902 = vmatprep.subr.mxu0 0.0
      %903 = vmatpush1.msra.mxu0 0.0
      %904 = vmatprep.subr.mxu0 0.0
      %905 = vmatpush1.msra.mxu0 0.0
      %906 = vmatprep.subr.mxu0 0.0
      %907 = vmatpush1.msra.mxu0 0.0
      %908 = vmatprep.mubr.f32.mxu0 %v839
      %909 = vmatmul.mubr.f32.gmra.mrb[0].mxu0 %v204
      %v910 = vpop.f32.mrb[0].mxu0
      %v911 = vadd.f32 %v831, %v910
      %v912 = vpop.f32.mrb[0].mxu0
      %v913 = vadd.f32 %v831, %v912
      %914 = vmatprep.mubr.f32.mxu0 %v842
      %915 = vmatmul.mubr.f32.gmra.mrb[0].mxu0 %v206
      %v916 = vpop.f32.mrb[0].mxu0
      %v917 = vadd.f32 %v836, %v916
      %v918 = vpop.f32.mrb[0].mxu0
      %v919 = vadd.f32 %v836, %v918
      %920 = vdwg.mxu0
      %921 = vmatprep.subr.mxu0 0.0
      %922 = vmatpush1.msra.mxu0 %v646
      %923 = vmatprep.subr.mxu0 0.0
      %924 = vmatpush1.msra.mxu0 %v647
      %925 = vmatprep.subr.mxu0 0.0
      %926 = vmatpush1.msra.mxu0 %v657
      %927 = vmatprep.subr.mxu0 0.0
      %928 = vmatpush1.msra.mxu0 %v663
      %929 = vmatprep.subr.mxu0 0.0
      %930 = vmatpush1.msra.mxu0 %v679
      %931 = vmatprep.subr.mxu0 0.0
      %932 = vmatpush1.msra.mxu0 %v685
      %933 = vmatprep.subr.mxu0 0.0
      %934 = vmatpush1.msra.mxu0 %v701
      %935 = vmatprep.subr.mxu0 0.0
      %936 = vmatpush1.msra.mxu0 %v707
      %937 = vmatprep.subr.mxu0 0.0
      %938 = vmatpush1.msra.mxu0 %v723
      %939 = vmatprep.subr.mxu0 0.0
      %940 = vmatpush1.msra.mxu0 %v729
      %941 = vmatprep.subr.mxu0 0.0
      %942 = vmatpush1.msra.mxu0 %v745
      %943 = vmatprep.subr.mxu0 0.0
      %944 = vmatpush1.msra.mxu0 %v751
      %945 = vmatprep.subr.mxu0 0.0
      %946 = vmatpush1.msra.mxu0 %v767
      %947 = vmatprep.subr.mxu0 0.0
      %948 = vmatpush1.msra.mxu0 %v773
      %949 = vmatprep.subr.mxu0 0.0
      %950 = vmatpush1.msra.mxu0 %v789
      %951 = vmatprep.subr.mxu0 0.0
      %952 = vmatpush1.msra.mxu0 %v795
      %953 = vmatprep.subr.mxu0 0.0
      %954 = vmatpush1.msra.mxu0 %v811
      %955 = vmatprep.subr.mxu0 0.0
      %956 = vmatpush1.msra.mxu0 %v817
      %957 = vmatprep.subr.mxu0 0.0
      %958 = vmatpush1.msra.mxu0 0.0
      %959 = vmatprep.subr.mxu0 0.0
      %960 = vmatpush1.msra.mxu0 0.0
      %961 = vmatprep.subr.mxu0 0.0
      %962 = vmatpush1.msra.mxu0 0.0
      %963 = vmatprep.subr.mxu0 0.0
      %964 = vmatpush1.msra.mxu0 0.0
      %965 = vmatprep.subr.mxu0 0.0
      %966 = vmatpush1.msra.mxu0 0.0
      %967 = vmatprep.subr.mxu0 0.0
      %968 = vmatpush1.msra.mxu0 0.0
      %969 = vmatprep.subr.mxu0 0.0
      %970 = vmatpush1.msra.mxu0 0.0
      %971 = vmatprep.subr.mxu0 0.0
      %972 = vmatpush1.msra.mxu0 0.0
      %973 = vmatprep.subr.mxu0 0.0
      %974 = vmatpush1.msra.mxu0 0.0
      %975 = vmatprep.subr.mxu0 0.0
      %976 = vmatpush1.msra.mxu0 0.0
      %977 = vmatprep.subr.mxu0 0.0
      %978 = vmatpush1.msra.mxu0 0.0
      %979 = vmatprep.subr.mxu0 0.0
      %980 = vmatpush1.msra.mxu0 0.0
      %981 = vmatprep.subr.mxu0 0.0
      %982 = vmatpush1.msra.mxu0 0.0
      %983 = vmatprep.subr.mxu0 0.0
      %984 = vmatpush1.msra.mxu0 0.0
      %985 = vmatprep.mubr.f32.mxu0 %v839
      %986 = vmatmul.mubr.f32.gmra.mrb[0].mxu0 %v204
      %v987 = vpop.f32.mrb[0].mxu0
      %v988 = vadd.f32 %v831, %v987
      %v989 = vpop.f32.mrb[0].mxu0
      %990 = vmatprep.mubr.f32.mxu0 %v842
      %991 = vmatmul.mubr.f32.gmra.mrb[0].mxu0 %v206
      %v992 = vpop.f32.mrb[0].mxu0
      %v993 = vadd.f32 %v836, %v992
      %v994 = vpop.f32.mrb[0].mxu0
      %995 = vdwg.mxu0
      %v996 = vmax.f32 %v911, 0.0
      %v997 = vmax.f32 %v913, 0.0
      %v998 = vmax.f32 %v988, 0.0
      %v999 = vmax.f32 %v917, 0.0
      %v1000 = vmax.f32 %v919, 0.0
      %v1001 = vmax.f32 %v993, 0.0
      %v1002 = vmul.f32 %v996, %v596
      %v1003 = vmul.f32 %v997, %v600
      %v1004 = vmul.f32 %v998, %v604
      %v1005 = vmul.f32 %v999, %v596
      %v1006 = vmul.f32 %v1000, %v600
      %v1007 = vmul.f32 %v1001, %v604
      %1014 = vrot.lane.b32.xlu0 %v1002, 19
      %v1015 = vpop.permute.xlu0 %1014
      %1016 = vrot.lane.b32.xlu0 %v1003, 19
      %v1017 = vpop.permute.xlu0 %1016
      %1018 = vrot.lane.b32.xlu0 %v1004, 19
      %v1019 = vpop.permute.xlu0 %1018
      %1020 = vrot.lane.b32.xlu0 %v1005, 19
      %v1021 = vpop.permute.xlu0 %1020
      %1022 = vrot.lane.b32.xlu0 %v1006, 19
      %v1023 = vpop.permute.xlu0 %1022
      %1024 = vrot.lane.b32.xlu0 %v1007, 19
      %v1025 = vpop.permute.xlu0 %1024
      %v1026 = vsel %vm632, %v1015, %v1017
      %v1027 = vsel %vm632, %v1017, %v1019
      %v1028 = vsel %vm632, %v1021, %v1023
      %v1029 = vsel %vm632, %v1023, %v1025
      %v1036 = vsel %vm632, 0.0, %v1015
      %v1037 = vsel %vm632, 0.0, %v1021
      %v1038 = vsel %vm645, %v1027, 0.0
      %v1039 = vsel %vm645, %v1029, 0.0
      %1044 = vrot.lane.b32.xlu0 %v1036, 127
      %v1045 = vpop.permute.xlu0 %1044
      %1046 = vrot.lane.b32.xlu0 %v1026, 127
      %v1047 = vpop.permute.xlu0 %1046
      %1048 = vrot.lane.b32.xlu0 %v1038, 127
      %v1049 = vpop.permute.xlu0 %1048
      %1050 = vrot.lane.b32.xlu0 %v1037, 127
      %v1051 = vpop.permute.xlu0 %1050
      %1052 = vrot.lane.b32.xlu0 %v1028, 127
      %v1053 = vpop.permute.xlu0 %1052
      %1054 = vrot.lane.b32.xlu0 %v1039, 127
      %v1055 = vpop.permute.xlu0 %1054
      %v1056 = vsel %vm245, %v1045, %v1047
      %v1057 = vsel %vm245, %v1047, %v1049
      %v1058 = vsel %vm245, %v1051, %v1053
      %v1059 = vsel %vm245, %v1053, %v1055
      %1066 = vrot.lane.b32.xlu0 %v1036, 126
      %v1067 = vpop.permute.xlu0 %1066
      %1068 = vrot.lane.b32.xlu0 %v1026, 126
      %v1069 = vpop.permute.xlu0 %1068
      %1070 = vrot.lane.b32.xlu0 %v1038, 126
      %v1071 = vpop.permute.xlu0 %1070
      %1072 = vrot.lane.b32.xlu0 %v1037, 126
      %v1073 = vpop.permute.xlu0 %1072
      %1074 = vrot.lane.b32.xlu0 %v1028, 126
      %v1075 = vpop.permute.xlu0 %1074
      %1076 = vrot.lane.b32.xlu0 %v1039, 126
      %v1077 = vpop.permute.xlu0 %1076
      %v1078 = vsel %vm268, %v1067, %v1069
      %v1079 = vsel %vm268, %v1069, %v1071
      %v1080 = vsel %vm268, %v1073, %v1075
      %v1081 = vsel %vm268, %v1075, %v1077
      %1088 = vrot.lane.b32.xlu0 %v1036, 110
      %v1089 = vpop.permute.xlu0 %1088
      %1090 = vrot.lane.b32.xlu0 %v1026, 110
      %v1091 = vpop.permute.xlu0 %1090
      %1092 = vrot.lane.b32.xlu0 %v1038, 110
      %v1093 = vpop.permute.xlu0 %1092
      %1094 = vrot.lane.b32.xlu0 %v1037, 110
      %v1095 = vpop.permute.xlu0 %1094
      %1096 = vrot.lane.b32.xlu0 %v1028, 110
      %v1097 = vpop.permute.xlu0 %1096
      %1098 = vrot.lane.b32.xlu0 %v1039, 110
      %v1099 = vpop.permute.xlu0 %1098
      %v1100 = vsel %vm291, %v1089, %v1091
      %v1101 = vsel %vm291, %v1091, %v1093
      %v1102 = vsel %vm291, %v1095, %v1097
      %v1103 = vsel %vm291, %v1097, %v1099
      %1110 = vrot.lane.b32.xlu0 %v1036, 109
      %v1111 = vpop.permute.xlu0 %1110
      %1112 = vrot.lane.b32.xlu0 %v1026, 109
      %v1113 = vpop.permute.xlu0 %1112
      %1114 = vrot.lane.b32.xlu0 %v1038, 109
      %v1115 = vpop.permute.xlu0 %1114
      %1116 = vrot.lane.b32.xlu0 %v1037, 109
      %v1117 = vpop.permute.xlu0 %1116
      %1118 = vrot.lane.b32.xlu0 %v1028, 109
      %v1119 = vpop.permute.xlu0 %1118
      %1120 = vrot.lane.b32.xlu0 %v1039, 109
      %v1121 = vpop.permute.xlu0 %1120
      %v1122 = vsel %vm314, %v1111, %v1113
      %v1123 = vsel %vm314, %v1113, %v1115
      %v1124 = vsel %vm314, %v1117, %v1119
      %v1125 = vsel %vm314, %v1119, %v1121
      %1132 = vrot.lane.b32.xlu0 %v1036, 108
      %v1133 = vpop.permute.xlu0 %1132
      %1134 = vrot.lane.b32.xlu0 %v1026, 108
      %v1135 = vpop.permute.xlu0 %1134
      %1136 = vrot.lane.b32.xlu0 %v1038, 108
      %v1137 = vpop.permute.xlu0 %1136
      %1138 = vrot.lane.b32.xlu0 %v1037, 108
      %v1139 = vpop.permute.xlu0 %1138
      %1140 = vrot.lane.b32.xlu0 %v1028, 108
      %v1141 = vpop.permute.xlu0 %1140
      %1142 = vrot.lane.b32.xlu0 %v1039, 108
      %v1143 = vpop.permute.xlu0 %1142
      %v1144 = vsel %vm337, %v1133, %v1135
      %v1145 = vsel %vm337, %v1135, %v1137
      %v1146 = vsel %vm337, %v1139, %v1141
      %v1147 = vsel %vm337, %v1141, %v1143
      %1154 = vrot.lane.b32.xlu0 %v1036, 92
      %v1155 = vpop.permute.xlu0 %1154
      %1156 = vrot.lane.b32.xlu0 %v1026, 92
      %v1157 = vpop.permute.xlu0 %1156
      %1158 = vrot.lane.b32.xlu0 %v1038, 92
      %v1159 = vpop.permute.xlu0 %1158
      %1160 = vrot.lane.b32.xlu0 %v1037, 92
      %v1161 = vpop.permute.xlu0 %1160
      %1162 = vrot.lane.b32.xlu0 %v1028, 92
      %v1163 = vpop.permute.xlu0 %1162
      %1164 = vrot.lane.b32.xlu0 %v1039, 92
      %v1165 = vpop.permute.xlu0 %1164
      %v1166 = vsel %vm360, %v1155, %v1157
      %v1167 = vsel %vm360, %v1157, %v1159
      %v1168 = vsel %vm360, %v1161, %v1163
      %v1169 = vsel %vm360, %v1163, %v1165
      %1176 = vrot.lane.b32.xlu0 %v1036, 91
      %v1177 = vpop.permute.xlu0 %1176
      %1178 = vrot.lane.b32.xlu0 %v1026, 91
      %v1179 = vpop.permute.xlu0 %1178
      %1180 = vrot.lane.b32.xlu0 %v1038, 91
      %v1181 = vpop.permute.xlu0 %1180
      %1182 = vrot.lane.b32.xlu0 %v1037, 91
      %v1183 = vpop.permute.xlu0 %1182
      %1184 = vrot.lane.b32.xlu0 %v1028, 91
      %v1185 = vpop.permute.xlu0 %1184
      %1186 = vrot.lane.b32.xlu0 %v1039, 91
      %v1187 = vpop.permute.xlu0 %1186
      %v1188 = vsel %vm383, %v1177, %v1179
      %v1189 = vsel %vm383, %v1179, %v1181
      %v1190 = vsel %vm383, %v1183, %v1185
      %v1191 = vsel %vm383, %v1185, %v1187
      %1198 = vrot.lane.b32.xlu0 %v1036, 90
      %v1199 = vpop.permute.xlu0 %1198
      %1200 = vrot.lane.b32.xlu0 %v1026, 90
      %v1201 = vpop.permute.xlu0 %1200
      %1202 = vrot.lane.b32.xlu0 %v1038, 90
      %v1203 = vpop.permute.xlu0 %1202
      %1204 = vrot.lane.b32.xlu0 %v1037, 90
      %v1205 = vpop.permute.xlu0 %1204
      %1206 = vrot.lane.b32.xlu0 %v1028, 90
      %v1207 = vpop.permute.xlu0 %1206
      %1208 = vrot.lane.b32.xlu0 %v1039, 90
      %v1209 = vpop.permute.xlu0 %1208
      %v1210 = vsel %vm406, %v1199, %v1201
      %v1211 = vsel %vm406, %v1201, %v1203
      %v1212 = vsel %vm406, %v1205, %v1207
      %v1213 = vsel %vm406, %v1207, %v1209
      %1221 = vset.pattern.permute.xlu0 0
      %1222 = vperm.xlu0 %1221, %v219
      %v1223 = vpop.permute.xlu0 %1222
      %1226 = vset.pattern.permute.xlu0 0
      %1227 = vperm.xlu0 %1226, %v220
      %v1228 = vpop.permute.xlu0 %1227
      %v1231 = vsel %vm427, %v210, 0
      %v1234 = vsel %vm427, %v212, 0
      %1236 = vmatprep.subr.mxu0 %v1026
      %1237 = vmatpush1.msra.mxu0 %v1036
      %1238 = vmatprep.subr.mxu0 %v1028
      %1239 = vmatpush1.msra.mxu0 %v1037
      %1240 = vmatprep.subr.mxu0 %v1057
      %1241 = vmatpush1.msra.mxu0 %v1056
      %1242 = vmatprep.subr.mxu0 %v1059
      %1243 = vmatpush1.msra.mxu0 %v1058
      %1244 = vmatprep.subr.mxu0 %v1079
      %1245 = vmatpush1.msra.mxu0 %v1078
      %1246 = vmatprep.subr.mxu0 %v1081
      %1247 = vmatpush1.msra.mxu0 %v1080
      %1248 = vmatprep.subr.mxu0 %v1101
      %1249 = vmatpush1.msra.mxu0 %v1100
      %1250 = vmatprep.subr.mxu0 %v1103
      %1251 = vmatpush1.msra.mxu0 %v1102
      %1252 = vmatprep.subr.mxu0 %v1123
      %1253 = vmatpush1.msra.mxu0 %v1122
      %1254 = vmatprep.subr.mxu0 %v1125
      %1255 = vmatpush1.msra.mxu0 %v1124
      %1256 = vmatprep.subr.mxu0 %v1145
      %1257 = vmatpush1.msra.mxu0 %v1144
      %1258 = vmatprep.subr.mxu0 %v1147
      %1259 = vmatpush1.msra.mxu0 %v1146
      %1260 = vmatprep.subr.mxu0 %v1167
      %1261 = vmatpush1.msra.mxu0 %v1166
      %1262 = vmatprep.subr.mxu0 %v1169
      %1263 = vmatpush1.msra.mxu0 %v1168
      %1264 = vmatprep.subr.mxu0 %v1189
      %1265 = vmatpush1.msra.mxu0 %v1188
      %1266 = vmatprep.subr.mxu0 %v1191
      %1267 = vmatpush1.msra.mxu0 %v1190
      %1268 = vmatprep.subr.mxu0 %v1211
      %1269 = vmatpush1.msra.mxu0 %v1210
      %1270 = vmatprep.subr.mxu0 %v1213
      %1271 = vmatpush1.msra.mxu0 %v1212
      %1272 = vmatprep.subr.mxu0 0.0
      %1273 = vmatpush1.msra.mxu0 0.0
      %1274 = vmatprep.subr.mxu0 0.0
      %1275 = vmatpush1.msra.mxu0 0.0
      %1276 = vmatprep.subr.mxu0 0.0
      %1277 = vmatpush1.msra.mxu0 0.0
      %1278 = vmatprep.subr.mxu0 0.0
      %1279 = vmatpush1.msra.mxu0 0.0
      %1280 = vmatprep.subr.mxu0 0.0
      %1281 = vmatpush1.msra.mxu0 0.0
      %1282 = vmatprep.subr.mxu0 0.0
      %1283 = vmatpush1.msra.mxu0 0.0
      %1284 = vmatprep.subr.mxu0 0.0
      %1285 = vmatpush1.msra.mxu0 0.0
      %1286 = vmatprep.subr.mxu0 0.0
      %1287 = vmatpush1.msra.mxu0 0.0
      %1288 = vmatprep.subr.mxu0 0.0
      %1289 = vmatpush1.msra.mxu0 0.0
      %1290 = vmatprep.subr.mxu0 0.0
      %1291 = vmatpush1.msra.mxu0 0.0
      %1292 = vmatprep.subr.mxu0 0.0
      %1293 = vmatpush1.msra.mxu0 0.0
      %1294 = vmatprep.subr.mxu0 0.0
      %1295 = vmatpush1.msra.mxu0 0.0
      %1296 = vmatprep.subr.mxu0 0.0
      %1297 = vmatpush1.msra.mxu0 0.0
      %1298 = vmatprep.subr.mxu0 0.0
      %1299 = vmatpush1.msra.mxu0 0.0
      %1300 = vmatprep.mubr.f32.mxu0 %v1231
      %1301 = vmatmul.mubr.f32.gmra.mrb[0].mxu0 %v209
      %v1302 = vpop.f32.mrb[0].mxu0
      %v1303 = vadd.f32 %v1223, %v1302
      %v1304 = vpop.f32.mrb[0].mxu0
      %v1305 = vadd.f32 %v1223, %v1304
      %1306 = vmatprep.mubr.f32.mxu0 %v1234
      %1307 = vmatmul.mubr.f32.gmra.mrb[0].mxu0 %v211
      %v1308 = vpop.f32.mrb[0].mxu0
      %v1309 = vadd.f32 %v1228, %v1308
      %v1310 = vpop.f32.mrb[0].mxu0
      %v1311 = vadd.f32 %v1228, %v1310
      %1312 = vdwg.mxu0
      %1313 = vmatprep.subr.mxu0 0.0
      %1314 = vmatpush1.msra.mxu0 %v1038
      %1315 = vmatprep.subr.mxu0 0.0
      %1316 = vmatpush1.msra.mxu0 %v1039
      %1317 = vmatprep.subr.mxu0 0.0
      %1318 = vmatpush1.msra.mxu0 %v1049
      %1319 = vmatprep.subr.mxu0 0.0
      %1320 = vmatpush1.msra.mxu0 %v1055
      %1321 = vmatprep.subr.mxu0 0.0
      %1322 = vmatpush1.msra.mxu0 %v1071
      %1323 = vmatprep.subr.mxu0 0.0
      %1324 = vmatpush1.msra.mxu0 %v1077
      %1325 = vmatprep.subr.mxu0 0.0
      %1326 = vmatpush1.msra.mxu0 %v1093
      %1327 = vmatprep.subr.mxu0 0.0
      %1328 = vmatpush1.msra.mxu0 %v1099
      %1329 = vmatprep.subr.mxu0 0.0
      %1330 = vmatpush1.msra.mxu0 %v1115
      %1331 = vmatprep.subr.mxu0 0.0
      %1332 = vmatpush1.msra.mxu0 %v1121
      %1333 = vmatprep.subr.mxu0 0.0
      %1334 = vmatpush1.msra.mxu0 %v1137
      %1335 = vmatprep.subr.mxu0 0.0
      %1336 = vmatpush1.msra.mxu0 %v1143
      %1337 = vmatprep.subr.mxu0 0.0
      %1338 = vmatpush1.msra.mxu0 %v1159
      %1339 = vmatprep.subr.mxu0 0.0
      %1340 = vmatpush1.msra.mxu0 %v1165
      %1341 = vmatprep.subr.mxu0 0.0
      %1342 = vmatpush1.msra.mxu0 %v1181
      %1343 = vmatprep.subr.mxu0 0.0
      %1344 = vmatpush1.msra.mxu0 %v1187
      %1345 = vmatprep.subr.mxu0 0.0
      %1346 = vmatpush1.msra.mxu0 %v1203
      %1347 = vmatprep.subr.mxu0 0.0
      %1348 = vmatpush1.msra.mxu0 %v1209
      %1349 = vmatprep.subr.mxu0 0.0
      %1350 = vmatpush1.msra.mxu0 0.0
      %1351 = vmatprep.subr.mxu0 0.0
      %1352 = vmatpush1.msra.mxu0 0.0
      %1353 = vmatprep.subr.mxu0 0.0
      %1354 = vmatpush1.msra.mxu0 0.0
      %1355 = vmatprep.subr.mxu0 0.0
      %1356 = vmatpush1.msra.mxu0 0.0
      %1357 = vmatprep.subr.mxu0 0.0
      %1358 = vmatpush1.msra.mxu0 0.0
      %1359 = vmatprep.subr.mxu0 0.0
      %1360 = vmatpush1.msra.mxu0 0.0
      %1361 = vmatprep.subr.mxu0 0.0
      %1362 = vmatpush1.msra.mxu0 0.0
      %1363 = vmatprep.subr.mxu0 0.0
      %1364 = vmatpush1.msra.mxu0 0.0
      %1365 = vmatprep.subr.mxu0 0.0
      %1366 = vmatpush1.msra.mxu0 0.0
      %1367 = vmatprep.subr.mxu0 0.0
      %1368 = vmatpush1.msra.mxu0 0.0
      %1369 = vmatprep.subr.mxu0 0.0
      %1370 = vmatpush1.msra.mxu0 0.0
      %1371 = vmatprep.subr.mxu0 0.0
      %1372 = vmatpush1.msra.mxu0 0.0
      %1373 = vmatprep.subr.mxu0 0.0
      %1374 = vmatpush1.msra.mxu0 0.0
      %1375 = vmatprep.subr.mxu0 0.0
      %1376 = vmatpush1.msra.mxu0 0.0
      %1377 = vmatprep.mubr.f32.mxu0 %v1231
      %1378 = vmatmul.mubr.f32.gmra.mrb[0].mxu0 %v209
      %v1379 = vpop.f32.mrb[0].mxu0
      %v1380 = vadd.f32 %v1223, %v1379
      %v1381 = vpop.f32.mrb[0].mxu0
      %1382 = vmatprep.mubr.f32.mxu0 %v1234
      %1383 = vmatmul.mubr.f32.gmra.mrb[0].mxu0 %v211
      %v1384 = vpop.f32.mrb[0].mxu0
      %v1385 = vadd.f32 %v1228, %v1384
      %v1386 = vpop.f32.mrb[0].mxu0
      %1387 = vdwg.mxu0
      %v1388 = vadd.f32 %v1303, %v730
      %v1389 = vadd.f32 %v1305, %v731
      %v1390 = vadd.f32 %v1380, %v723
      %v1391 = vadd.f32 %v1309, %v732
      %v1392 = vadd.f32 %v1311, %v733
      %v1393 = vadd.f32 %v1385, %v729
      %v1394 = vmax.f32 %v1388, 0.0
      %v1395 = vmax.f32 %v1389, 0.0
      %v1396 = vmax.f32 %v1390, 0.0
      %v1397 = vmax.f32 %v1391, 0.0
      %v1398 = vmax.f32 %v1392, 0.0
      %v1399 = vmax.f32 %v1393, 0.0
      %v1400 = vmul.f32 %v1394, %v596
      %v1401 = vmul.f32 %v1395, %v600
      %v1402 = vmul.f32 %v1396, %v604
      %v1403 = vmul.f32 %v1397, %v596
      %v1404 = vmul.f32 %v1398, %v600
      %v1405 = vmul.f32 %v1399, %v604
      %1412 = vrot.lane.b32.xlu0 %v1400, 19
      %v1413 = vpop.permute.xlu0 %1412
      %1414 = vrot.lane.b32.xlu0 %v1401, 19
      %v1415 = vpop.permute.xlu0 %1414
      %1416 = vrot.lane.b32.xlu0 %v1402, 19
      %v1417 = vpop.permute.xlu0 %1416
      %1418 = vrot.lane.b32.xlu0 %v1403, 19
      %v1419 = vpop.permute.xlu0 %1418
      %1420 = vrot.lane.b32.xlu0 %v1404, 19
      %v1421 = vpop.permute.xlu0 %1420
      %1422 = vrot.lane.b32.xlu0 %v1405, 19
      %v1423 = vpop.permute.xlu0 %1422
      %v1424 = vsel %vm632, %v1413, %v1415
      %v1425 = vsel %vm632, %v1415, %v1417
      %v1426 = vsel %vm632, %v1419, %v1421
      %v1427 = vsel %vm632, %v1421, %v1423
      %v1434 = vsel %vm632, 0.0, %v1413
      %v1435 = vsel %vm632, 0.0, %v1419
      %v1436 = vsel %vm645, %v1425, 0.0
      %v1437 = vsel %vm645, %v1427, 0.0
      %1438 = vst [vmem:[%s197] sm:$0xff] %v1434
      %1439 = vst [vmem:[%s197 + $0x8] sm:$0xff] %v1424
      %1440 = vst [vmem:[%s197 + $0x10] sm:$0xff] %v1436
      %1441 = vst [vmem:[%s197 + $0x18] sm:$0xff] %v1435
      %1442 = vst [vmem:[%s197 + $0x20] sm:$0xff] %v1426
      %1443 = vst [vmem:[%s197 + $0x28] sm:$0xff] %v1437
      %p1444 = scmp.lt.s32.totalorder %s15, 1
      %s1445 = scalar_select %p1444, %s15, 1
      %s1446 = smul.addr %s1445, 6
      %s1447 = smul.addr %s1446, 8
      %s1448 = scalar_lea.vmem %s4, %s1447
      // Predicated region
      $region37: #{resnet_vib_forward.3} parent=35 // pred_check
        %p1449 = pneg %p122
      $region38: #{resnet_vib_forward.3} parent=35 // pred_check_branch
        %1451 = sbr.rel (%p1449) target = $region40
      $region39: #{resnet_vib_forward.3} parent=35 // pred_region
        _
      $region40: #{resnet_vib_forward.3} parent=35 // pred_fallthru
        _
    $region36: #{resnet_vib_forward.3} parent=5 // pred_fallthru
      _
    %p1452 = scmp.le.s32.totalorder 2, %s10
    // Predicated region
    $region41: #{resnet_vib_forward.3} parent=5 // pred_check
      %p1453 = pneg %p1452
    $region42: #{resnet_vib_forward.3} parent=5 // pred_check_branch
      %1455 = sbr.rel (%p1453) target = $region44
    $region43: #{resnet_vib_forward.3} parent=5 // pred_region
      %s1456 = ssub.s32 %s10, 2
      // Predicated region
      $region45: #{resnet_vib_forward.3} parent=43 // pred_check
        %p1457 = pneg %p128
      $region46: #{resnet_vib_forward.3} parent=43 // pred_check_branch
        %1459 = sbr.rel (%p1457) target = $region48
      $region47: #{resnet_vib_forward.3} parent=43 // pred_region
        %p1460 = scmp.lt.s32.totalorder %s16, 1
        %s1461 = scalar_select %p1460, %s16, 1
        %s1462 = smul.addr %s1461, 6
        %s1463 = smul.addr %s1462, 8
        %s1464 = scalar_lea.vmem %s4, %s1463
      $region48: #{resnet_vib_forward.3} parent=43 // pred_fallthru
        _
    $region44: #{resnet_vib_forward.3} parent=5 // pred_fallthru
      _
  $region6: #{resnet_vib_forward.3} parent=0 // loop_footer
    %s14 = sadd.s32 1, %s10
  $region7: #{resnet_vib_forward.3} parent=0 // loop_footer_branch
    %9 = sbr.rel target = $region3
  $region8: #{resnet_vib_forward.3} parent=0 // loop_exit
    _

// kernel: resnet_vib_forward.4
$region0: #{resnet_vib_forward.4}
  #allocation0 [shape = 'u32[]', space=smem, size = 0x4, offset = 0x4, fixed_abs, tag = 'smem constant byte address 0x4 - core index']
  #allocation1 [shape = 'u32[144,128]{1,0:T(1,128)}', space=vmem, size = 0x12000, scoped, tag = 'internal scratch']
  %s0 = inlined_call_operand.vmem [shape: f32[2,4,16,128], index: 0, kind: input, shape index: {}]
  %s1 = inlined_call_operand.vmem [shape: f32[1,80], index: 1, kind: input, shape index: {}]
  %s2 = inlined_call_operand.vmem [shape: f32[32,144], index: 2, kind: input, shape index: {}]
  %s3 = inlined_call_operand.vmem [shape: f32[32,1], index: 3, kind: input, shape index: {}]
  %s4 = inlined_call_operand.vmem [shape: f32[32,16], index: 4, kind: input, shape index: {}]
  %s5 = inlined_call_operand.vmem [shape: f32[32,1], index: 5, kind: input, shape index: {}]
  %s6 = inlined_call_operand.vmem [shape: f32[32,288], index: 6, kind: input, shape index: {}]
  %s7 = inlined_call_operand.vmem [shape: f32[32,1], index: 7, kind: input, shape index: {}]
  %s8 = inlined_call_operand.vmem [shape: f32[2,32,128], index: 8, kind: output, shape index: {}]
  %s9 = sld [smem:[#allocation0]]
  $region65: #{resnet_vib_forward.4} parent=0
    _
  %s11 = ssub.s32 1, %s9
  %s12 = scalar_select 0, %s11, %s9
  loop: start=0, step=1, limit=4
  $region2: #{resnet_vib_forward.4} parent=0 // loop_pre_header
    _
  $region3: #{resnet_vib_forward.4} parent=0 // loop_header
    %s14 = sphi 0, %s18
    %p15 = scmp.ge.s32.totalorder %s14, 4
    %s24 = sphi 0, %s26
    %s27 = sphi 0, %s24
    %s28 = sphi 0, %s27
    %s44 = sphi 0, %s28
    %s48 = sphi 0, %s48
    %s50 = sphi 0, %s48
    %s51 = sphi 0, %s50
    %s65 = sphi 0, %s51
    %s69 = sphi 0, %s69
    %s71 = sphi 0, %s69
    %s72 = sphi 0, %s71
    %s86 = sphi 0, %s72
    %s90 = sphi 0, %s90
    %s92 = sphi 0, %s90
    %s93 = sphi 0, %s92
    %s107 = sphi 0, %s93
    %s111 = sphi 0, %s111
    %s113 = sphi 0, %s111
    %s114 = sphi 0, %s113
    %s128 = sphi 0, %s114
    %s132 = sphi 0, %s132
    %s134 = sphi 0, %s132
    %s135 = sphi 0, %s134
    %s149 = sphi 0, %s135
    %s153 = sphi 0, %s153
    %s155 = sphi 0, %s153
    %s156 = sphi 0, %s155
    %s170 = sphi 0, %s156
    %s174 = sphi 0, %s174
    %s176 = sphi 0, %s174
    %s177 = sphi 0, %s176
    %s191 = sphi 0, %s177
    %s197 = sphi 0, %s199
    %s200 = sphi 0, %s197
    %s201 = sphi 0, %s200
    %s217 = sphi 0, %s201
  $region4: #{resnet_vib_forward.4} parent=0 // loop_header_branch
    %17 = sbr.rel (%p15) target = $region8
  $region5: #{resnet_vib_forward.4} parent=0 // loop_body
    %s19 = ssub.s32 %s14, 1
    %s20 = ssub.s32 %s14, 2
    %s21 = sadd.s32 %s14, 1
    %s22 = ssub.s32 %s14, %s21
    %p23 = scmp.eq.s32.totalorder %s22, 0
    %s25 = sadd.s32 %s24, 1
    %s26 = scalar_select %p23, %s24, %s25
    %p29 = pneg %p23
    %p30 = scmp.eq.s32.totalorder %s14, 1
    %p31 = por %p29, %p30
    %p32 = scmp.ne.s32.totalorder %s24, %s27
    %p33 = scmp.eq.s32.totalorder %s14, 0
    %p34 = por %p32, %p33
    %p35 = scmp.ne.s32.totalorder %s24, %s27
    %p36 = scmp.eq.s32.totalorder %s19, 1
    %p37 = por %p35, %p36
    %p38 = scmp.ne.s32.totalorder %s27, %s28
    %p39 = scmp.eq.s32.totalorder %s19, 0
    %p40 = por %p38, %p39
    %p41 = scmp.ne.s32.totalorder %s27, %s28
    %p42 = scmp.eq.s32.totalorder %s20, 1
    %p43 = por %p41, %p42
    %p45 = scmp.ne.s32.totalorder %s28, %s44
    %p46 = scmp.eq.s32.totalorder %s20, 0
    %p47 = por %p45, %p46
    %s49 = sadd.s32 %s48, 1
    %p52 = scmp.eq.s32.totalorder %s14, 1
    %p53 = scmp.ne.s32.totalorder %s48, %s50
    %p54 = scmp.eq.s32.totalorder %s14, 0
    %p55 = por %p53, %p54
    %p56 = scmp.ne.s32.totalorder %s48, %s50
    %p57 = scmp.eq.s32.totalorder %s19, 1
    %p58 = por %p56, %p57
    %p59 = scmp.ne.s32.totalorder %s50, %s51
    %p60 = scmp.eq.s32.totalorder %s19, 0
    %p61 = por %p59, %p60
    %p62 = scmp.ne.s32.totalorder %s50, %s51
    %p63 = scmp.eq.s32.totalorder %s20, 1
    %p64 = por %p62, %p63
    %p66 = scmp.ne.s32.totalorder %s51, %s65
    %p67 = scmp.eq.s32.totalorder %s20, 0
    %p68 = por %p66, %p67
    %s70 = sadd.s32 %s69, 1
    %p73 = scmp.eq.s32.totalorder %s14, 1
    %p74 = scmp.ne.s32.totalorder %s69, %s71
    %p75 = scmp.eq.s32.totalorder %s14, 0
    %p76 = por %p74, %p75
    %p77 = scmp.ne.s32.totalorder %s69, %s71
    %p78 = scmp.eq.s32.totalorder %s19, 1
    %p79 = por %p77, %p78
    %p80 = scmp.ne.s32.totalorder %s71, %s72
    %p81 = scmp.eq.s32.totalorder %s19, 0
    %p82 = por %p80, %p81
    %p83 = scmp.ne.s32.totalorder %s71, %s72
    %p84 = scmp.eq.s32.totalorder %s20, 1
    %p85 = por %p83, %p84
    %p87 = scmp.ne.s32.totalorder %s72, %s86
    %p88 = scmp.eq.s32.totalorder %s20, 0
    %p89 = por %p87, %p88
    %s91 = sadd.s32 %s90, 1
    %p94 = scmp.eq.s32.totalorder %s14, 1
    %p95 = scmp.ne.s32.totalorder %s90, %s92
    %p96 = scmp.eq.s32.totalorder %s14, 0
    %p97 = por %p95, %p96
    %p98 = scmp.ne.s32.totalorder %s90, %s92
    %p99 = scmp.eq.s32.totalorder %s19, 1
    %p100 = por %p98, %p99
    %p101 = scmp.ne.s32.totalorder %s92, %s93
    %p102 = scmp.eq.s32.totalorder %s19, 0
    %p103 = por %p101, %p102
    %p104 = scmp.ne.s32.totalorder %s92, %s93
    %p105 = scmp.eq.s32.totalorder %s20, 1
    %p106 = por %p104, %p105
    %p108 = scmp.ne.s32.totalorder %s93, %s107
    %p109 = scmp.eq.s32.totalorder %s20, 0
    %p110 = por %p108, %p109
    %s112 = sadd.s32 %s111, 1
    %p115 = scmp.eq.s32.totalorder %s14, 1
    %p116 = scmp.ne.s32.totalorder %s111, %s113
    %p117 = scmp.eq.s32.totalorder %s14, 0
    %p118 = por %p116, %p117
    %p119 = scmp.ne.s32.totalorder %s111, %s113
    %p120 = scmp.eq.s32.totalorder %s19, 1
    %p121 = por %p119, %p120
    %p122 = scmp.ne.s32.totalorder %s113, %s114
    %p123 = scmp.eq.s32.totalorder %s19, 0
    %p124 = por %p122, %p123
    %p125 = scmp.ne.s32.totalorder %s113, %s114
    %p126 = scmp.eq.s32.totalorder %s20, 1
    %p127 = por %p125, %p126
    %p129 = scmp.ne.s32.totalorder %s114, %s128
    %p130 = scmp.eq.s32.totalorder %s20, 0
    %p131 = por %p129, %p130
    %s133 = sadd.s32 %s132, 1
    %p136 = scmp.eq.s32.totalorder %s14, 1
    %p137 = scmp.ne.s32.totalorder %s132, %s134
    %p138 = scmp.eq.s32.totalorder %s14, 0
    %p139 = por %p137, %p138
    %p140 = scmp.ne.s32.totalorder %s132, %s134
    %p141 = scmp.eq.s32.totalorder %s19, 1
    %p142 = por %p140, %p141
    %p143 = scmp.ne.s32.totalorder %s134, %s135
    %p144 = scmp.eq.s32.totalorder %s19, 0
    %p145 = por %p143, %p144
    %p146 = scmp.ne.s32.totalorder %s134, %s135
    %p147 = scmp.eq.s32.totalorder %s20, 1
    %p148 = por %p146, %p147
    %p150 = scmp.ne.s32.totalorder %s135, %s149
    %p151 = scmp.eq.s32.totalorder %s20, 0
    %p152 = por %p150, %p151
    %s154 = sadd.s32 %s153, 1
    %p157 = scmp.eq.s32.totalorder %s14, 1
    %p158 = scmp.ne.s32.totalorder %s153, %s155
    %p159 = scmp.eq.s32.totalorder %s14, 0
    %p160 = por %p158, %p159
    %p161 = scmp.ne.s32.totalorder %s153, %s155
    %p162 = scmp.eq.s32.totalorder %s19, 1
    %p163 = por %p161, %p162
    %p164 = scmp.ne.s32.totalorder %s155, %s156
    %p165 = scmp.eq.s32.totalorder %s19, 0
    %p166 = por %p164, %p165
    %p167 = scmp.ne.s32.totalorder %s155, %s156
    %p168 = scmp.eq.s32.totalorder %s20, 1
    %p169 = por %p167, %p168
    %p171 = scmp.ne.s32.totalorder %s156, %s170
    %p172 = scmp.eq.s32.totalorder %s20, 0
    %p173 = por %p171, %p172
    %s175 = sadd.s32 %s174, 1
    %p178 = scmp.eq.s32.totalorder %s14, 1
    %p179 = scmp.ne.s32.totalorder %s174, %s176
    %p180 = scmp.eq.s32.totalorder %s14, 0
    %p181 = por %p179, %p180
    %p182 = scmp.ne.s32.totalorder %s174, %s176
    %p183 = scmp.eq.s32.totalorder %s19, 1
    %p184 = por %p182, %p183
    %p185 = scmp.ne.s32.totalorder %s176, %s177
    %p186 = scmp.eq.s32.totalorder %s19, 0
    %p187 = por %p185, %p186
    %p188 = scmp.ne.s32.totalorder %s176, %s177
    %p189 = scmp.eq.s32.totalorder %s20, 1
    %p190 = por %p188, %p189
    %p192 = scmp.ne.s32.totalorder %s177, %s191
    %p193 = scmp.eq.s32.totalorder %s20, 0
    %p194 = por %p192, %p193
    %s195 = ssub.s32 %s14, %s21
    %p196 = scmp.eq.s32.totalorder %s195, 0
    %s198 = sadd.s32 %s197, 1
    %s199 = scalar_select %p196, %s197, %s198
    %p202 = pneg %p196
    %p203 = scmp.eq.s32.totalorder %s14, 1
    %p204 = por %p202, %p203
    %p205 = scmp.ne.s32.totalorder %s197, %s200
    %p206 = scmp.eq.s32.totalorder %s14, 0
    %p207 = por %p205, %p206
    %p208 = scmp.ne.s32.totalorder %s197, %s200
    %p209 = scmp.eq.s32.totalorder %s19, 1
    %p210 = por %p208, %p209
    %p211 = scmp.ne.s32.totalorder %s200, %s201
    %p212 = scmp.eq.s32.totalorder %s19, 0
    %p213 = por %p211, %p212
    %p214 = scmp.ne.s32.totalorder %s200, %s201
    %p215 = scmp.eq.s32.totalorder %s20, 1
    %p216 = por %p214, %p215
    %p218 = scmp.ne.s32.totalorder %s201, %s217
    %p219 = scmp.eq.s32.totalorder %s20, 0
    %p220 = por %p218, %p219
    %p221 = scmp.le.s32.totalorder 1, %s14
    %p222 = scmp.lt.s32.totalorder %s14, 3
    %p223 = pnand %p221, %p222
    %p224 = pneg %p223
    // Predicated region
    $region9: #{resnet_vib_forward.4} parent=5 // pred_check
      _
    $region10: #{resnet_vib_forward.4} parent=5 // pred_check_branch
      %226 = sbr.rel (%p223) target = $region12
    $region11: #{resnet_vib_forward.4} parent=5 // pred_region
      %s227 = ssub.s32 %s14, 1
      // Predicated region
      $region13: #{resnet_vib_forward.4} parent=11 // pred_check
        %p228 = pneg %p61
      $region14: #{resnet_vib_forward.4} parent=11 // pred_check_branch
        %230 = sbr.rel (%p228) target = $region16
      $region15: #{resnet_vib_forward.4} parent=11 // pred_region
        _
      $region16: #{resnet_vib_forward.4} parent=11 // pred_fallthru
        _
      // Predicated region
      $region17: #{resnet_vib_forward.4} parent=11 // pred_check
        %p231 = pneg %p82
      $region18: #{resnet_vib_forward.4} parent=11 // pred_check_branch
        %233 = sbr.rel (%p231) target = $region20
      $region19: #{resnet_vib_forward.4} parent=11 // pred_region
        _
      $region20: #{resnet_vib_forward.4} parent=11 // pred_fallthru
        _
      // Predicated region
      $region21: #{resnet_vib_forward.4} parent=11 // pred_check
        %p234 = pneg %p103
      $region22: #{resnet_vib_forward.4} parent=11 // pred_check_branch
        %236 = sbr.rel (%p234) target = $region24
      $region23: #{resnet_vib_forward.4} parent=11 // pred_region
        _
      $region24: #{resnet_vib_forward.4} parent=11 // pred_fallthru
        _
      // Predicated region
      $region25: #{resnet_vib_forward.4} parent=11 // pred_check
        %p237 = pneg %p124
      $region26: #{resnet_vib_forward.4} parent=11 // pred_check_branch
        %239 = sbr.rel (%p237) target = $region28
      $region27: #{resnet_vib_forward.4} parent=11 // pred_region
        _
      $region28: #{resnet_vib_forward.4} parent=11 // pred_fallthru
        _
      // Predicated region
      $region29: #{resnet_vib_forward.4} parent=11 // pred_check
        %p240 = pneg %p145
      $region30: #{resnet_vib_forward.4} parent=11 // pred_check_branch
        %242 = sbr.rel (%p240) target = $region32
      $region31: #{resnet_vib_forward.4} parent=11 // pred_region
        _
      $region32: #{resnet_vib_forward.4} parent=11 // pred_fallthru
        _
      // Predicated region
      $region33: #{resnet_vib_forward.4} parent=11 // pred_check
        %p243 = pneg %p166
      $region34: #{resnet_vib_forward.4} parent=11 // pred_check_branch
        %245 = sbr.rel (%p243) target = $region36
      $region35: #{resnet_vib_forward.4} parent=11 // pred_region
        _
      $region36: #{resnet_vib_forward.4} parent=11 // pred_fallthru
        _
      // Predicated region
      $region37: #{resnet_vib_forward.4} parent=11 // pred_check
        %p246 = pneg %p187
      $region38: #{resnet_vib_forward.4} parent=11 // pred_check_branch
        %248 = sbr.rel (%p246) target = $region40
      $region39: #{resnet_vib_forward.4} parent=11 // pred_region
        _
      $region40: #{resnet_vib_forward.4} parent=11 // pred_fallthru
        _
    $region12: #{resnet_vib_forward.4} parent=5 // pred_fallthru
      _
    %p249 = scmp.lt.s32.totalorder %s14, 2
    // Predicated region
    $region41: #{resnet_vib_forward.4} parent=5 // pred_check
      %p250 = pneg %p249
    $region42: #{resnet_vib_forward.4} parent=5 // pred_check_branch
      %252 = sbr.rel (%p250) target = $region44
    $region43: #{resnet_vib_forward.4} parent=5 // pred_region
      // Predicated region
      $region45: #{resnet_vib_forward.4} parent=43 // pred_check
        %p253 = pneg %p34
      $region46: #{resnet_vib_forward.4} parent=43 // pred_check_branch
        %255 = sbr.rel (%p253) target = $region48
      $region47: #{resnet_vib_forward.4} parent=43 // pred_region
        %p256 = scmp.lt.s32.totalorder %s14, 1
        %s257 = scalar_select %p256, %s14, 1
        %s258 = smul.addr %s257, 8
        %s259 = smul.addr %s258, 8
        %s260 = scalar_lea.vmem %s0, %s259
      $region48: #{resnet_vib_forward.4} parent=43 // pred_fallthru
        _
    $region44: #{resnet_vib_forward.4} parent=5 // pred_fallthru
      _
    %p261 = scmp.le.s32.totalorder 1, %s14
    %p262 = scmp.lt.s32.totalorder %s14, 3
    %p263 = pnand %p261, %p262
    %p264 = pneg %p263
    // Predicated region
    $region49: #{resnet_vib_forward.4} parent=5 // pred_check
      _
    $region50: #{resnet_vib_forward.4} parent=5 // pred_check_branch
      %266 = sbr.rel (%p263) target = $region52
    $region51: #{resnet_vib_forward.4} parent=5 // pred_region
      %s267 = ssub.s32 %s14, 1
      %p268 = scmp.lt.s32.totalorder %s19, 1
      %s269 = scalar_select %p268, %s19, 1
      %s270 = smul.addr %s269, 8
      %s271 = smul.addr %s270, 8
      %s272 = scalar_lea.vmem %s0, %s271
      %p273 = pneg %p40
      %p274 = pneg %p37
      %p275 = pneg %p61
      %p276 = pneg %p58
      %p277 = pneg %p82
      %p278 = pneg %p79
      %p279 = pneg %p103
      %p280 = pneg %p100
      %p281 = pneg %p124
      %p282 = pneg %p121
      %p283 = pneg %p145
      %p284 = pneg %p142
      %p285 = pneg %p166
      %p286 = pneg %p163
      %p287 = pneg %p187
      %p288 = pneg %p184
      %p289 = pneg %p213
      %p290 = pneg %p210
      %p291 = scmp.lt.s32.totalorder %s19, 1
      %s292 = scalar_select %p291, %s19, 1
      %s293 = smul.addr %s292, 4
      %s294 = smul.addr %s293, 8
      %s295 = scalar_lea.vmem %s8, %s294
      %p296 = scmp.lt.s32.totalorder %s19, 1
      %s297 = scalar_select %p296, %s19, 1
      %s298 = smul.addr %s297, 8
      %s299 = smul.addr %s298, 8
      %s300 = scalar_lea.vmem %s0, %s299
      %p301 = scmp.lt.s32.totalorder %s19, 1
      %s302 = scalar_select %p301, %s19, 1
      %s303 = smul.addr %s302, 4
      %s304 = smul.addr %s303, 8
      %s305 = scalar_lea.vmem %s8, %s304
      %v306 = vld [vmem:[%s1] sm:$0x1]
      %v307 = vld [vmem:[%s2] sm:$0xff]
      %v308 = vld [vmem:[%s2 + $0x8] sm:$0xff]
      %v309 = vld [vmem:[%s2 + $0x10] sm:$0xff]
      %v310 = vld [vmem:[%s2 + $0x18] sm:$0xff]
      %v311 = vld [vmem:[%s2 + $0x20] sm:$0xff]
      %v312 = vld [vmem:[%s2 + $0x28] sm:$0xff]
      %v313 = vld [vmem:[%s2 + $0x30] sm:$0xff]
      %v314 = vld [vmem:[%s2 + $0x38] sm:$0xff]
      %v315 = vld [vmem:[%s3] sm:$0xff]
      %v316 = vld [vmem:[%s3 + $0x8] sm:$0xff]
      %v317 = vld [vmem:[%s3 + $0x10] sm:$0xff]
      %v318 = vld [vmem:[%s3 + $0x18] sm:$0xff]
      %v319 = vld [vmem:[%s4] sm:$0xff]
      %v320 = vld [vmem:[%s4 + $0x8] sm:$0xff]
      %v321 = vld [vmem:[%s4 + $0x10] sm:$0xff]
      %v322 = vld [vmem:[%s4 + $0x18] sm:$0xff]
      %v323 = vld [vmem:[%s5] sm:$0xff]
      %v324 = vld [vmem:[%s5 + $0x8] sm:$0xff]
      %v325 = vld [vmem:[%s5 + $0x10] sm:$0xff]
      %v326 = vld [vmem:[%s5 + $0x18] sm:$0xff]
      %v327 = vld [vmem:[%s6] sm:$0xff]
      %v328 = vld [vmem:[%s6 + $0x8] sm:$0xff]
      %v329 = vld [vmem:[%s6 + $0x10] sm:$0xff]
      %v330 = vld [vmem:[%s6 + $0x18] sm:$0xff]
      %v331 = vld [vmem:[%s6 + $0x20] sm:$0xff]
      %v332 = vld [vmem:[%s6 + $0x28] sm:$0xff]
      %v333 = vld [vmem:[%s6 + $0x30] sm:$0xff]
      %v334 = vld [vmem:[%s6 + $0x38] sm:$0xff]
      %v335 = vld [vmem:[%s6 + $0x40] sm:$0xff]
      %v336 = vld [vmem:[%s6 + $0x48] sm:$0xff]
      %v337 = vld [vmem:[%s6 + $0x50] sm:$0xff]
      %v338 = vld [vmem:[%s6 + $0x58] sm:$0xff]
      %v339 = vld [vmem:[%s7] sm:$0xff]
      %v340 = vld [vmem:[%s7 + $0x8] sm:$0xff]
      %v341 = vld [vmem:[%s7 + $0x10] sm:$0xff]
      %v342 = vld [vmem:[%s7 + $0x18] sm:$0xff]
      %v343 = vld [vmem:[%s300] sm:$0xff]
      %v344 = vld [vmem:[%s300 + $0x8] sm:$0xff]
      %s345 = scalar_lea.vmem %s300, 16
      %v346 = vld [vmem:[%s345] sm:$0xff]
      %v347 = vld [vmem:[%s345 + $0x8] sm:$0xff]
      %s348 = scalar_lea.vmem %s300, 32
      %v349 = vld [vmem:[%s348] sm:$0xff]
      %v350 = vld [vmem:[%s348 + $0x8] sm:$0xff]
      %s351 = scalar_lea.vmem %s300, 48
      %v352 = vld [vmem:[%s351] sm:$0xff]
      %v353 = vld [vmem:[%s351 + $0x8] sm:$0xff]
      %356 = vrot.lane.b32.xlu0 %v343, 127
      %v357 = vpop.permute.xlu0 %356
      %358 = vrot.lane.b32.xlu0 %v344, 127
      %v359 = vpop.permute.xlu0 %358
      %364 = vrot.lane.b32.xlu0 %v349, 127
      %v365 = vpop.permute.xlu0 %364
      %366 = vrot.lane.b32.xlu0 %v350, 127
      %v367 = vpop.permute.xlu0 %366
      %370 = vrot.lane.b32.xlu0 %v343, 118
      %v371 = vpop.permute.xlu0 %370
      %372 = vrot.lane.b32.xlu0 %v344, 118
      %v373 = vpop.permute.xlu0 %372
      %378 = vrot.lane.b32.xlu0 %v346, 118
      %v379 = vpop.permute.xlu0 %378
      %380 = vrot.lane.b32.xlu0 %v347, 118
      %v381 = vpop.permute.xlu0 %380
      %384 = vrot.lane.b32.xlu0 %v343, 117
      %v385 = vpop.permute.xlu0 %384
      %386 = vrot.lane.b32.xlu0 %v344, 117
      %v387 = vpop.permute.xlu0 %386
      %391 = vset.pattern.permute.xlu0 0
      %392 = vperm.xlu0 %391, %v315
      %v393 = vpop.permute.xlu0 %392
      %396 = vset.pattern.permute.xlu0 0
      %397 = vperm.xlu0 %396, %v316
      %v398 = vpop.permute.xlu0 %397
      %401 = vset.pattern.permute.xlu0 0
      %402 = vperm.xlu0 %401, %v317
      %v403 = vpop.permute.xlu0 %402
      %406 = vset.pattern.permute.xlu0 0
      %407 = vperm.xlu0 %406, %v318
      %v408 = vpop.permute.xlu0 %407
      %vm410 = vcmask 130048
      %v412 = vsel %vm410, %v308, 0
      %v415 = vsel %vm410, %v310, 0
      %v418 = vsel %vm410, %v312, 0
      %v421 = vsel %vm410, %v314, 0
      %423 = vmatprep.subr.mxu0 0.0
      %424 = vmatpush1.msra.mxu0 %v343
      %425 = vmatprep.subr.mxu0 0.0
      %426 = vmatpush1.msra.mxu0 %v344
      %427 = vmatprep.subr.mxu0 0.0
      %428 = vmatpush1.msra.mxu0 %v346
      %429 = vmatprep.subr.mxu0 0.0
      %430 = vmatpush1.msra.mxu0 %v347
      %431 = vmatprep.subr.mxu0 0.0
      %432 = vmatpush1.msra.mxu0 %v357
      %433 = vmatprep.subr.mxu0 0.0
      %434 = vmatpush1.msra.mxu0 %v359
      %435 = vmatprep.subr.mxu0 0.0
      %436 = vmatpush1.msra.mxu0 %v349
      %437 = vmatprep.subr.mxu0 0.0
      %438 = vmatpush1.msra.mxu0 %v350
      %439 = vmatprep.subr.mxu0 0.0
      %440 = vmatpush1.msra.mxu0 %v352
      %441 = vmatprep.subr.mxu0 0.0
      %442 = vmatpush1.msra.mxu0 %v353
      %443 = vmatprep.subr.mxu0 0.0
      %444 = vmatpush1.msra.mxu0 %v365
      %445 = vmatprep.subr.mxu0 0.0
      %446 = vmatpush1.msra.mxu0 %v367
      %447 = vmatprep.subr.mxu0 0.0
      %448 = vmatpush1.msra.mxu0 %v371
      %449 = vmatprep.subr.mxu0 0.0
      %450 = vmatpush1.msra.mxu0 %v373
      %451 = vmatprep.subr.mxu0 0.0
      %452 = vmatpush1.msra.mxu0 %v379
      %453 = vmatprep.subr.mxu0 0.0
      %454 = vmatpush1.msra.mxu0 %v381
      %455 = vmatprep.subr.mxu0 0.0
      %456 = vmatpush1.msra.mxu0 %v385
      %457 = vmatprep.subr.mxu0 0.0
      %458 = vmatpush1.msra.mxu0 %v387
      %459 = vmatprep.subr.mxu0 0.0
      %460 = vmatpush1.msra.mxu0 0.0
      %461 = vmatprep.subr.mxu0 0.0
      %462 = vmatpush1.msra.mxu0 0.0
      %463 = vmatprep.subr.mxu0 0.0
      %464 = vmatpush1.msra.mxu0 0.0
      %465 = vmatprep.subr.mxu0 0.0
      %466 = vmatpush1.msra.mxu0 0.0
      %467 = vmatprep.subr.mxu0 0.0
      %468 = vmatpush1.msra.mxu0 0.0
      %469 = vmatprep.subr.mxu0 0.0
      %470 = vmatpush1.msra.mxu0 0.0
      %471 = vmatprep.subr.mxu0 0.0
      %472 = vmatpush1.msra.mxu0 0.0
      %473 = vmatprep.subr.mxu0 0.0
      %474 = vmatpush1.msra.mxu0 0.0
      %475 = vmatprep.subr.mxu0 0.0
      %476 = vmatpush1.msra.mxu0 0.0
      %477 = vmatprep.subr.mxu0 0.0
      %478 = vmatpush1.msra.mxu0 0.0
      %479 = vmatprep.subr.mxu0 0.0
      %480 = vmatpush1.msra.mxu0 0.0
      %481 = vmatprep.subr.mxu0 0.0
      %482 = vmatpush1.msra.mxu0 0.0
      %483 = vmatprep.subr.mxu0 0.0
      %484 = vmatpush1.msra.mxu0 0.0
      %485 = vmatprep.subr.mxu0 0.0
      %486 = vmatpush1.msra.mxu0 0.0
      %487 = vmatprep.mubr.f32.mxu0 %v412
      %488 = vmatmul.mubr.f32.gmra.mrb[0].mxu0 %v307
      %v489 = vpop.f32.mrb[0].mxu0
      %v490 = vadd.f32 %v393, %v489
      %v491 = vpop.f32.mrb[0].mxu0
      %492 = vmatprep.mubr.f32.mxu0 %v415
      %493 = vmatmul.mubr.f32.gmra.mrb[0].mxu0 %v309
      %v494 = vpop.f32.mrb[0].mxu0
      %v495 = vadd.f32 %v398, %v494
      %v496 = vpop.f32.mrb[0].mxu0
      %497 = vmatprep.mubr.f32.mxu0 %v418
      %498 = vmatmul.mubr.f32.gmra.mrb[0].mxu0 %v311
      %v499 = vpop.f32.mrb[0].mxu0
      %v500 = vadd.f32 %v403, %v499
      %v501 = vpop.f32.mrb[0].mxu0
      %502 = vmatprep.mubr.f32.mxu0 %v421
      %503 = vmatmul.mubr.f32.gmra.mrb[0].mxu0 %v313
      %v504 = vpop.f32.mrb[0].mxu0
      %v505 = vadd.f32 %v408, %v504
      %v506 = vpop.f32.mrb[0].mxu0
      %507 = vdwg.mxu0
      %v508 = vmax.f32 %v490, 0.0
      %v509 = vmax.f32 %v495, 0.0
      %v510 = vmax.f32 %v500, 0.0
      %v511 = vmax.f32 %v505, 0.0
      %v513 = vlaneseq
      %v514 = vshrl.u32 %v513, 7
      %v515 = vsub.s32 0, %v514
      %v516 = vrot.slane %v306, %v515
      %v518 = vmul.f32 %v508, %v516
      %v519 = vmul.f32 %v509, %v516
      %v520 = vmul.f32 %v510, %v516
      %v521 = vmul.f32 %v511, %v516
      %526 = vrot.lane.b32.xlu0 %v518, 11
      %v527 = vpop.permute.xlu0 %526
      %528 = vrot.lane.b32.xlu0 %v519, 11
      %v529 = vpop.permute.xlu0 %528
      %530 = vrot.lane.b32.xlu0 %v520, 11
      %v531 = vpop.permute.xlu0 %530
      %532 = vrot.lane.b32.xlu0 %v521, 11
      %v533 = vpop.permute.xlu0 %532
      %vm538 = vcmask 89088
      %v539 = vsel %vm538, 0.0, %v527
      %v540 = vsel %vm538, 0.0, %v529
      %v541 = vsel %vm538, 0.0, %v531
      %v542 = vsel %vm538, 0.0, %v533
      %vm543 = vcmask 744448
      %v544 = vsel %vm543, %v539, 0.0
      %v545 = vsel %vm543, %v540, 0.0
      %v546 = vsel %vm543, %v541, 0.0
      %v547 = vsel %vm543, %v542, 0.0
      %552 = vrot.lane.b32.xlu0 %v544, 127
      %v553 = vpop.permute.xlu0 %552
      %554 = vrot.lane.b32.xlu0 %v545, 127
      %v555 = vpop.permute.xlu0 %554
      %556 = vrot.lane.b32.xlu0 %v546, 127
      %v557 = vpop.permute.xlu0 %556
      %558 = vrot.lane.b32.xlu0 %v547, 127
      %v559 = vpop.permute.xlu0 %558
      %564 = vrot.lane.b32.xlu0 %v544, 126
      %v565 = vpop.permute.xlu0 %564
      %566 = vrot.lane.b32.xlu0 %v545, 126
      %v567 = vpop.permute.xlu0 %566
      %568 = vrot.lane.b32.xlu0 %v546, 126
      %v569 = vpop.permute.xlu0 %568
      %570 = vrot.lane.b32.xlu0 %v547, 126
      %v571 = vpop.permute.xlu0 %570
      %576 = vrot.lane.b32.xlu0 %v544, 118
      %v577 = vpop.permute.xlu0 %576
      %578 = vrot.lane.b32.xlu0 %v545, 118
      %v579 = vpop.permute.xlu0 %578
      %580 = vrot.lane.b32.xlu0 %v546, 118
      %v581 = vpop.permute.xlu0 %580
      %582 = vrot.lane.b32.xlu0 %v547, 118
      %v583 = vpop.permute.xlu0 %582
      %588 = vrot.lane.b32.xlu0 %v544, 117
      %v589 = vpop.permute.xlu0 %588
      %590 = vrot.lane.b32.xlu0 %v545, 117
      %v591 = vpop.permute.xlu0 %590
      %592 = vrot.lane.b32.xlu0 %v546, 117
      %v593 = vpop.permute.xlu0 %592
      %594 = vrot.lane.b32.xlu0 %v547, 117
      %v595 = vpop.permute.xlu0 %594
      %600 = vrot.lane.b32.xlu0 %v544, 116
      %v601 = vpop.permute.xlu0 %600
      %602 = vrot.lane.b32.xlu0 %v545, 116
      %v603 = vpop.permute.xlu0 %602
      %604 = vrot.lane.b32.xlu0 %v546, 116
      %v605 = vpop.permute.xlu0 %604
      %606 = vrot.lane.b32.xlu0 %v547, 116
      %v607 = vpop.permute.xlu0 %606
      %612 = vrot.lane.b32.xlu0 %v544, 108
      %v613 = vpop.permute.xlu0 %612
      %614 = vrot.lane.b32.xlu0 %v545, 108
      %v615 = vpop.permute.xlu0 %614
      %616 = vrot.lane.b32.xlu0 %v546, 108
      %v617 = vpop.permute.xlu0 %616
      %618 = vrot.lane.b32.xlu0 %v547, 108
      %v619 = vpop.permute.xlu0 %618
      %624 = vrot.lane.b32.xlu0 %v544, 107
      %v625 = vpop.permute.xlu0 %624
      %626 = vrot.lane.b32.xlu0 %v545, 107
      %v627 = vpop.permute.xlu0 %626
      %628 = vrot.lane.b32.xlu0 %v546, 107
      %v629 = vpop.permute.xlu0 %628
      %630 = vrot.lane.b32.xlu0 %v547, 107
      %v631 = vpop.permute.xlu0 %630
      %636 = vrot.lane.b32.xlu0 %v544, 106
      %v637 = vpop.permute.xlu0 %636
      %638 = vrot.lane.b32.xlu0 %v545, 106
      %v639 = vpop.permute.xlu0 %638
      %640 = vrot.lane.b32.xlu0 %v546, 106
      %v641 = vpop.permute.xlu0 %640
      %642 = vrot.lane.b32.xlu0 %v547, 106
      %v643 = vpop.permute.xlu0 %642
      %649 = vset.pattern.permute.xlu0 0
      %650 = vperm.xlu0 %649, %v339
      %v651 = vpop.permute.xlu0 %650
      %654 = vset.pattern.permute.xlu0 0
      %655 = vperm.xlu0 %654, %v340
      %v656 = vpop.permute.xlu0 %655
      %659 = vset.pattern.permute.xlu0 0
      %660 = vperm.xlu0 %659, %v341
      %v661 = vpop.permute.xlu0 %660
      %664 = vset.pattern.permute.xlu0 0
      %665 = vperm.xlu0 %664, %v342
      %v666 = vpop.permute.xlu0 %665
      %vm668 = vcmask 261120
      %v670 = vsel %vm668, %v329, 0
      %v673 = vsel %vm668, %v332, 0
      %v676 = vsel %vm668, %v335, 0
      %v679 = vsel %vm668, %v338, 0
      %681 = vmatprep.subr.mxu0 0.0
      %682 = vmatpush1.msra.mxu0 %v544
      %683 = vmatprep.subr.mxu0 0.0
      %684 = vmatpush1.msra.mxu0 %v545
      %685 = vmatprep.subr.mxu0 0.0
      %686 = vmatpush1.msra.mxu0 %v546
      %687 = vmatprep.subr.mxu0 0.0
      %688 = vmatpush1.msra.mxu0 %v547
      %689 = vmatprep.subr.mxu0 0.0
      %690 = vmatpush1.msra.mxu0 %v553
      %691 = vmatprep.subr.mxu0 0.0
      %692 = vmatpush1.msra.mxu0 %v555
      %693 = vmatprep.subr.mxu0 0.0
      %694 = vmatpush1.msra.mxu0 %v557
      %695 = vmatprep.subr.mxu0 0.0
      %696 = vmatpush1.msra.mxu0 %v559
      %697 = vmatprep.subr.mxu0 0.0
      %698 = vmatpush1.msra.mxu0 %v565
      %699 = vmatprep.subr.mxu0 0.0
      %700 = vmatpush1.msra.mxu0 %v567
      %701 = vmatprep.subr.mxu0 0.0
      %702 = vmatpush1.msra.mxu0 %v569
      %703 = vmatprep.subr.mxu0 0.0
      %704 = vmatpush1.msra.mxu0 %v571
      %705 = vmatprep.subr.mxu0 0.0
      %706 = vmatpush1.msra.mxu0 %v577
      %707 = vmatprep.subr.mxu0 0.0
      %708 = vmatpush1.msra.mxu0 %v579
      %709 = vmatprep.subr.mxu0 0.0
      %710 = vmatpush1.msra.mxu0 %v581
      %711 = vmatprep.subr.mxu0 0.0
      %712 = vmatpush1.msra.mxu0 %v583
      %713 = vmatprep.subr.mxu0 0.0
      %714 = vmatpush1.msra.mxu0 %v589
      %715 = vmatprep.subr.mxu0 0.0
      %716 = vmatpush1.msra.mxu0 %v591
      %717 = vmatprep.subr.mxu0 0.0
      %718 = vmatpush1.msra.mxu0 %v593
      %719 = vmatprep.subr.mxu0 0.0
      %720 = vmatpush1.msra.mxu0 %v595
      %721 = vmatprep.subr.mxu0 0.0
      %722 = vmatpush1.msra.mxu0 %v601
      %723 = vmatprep.subr.mxu0 0.0
      %724 = vmatpush1.msra.mxu0 %v603
      %725 = vmatprep.subr.mxu0 0.0
      %726 = vmatpush1.msra.mxu0 %v605
      %727 = vmatprep.subr.mxu0 0.0
      %728 = vmatpush1.msra.mxu0 %v607
      %729 = vmatprep.subr.mxu0 0.0
      %730 = vmatpush1.msra.mxu0 %v613
      %731 = vmatprep.subr.mxu0 0.0
      %732 = vmatpush1.msra.mxu0 %v615
      %733 = vmatprep.subr.mxu0 0.0
      %734 = vmatpush1.msra.mxu0 %v617
      %735 = vmatprep.subr.mxu0 0.0
      %736 = vmatpush1.msra.mxu0 %v619
      %737 = vmatprep.subr.mxu0 0.0
      %738 = vmatpush1.msra.mxu0 %v625
      %739 = vmatprep.subr.mxu0 0.0
      %740 = vmatpush1.msra.mxu0 %v627
      %741 = vmatprep.subr.mxu0 0.0
      %742 = vmatpush1.msra.mxu0 %v629
      %743 = vmatprep.subr.mxu0 0.0
      %744 = vmatpush1.msra.mxu0 %v631
      %745 = vmatprep.mubr.f32.mxu0 %v328
      %746 = vmatmul.mubr.f32.gmra.mrb[0].mxu0 %v327
      %v747 = vpop.f32.mrb[0].mxu0
      %v748 = vadd.f32 %v651, %v747
      %v749 = vpop.f32.mrb[0].mxu0
      %750 = vmatprep.mubr.f32.mxu0 %v331
      %751 = vmatmul.mubr.f32.gmra.mrb[0].mxu0 %v330
      %v752 = vpop.f32.mrb[0].mxu0
      %v753 = vadd.f32 %v656, %v752
      %v754 = vpop.f32.mrb[0].mxu0
      %755 = vmatprep.mubr.f32.mxu0 %v334
      %756 = vmatmul.mubr.f32.gmra.mrb[0].mxu0 %v333
      %v757 = vpop.f32.mrb[0].mxu0
      %v758 = vadd.f32 %v661, %v757
      %v759 = vpop.f32.mrb[0].mxu0
      %760 = vmatprep.mubr.f32.mxu0 %v337
      %761 = vmatmul.mubr.f32.gmra.mrb[0].mxu0 %v336
      %v762 = vpop.f32.mrb[0].mxu0
      %v763 = vadd.f32 %v666, %v762
      %v764 = vpop.f32.mrb[0].mxu0
      %765 = vdwg.mxu0
      %766 = vmatprep.subr.mxu0 0.0
      %767 = vmatpush1.msra.mxu0 %v637
      %768 = vmatprep.subr.mxu0 0.0
      %769 = vmatpush1.msra.mxu0 %v639
      %770 = vmatprep.subr.mxu0 0.0
      %771 = vmatpush1.msra.mxu0 %v641
      %772 = vmatprep.subr.mxu0 0.0
      %773 = vmatpush1.msra.mxu0 %v643
      %774 = vmatprep.subr.mxu0 0.0
      %775 = vmatpush1.msra.mxu0 0.0
      %776 = vmatprep.subr.mxu0 0.0
      %777 = vmatpush1.msra.mxu0 0.0
      %778 = vmatprep.subr.mxu0 0.0
      %779 = vmatpush1.msra.mxu0 0.0
      %780 = vmatprep.subr.mxu0 0.0
      %781 = vmatpush1.msra.mxu0 0.0
      %782 = vmatprep.subr.mxu0 0.0
      %783 = vmatpush1.msra.mxu0 0.0
      %784 = vmatprep.subr.mxu0 0.0
      %785 = vmatpush1.msra.mxu0 0.0
      %786 = vmatprep.subr.mxu0 0.0
      %787 = vmatpush1.msra.mxu0 0.0
      %788 = vmatprep.subr.mxu0 0.0
      %789 = vmatpush1.msra.mxu0 0.0
      %790 = vmatprep.subr.mxu0 0.0
      %791 = vmatpush1.msra.mxu0 0.0
      %792 = vmatprep.subr.mxu0 0.0
      %793 = vmatpush1.msra.mxu0 0.0
      %794 = vmatprep.subr.mxu0 0.0
      %795 = vmatpush1.msra.mxu0 0.0
      %796 = vmatprep.subr.mxu0 0.0
      %797 = vmatpush1.msra.mxu0 0.0
      %798 = vmatprep.subr.mxu0 0.0
      %799 = vmatpush1.msra.mxu0 0.0
      %800 = vmatprep.subr.mxu0 0.0
      %801 = vmatpush1.msra.mxu0 0.0
      %802 = vmatprep.subr.mxu0 0.0
      %803 = vmatpush1.msra.mxu0 0.0
      %804 = vmatprep.subr.mxu0 0.0
      %805 = vmatpush1.msra.mxu0 0.0
      %806 = vmatprep.subr.mxu0 0.0
      %807 = vmatpush1.msra.mxu0 0.0
      %808 = vmatprep.subr.mxu0 0.0
      %809 = vmatpush1.msra.mxu0 0.0
      %810 = vmatprep.subr.mxu0 0.0
      %811 = vmatpush1.msra.mxu0 0.0
      %812 = vmatprep.subr.mxu0 0.0
      %813 = vmatpush1.msra.mxu0 0.0
      %814 = vmatprep.subr.mxu0 0.0
      %815 = vmatpush1.msra.mxu0 0.0
      %816 = vmatprep.subr.mxu0 0.0
      %817 = vmatpush1.msra.mxu0 0.0
      %818 = vmatprep.subr.mxu0 0.0
      %819 = vmatpush1.msra.mxu0 0.0
      %820 = vmatprep.subr.mxu0 0.0
      %821 = vmatpush1.msra.mxu0 0.0
      %822 = vmatprep.subr.mxu0 0.0
      %823 = vmatpush1.msra.mxu0 0.0
      %824 = vmatprep.subr.mxu0 0.0
      %825 = vmatpush1.msra.mxu0 0.0
      %826 = vmatprep.subr.mxu0 0.0
      %827 = vmatpush1.msra.mxu0 0.0
      %828 = vmatprep.subr.mxu0 0.0
      %829 = vmatpush1.msra.mxu0 0.0
      %830 = vmatprep.mubr.f32.mxu0 0.0
      %831 = vmatmul.mubr.f32.gmra.mrb[0].mxu0 %v670
      %v832 = vpop.f32.mrb[0].mxu0
      %v833 = vadd.f32 %v748, %v832
      %v834 = vpop.f32.mrb[0].mxu0
      %835 = vmatprep.mubr.f32.mxu0 0.0
      %836 = vmatmul.mubr.f32.gmra.mrb[0].mxu0 %v673
      %v837 = vpop.f32.mrb[0].mxu0
      %v838 = vadd.f32 %v753, %v837
      %v839 = vpop.f32.mrb[0].mxu0
      %840 = vmatprep.mubr.f32.mxu0 0.0
      %841 = vmatmul.mubr.f32.gmra.mrb[0].mxu0 %v676
      %v842 = vpop.f32.mrb[0].mxu0
      %v843 = vadd.f32 %v758, %v842
      %v844 = vpop.f32.mrb[0].mxu0
      %845 = vmatprep.mubr.f32.mxu0 0.0
      %846 = vmatmul.mubr.f32.gmra.mrb[0].mxu0 %v679
      %v847 = vpop.f32.mrb[0].mxu0
      %v848 = vadd.f32 %v763, %v847
      %v849 = vpop.f32.mrb[0].mxu0
      %850 = vdwg.mxu0
      %852 = vset.pattern.permute.xlu0 0
      %853 = vperm.xlu0 %852, %v323
      %v854 = vpop.permute.xlu0 %853
      %857 = vset.pattern.permute.xlu0 0
      %858 = vperm.xlu0 %857, %v324
      %v859 = vpop.permute.xlu0 %858
      %862 = vset.pattern.permute.xlu0 0
      %863 = vperm.xlu0 %862, %v325
      %v864 = vpop.permute.xlu0 %863
      %867 = vset.pattern.permute.xlu0 0
      %868 = vperm.xlu0 %867, %v326
      %v869 = vpop.permute.xlu0 %868
      %v872 = vsel %vm410, %v319, 0
      %v875 = vsel %vm410, %v320, 0
      %v878 = vsel %vm410, %v321, 0
      %v881 = vsel %vm410, %v322, 0
      %883 = vmatprep.subr.mxu0 0.0
      %884 = vmatpush1.msra.mxu0 %v352
      %885 = vmatprep.subr.mxu0 0.0
      %886 = vmatpush1.msra.mxu0 %v353
      %887 = vmatprep.subr.mxu0 0.0
      %888 = vmatpush1.msra.mxu0 0.0
      %889 = vmatprep.subr.mxu0 0.0
      %890 = vmatpush1.msra.mxu0 0.0
      %891 = vmatprep.subr.mxu0 0.0
      %892 = vmatpush1.msra.mxu0 0.0
      %893 = vmatprep.subr.mxu0 0.0
      %894 = vmatpush1.msra.mxu0 0.0
      %895 = vmatprep.subr.mxu0 0.0
      %896 = vmatpush1.msra.mxu0 0.0
      %897 = vmatprep.subr.mxu0 0.0
      %898 = vmatpush1.msra.mxu0 0.0
      %899 = vmatprep.subr.mxu0 0.0
      %900 = vmatpush1.msra.mxu0 0.0
      %901 = vmatprep.subr.mxu0 0.0
      %902 = vmatpush1.msra.mxu0 0.0
      %903 = vmatprep.subr.mxu0 0.0
      %904 = vmatpush1.msra.mxu0 0.0
      %905 = vmatprep.subr.mxu0 0.0
      %906 = vmatpush1.msra.mxu0 0.0
      %907 = vmatprep.subr.mxu0 0.0
      %908 = vmatpush1.msra.mxu0 0.0
      %909 = vmatprep.subr.mxu0 0.0
      %910 = vmatpush1.msra.mxu0 0.0
      %911 = vmatprep.subr.mxu0 0.0
      %912 = vmatpush1.msra.mxu0 0.0
      %913 = vmatprep.subr.mxu0 0.0
      %914 = vmatpush1.msra.mxu0 0.0
      %915 = vmatprep.subr.mxu0 0.0
      %916 = vmatpush1.msra.mxu0 0.0
      %917 = vmatprep.subr.mxu0 0.0
      %918 = vmatpush1.msra.mxu0 0.0
      %919 = vmatprep.subr.mxu0 0.0
      %920 = vmatpush1.msra.mxu0 0.0
      %921 = vmatprep.subr.mxu0 0.0
      %922 = vmatpush1.msra.mxu0 0.0
      %923 = vmatprep.subr.mxu0 0.0
      %924 = vmatpush1.msra.mxu0 0.0
      %925 = vmatprep.subr.mxu0 0.0
      %926 = vmatpush1.msra.mxu0 0.0
      %927 = vmatprep.subr.mxu0 0.0
      %928 = vmatpush1.msra.mxu0 0.0
      %929 = vmatprep.subr.mxu0 0.0
      %930 = vmatpush1.msra.mxu0 0.0
      %931 = vmatprep.subr.mxu0 0.0
      %932 = vmatpush1.msra.mxu0 0.0
      %933 = vmatprep.subr.mxu0 0.0
      %934 = vmatpush1.msra.mxu0 0.0
      %935 = vmatprep.subr.mxu0 0.0
      %936 = vmatpush1.msra.mxu0 0.0
      %937 = vmatprep.subr.mxu0 0.0
      %938 = vmatpush1.msra.mxu0 0.0
      %939 = vmatprep.subr.mxu0 0.0
      %940 = vmatpush1.msra.mxu0 0.0
      %941 = vmatprep.subr.mxu0 0.0
      %942 = vmatpush1.msra.mxu0 0.0
      %943 = vmatprep.subr.mxu0 0.0
      %944 = vmatpush1.msra.mxu0 0.0
      %945 = vmatprep.subr.mxu0 0.0
      %946 = vmatpush1.msra.mxu0 0.0
      %947 = vmatprep.mubr.f32.mxu0 0.0
      %948 = vmatmul.mubr.f32.gmra.mrb[0].mxu0 %v872
      %v949 = vpop.f32.mrb[0].mxu0
      %v950 = vadd.f32 %v854, %v949
      %v951 = vpop.f32.mrb[0].mxu0
      %952 = vmatprep.mubr.f32.mxu0 0.0
      %953 = vmatmul.mubr.f32.gmra.mrb[0].mxu0 %v875
      %v954 = vpop.f32.mrb[0].mxu0
      %v955 = vadd.f32 %v859, %v954
      %v956 = vpop.f32.mrb[0].mxu0
      %957 = vmatprep.mubr.f32.mxu0 0.0
      %958 = vmatmul.mubr.f32.gmra.mrb[0].mxu0 %v878
      %v959 = vpop.f32.mrb[0].mxu0
      %v960 = vadd.f32 %v864, %v959
      %v961 = vpop.f32.mrb[0].mxu0
      %962 = vmatprep.mubr.f32.mxu0 0.0
      %963 = vmatmul.mubr.f32.gmra.mrb[0].mxu0 %v881
      %v964 = vpop.f32.mrb[0].mxu0
      %v965 = vadd.f32 %v869, %v964
      %v966 = vpop.f32.mrb[0].mxu0
      %967 = vdwg.mxu0
      %v968 = vadd.f32 %v833, %v950
      %v969 = vadd.f32 %v838, %v955
      %v970 = vadd.f32 %v843, %v960
      %v971 = vadd.f32 %v848, %v965
      %v972 = vmax.f32 %v968, 0.0
      %v973 = vmax.f32 %v969, 0.0
      %v974 = vmax.f32 %v970, 0.0
      %v975 = vmax.f32 %v971, 0.0
      %v976 = vmul.f32 %v972, %v516
      %v977 = vmul.f32 %v973, %v516
      %v978 = vmul.f32 %v974, %v516
      %v979 = vmul.f32 %v975, %v516
      %984 = vrot.lane.b32.xlu0 %v976, 11
      %v985 = vpop.permute.xlu0 %984
      %986 = vrot.lane.b32.xlu0 %v977, 11
      %v987 = vpop.permute.xlu0 %986
      %988 = vrot.lane.b32.xlu0 %v978, 11
      %v989 = vpop.permute.xlu0 %988
      %990 = vrot.lane.b32.xlu0 %v979, 11
      %v991 = vpop.permute.xlu0 %990
      %v996 = vsel %vm538, 0.0, %v985
      %v997 = vsel %vm538, 0.0, %v987
      %v998 = vsel %vm538, 0.0, %v989
      %v999 = vsel %vm538, 0.0, %v991
      %v1000 = vsel %vm543, %v996, 0.0
      %v1001 = vsel %vm543, %v997, 0.0
      %v1002 = vsel %vm543, %v998, 0.0
      %v1003 = vsel %vm543, %v999, 0.0
      %1004 = vst [vmem:[%s305] sm:$0xff] %v1000
      %1005 = vst [vmem:[%s305 + $0x8] sm:$0xff] %v1001
      %1006 = vst [vmem:[%s305 + $0x10] sm:$0xff] %v1002
      %1007 = vst [vmem:[%s305 + $0x18] sm:$0xff] %v1003
      %p1008 = scmp.lt.s32.totalorder %s19, 1
      %s1009 = scalar_select %p1008, %s19, 1
      %s1010 = smul.addr %s1009, 4
      %s1011 = smul.addr %s1010, 8
      %s1012 = scalar_lea.vmem %s8, %s1011
      // Predicated region
      $region53: #{resnet_vib_forward.4} parent=51 // pred_check
        %p1013 = pneg %p210
      $region54: #{resnet_vib_forward.4} parent=51 // pred_check_branch
        %1015 = sbr.rel (%p1013) target = $region56
      $region55: #{resnet_vib_forward.4} parent=51 // pred_region
        _
      $region56: #{resnet_vib_forward.4} parent=51 // pred_fallthru
        _
    $region52: #{resnet_vib_forward.4} parent=5 // pred_fallthru
      _
    %p1016 = scmp.le.s32.totalorder 2, %s14
    // Predicated region
    $region57: #{resnet_vib_forward.4} parent=5 // pred_check
      %p1017 = pneg %p1016
    $region58: #{resnet_vib_forward.4} parent=5 // pred_check_branch
      %1019 = sbr.rel (%p1017) target = $region60
    $region59: #{resnet_vib_forward.4} parent=5 // pred_region
      %s1020 = ssub.s32 %s14, 2
      // Predicated region
      $region61: #{resnet_vib_forward.4} parent=59 // pred_check
        %p1021 = pneg %p216
      $region62: #{resnet_vib_forward.4} parent=59 // pred_check_branch
        %1023 = sbr.rel (%p1021) target = $region64
      $region63: #{resnet_vib_forward.4} parent=59 // pred_region
        %p1024 = scmp.lt.s32.totalorder %s20, 1
        %s1025 = scalar_select %p1024, %s20, 1
        %s1026 = smul.addr %s1025, 4
        %s1027 = smul.addr %s1026, 8
        %s1028 = scalar_lea.vmem %s8, %s1027
      $region64: #{resnet_vib_forward.4} parent=59 // pred_fallthru
        _
    $region60: #{resnet_vib_forward.4} parent=5 // pred_fallthru
      _
  $region6: #{resnet_vib_forward.4} parent=0 // loop_footer
    %s18 = sadd.s32 1, %s14
  $region7: #{resnet_vib_forward.4} parent=0 // loop_footer_branch
    %13 = sbr.rel target = $region3
  $region8: #{resnet_vib_forward.4} parent=0 // loop_exit
    _

// kernel: resnet_vib_forward.5
$region0: #{resnet_vib_forward.5}
  #allocation0 [shape = 'u32[]', space=smem, size = 0x4, offset = 0x4, fixed_abs, tag = 'smem constant byte address 0x4 - core index']
  #allocation1 [shape = 'u32[144,128]{1,0:T(1,128)}', space=vmem, size = 0x12000, scoped, tag = 'internal scratch']
  %s0 = inlined_call_operand.vmem [shape: f32[2,4,32,128], index: 0, kind: input, shape index: {}]
  %s1 = inlined_call_operand.vmem [shape: f32[1,24], index: 1, kind: input, shape index: {}]
  %s2 = inlined_call_operand.vmem [shape: f32[64,288], index: 2, kind: input, shape index: {}]
  %s3 = inlined_call_operand.vmem [shape: f32[64,1], index: 3, kind: input, shape index: {}]
  %s4 = inlined_call_operand.vmem [shape: f32[64,32], index: 4, kind: input, shape index: {}]
  %s5 = inlined_call_operand.vmem [shape: f32[64,1], index: 5, kind: input, shape index: {}]
  %s6 = inlined_call_operand.vmem [shape: f32[64,576], index: 6, kind: input, shape index: {}]
  %s7 = inlined_call_operand.vmem [shape: f32[64,1], index: 7, kind: input, shape index: {}]
  %s8 = inlined_call_operand.vmem [shape: f32[128,64], index: 8, kind: input, shape index: {}]
  %s9 = inlined_call_operand.vmem [shape: f32[128,1], index: 9, kind: input, shape index: {}]
  %s10 = inlined_call_operand.vmem [shape: f32[16,64], index: 10, kind: input, shape index: {}]
  %s11 = inlined_call_operand.vmem [shape: f32[16,1], index: 11, kind: input, shape index: {}]
  %s12 = inlined_call_operand.vmem [shape: f32[2,64,1], index: 12, kind: input, shape index: {}]
  %s13 = inlined_call_operand.vmem [shape: f32[2,128,1], index: 13, kind: output, shape index: {0}]
  %s14 = inlined_call_operand.vmem [shape: f32[2,16,1], index: 14, kind: output, shape index: {1}]
  %15 = xla_tuple %s13, %s14
  %s16 = sld [smem:[#allocation0]]
  $region93: #{resnet_vib_forward.5} parent=0
    _
  %s18 = ssub.s32 1, %s16
  %s19 = scalar_select 0, %s18, %s16
  loop: start=0, step=1, limit=4
  $region2: #{resnet_vib_forward.5} parent=0 // loop_pre_header
    _
  $region3: #{resnet_vib_forward.5} parent=0 // loop_header
    %s21 = sphi 0, %s25
    %p22 = scmp.ge.s32.totalorder %s21, 4
    %s31 = sphi 0, %s33
    %s34 = sphi 0, %s31
    %s35 = sphi 0, %s34
    %s51 = sphi 0, %s35
    %s55 = sphi 0, %s55
    %s57 = sphi 0, %s55
    %s58 = sphi 0, %s57
    %s72 = sphi 0, %s58
    %s76 = sphi 0, %s76
    %s78 = sphi 0, %s76
    %s79 = sphi 0, %s78
    %s93 = sphi 0, %s79
    %s97 = sphi 0, %s97
    %s99 = sphi 0, %s97
    %s100 = sphi 0, %s99
    %s114 = sphi 0, %s100
    %s118 = sphi 0, %s118
    %s120 = sphi 0, %s118
    %s121 = sphi 0, %s120
    %s135 = sphi 0, %s121
    %s139 = sphi 0, %s139
    %s141 = sphi 0, %s139
    %s142 = sphi 0, %s141
    %s156 = sphi 0, %s142
    %s160 = sphi 0, %s160
    %s162 = sphi 0, %s160
    %s163 = sphi 0, %s162
    %s177 = sphi 0, %s163
    %s181 = sphi 0, %s181
    %s183 = sphi 0, %s181
    %s184 = sphi 0, %s183
    %s198 = sphi 0, %s184
    %s202 = sphi 0, %s202
    %s204 = sphi 0, %s202
    %s205 = sphi 0, %s204
    %s219 = sphi 0, %s205
    %s223 = sphi 0, %s223
    %s225 = sphi 0, %s223
    %s226 = sphi 0, %s225
    %s240 = sphi 0, %s226
    %s244 = sphi 0, %s244
    %s246 = sphi 0, %s244
    %s247 = sphi 0, %s246
    %s261 = sphi 0, %s247
    %s265 = sphi 0, %s265
    %s267 = sphi 0, %s265
    %s268 = sphi 0, %s267
    %s282 = sphi 0, %s268
    %s288 = sphi 0, %s290
    %s291 = sphi 0, %s288
    %s292 = sphi 0, %s291
    %s308 = sphi 0, %s292
    %s314 = sphi 0, %s316
    %s317 = sphi 0, %s314
    %s318 = sphi 0, %s317
    %s334 = sphi 0, %s318
    %s340 = sphi 0, %s342
    %s343 = sphi 0, %s340
    %s344 = sphi 0, %s343
    %s360 = sphi 0, %s344
  $region4: #{resnet_vib_forward.5} parent=0 // loop_header_branch
    %24 = sbr.rel (%p22) target = $region8
  $region5: #{resnet_vib_forward.5} parent=0 // loop_body
    %s26 = ssub.s32 %s21, 1
    %s27 = ssub.s32 %s21, 2
    %s28 = sadd.s32 %s21, 1
    %s29 = ssub.s32 %s21, %s28
    %p30 = scmp.eq.s32.totalorder %s29, 0
    %s32 = sadd.s32 %s31, 1
    %s33 = scalar_select %p30, %s31, %s32
    %p36 = pneg %p30
    %p37 = scmp.eq.s32.totalorder %s21, 1
    %p38 = por %p36, %p37
    %p39 = scmp.ne.s32.totalorder %s31, %s34
    %p40 = scmp.eq.s32.totalorder %s21, 0
    %p41 = por %p39, %p40
    %p42 = scmp.ne.s32.totalorder %s31, %s34
    %p43 = scmp.eq.s32.totalorder %s26, 1
    %p44 = por %p42, %p43
    %p45 = scmp.ne.s32.totalorder %s34, %s35
    %p46 = scmp.eq.s32.totalorder %s26, 0
    %p47 = por %p45, %p46
    %p48 = scmp.ne.s32.totalorder %s34, %s35
    %p49 = scmp.eq.s32.totalorder %s27, 1
    %p50 = por %p48, %p49
    %p52 = scmp.ne.s32.totalorder %s35, %s51
    %p53 = scmp.eq.s32.totalorder %s27, 0
    %p54 = por %p52, %p53
    %s56 = sadd.s32 %s55, 1
    %p59 = scmp.eq.s32.totalorder %s21, 1
    %p60 = scmp.ne.s32.totalorder %s55, %s57
    %p61 = scmp.eq.s32.totalorder %s21, 0
    %p62 = por %p60, %p61
    %p63 = scmp.ne.s32.totalorder %s55, %s57
    %p64 = scmp.eq.s32.totalorder %s26, 1
    %p65 = por %p63, %p64
    %p66 = scmp.ne.s32.totalorder %s57, %s58
    %p67 = scmp.eq.s32.totalorder %s26, 0
    %p68 = por %p66, %p67
    %p69 = scmp.ne.s32.totalorder %s57, %s58
    %p70 = scmp.eq.s32.totalorder %s27, 1
    %p71 = por %p69, %p70
    %p73 = scmp.ne.s32.totalorder %s58, %s72
    %p74 = scmp.eq.s32.totalorder %s27, 0
    %p75 = por %p73, %p74
    %s77 = sadd.s32 %s76, 1
    %p80 = scmp.eq.s32.totalorder %s21, 1
    %p81 = scmp.ne.s32.totalorder %s76, %s78
    %p82 = scmp.eq.s32.totalorder %s21, 0
    %p83 = por %p81, %p82
    %p84 = scmp.ne.s32.totalorder %s76, %s78
    %p85 = scmp.eq.s32.totalorder %s26, 1
    %p86 = por %p84, %p85
    %p87 = scmp.ne.s32.totalorder %s78, %s79
    %p88 = scmp.eq.s32.totalorder %s26, 0
    %p89 = por %p87, %p88
    %p90 = scmp.ne.s32.totalorder %s78, %s79
    %p91 = scmp.eq.s32.totalorder %s27, 1
    %p92 = por %p90, %p91
    %p94 = scmp.ne.s32.totalorder %s79, %s93
    %p95 = scmp.eq.s32.totalorder %s27, 0
    %p96 = por %p94, %p95
    %s98 = sadd.s32 %s97, 1
    %p101 = scmp.eq.s32.totalorder %s21, 1
    %p102 = scmp.ne.s32.totalorder %s97, %s99
    %p103 = scmp.eq.s32.totalorder %s21, 0
    %p104 = por %p102, %p103
    %p105 = scmp.ne.s32.totalorder %s97, %s99
    %p106 = scmp.eq.s32.totalorder %s26, 1
    %p107 = por %p105, %p106
    %p108 = scmp.ne.s32.totalorder %s99, %s100
    %p109 = scmp.eq.s32.totalorder %s26, 0
    %p110 = por %p108, %p109
    %p111 = scmp.ne.s32.totalorder %s99, %s100
    %p112 = scmp.eq.s32.totalorder %s27, 1
    %p113 = por %p111, %p112
    %p115 = scmp.ne.s32.totalorder %s100, %s114
    %p116 = scmp.eq.s32.totalorder %s27, 0
    %p117 = por %p115, %p116
    %s119 = sadd.s32 %s118, 1
    %p122 = scmp.eq.s32.totalorder %s21, 1
    %p123 = scmp.ne.s32.totalorder %s118, %s120
    %p124 = scmp.eq.s32.totalorder %s21, 0
    %p125 = por %p123, %p124
    %p126 = scmp.ne.s32.totalorder %s118, %s120
    %p127 = scmp.eq.s32.totalorder %s26, 1
    %p128 = por %p126, %p127
    %p129 = scmp.ne.s32.totalorder %s120, %s121
    %p130 = scmp.eq.s32.totalorder %s26, 0
    %p131 = por %p129, %p130
    %p132 = scmp.ne.s32.totalorder %s120, %s121
    %p133 = scmp.eq.s32.totalorder %s27, 1
    %p134 = por %p132, %p133
    %p136 = scmp.ne.s32.totalorder %s121, %s135
    %p137 = scmp.eq.s32.totalorder %s27, 0
    %p138 = por %p136, %p137
    %s140 = sadd.s32 %s139, 1
    %p143 = scmp.eq.s32.totalorder %s21, 1
    %p144 = scmp.ne.s32.totalorder %s139, %s141
    %p145 = scmp.eq.s32.totalorder %s21, 0
    %p146 = por %p144, %p145
    %p147 = scmp.ne.s32.totalorder %s139, %s141
    %p148 = scmp.eq.s32.totalorder %s26, 1
    %p149 = por %p147, %p148
    %p150 = scmp.ne.s32.totalorder %s141, %s142
    %p151 = scmp.eq.s32.totalorder %s26, 0
    %p152 = por %p150, %p151
    %p153 = scmp.ne.s32.totalorder %s141, %s142
    %p154 = scmp.eq.s32.totalorder %s27, 1
    %p155 = por %p153, %p154
    %p157 = scmp.ne.s32.totalorder %s142, %s156
    %p158 = scmp.eq.s32.totalorder %s27, 0
    %p159 = por %p157, %p158
    %s161 = sadd.s32 %s160, 1
    %p164 = scmp.eq.s32.totalorder %s21, 1
    %p165 = scmp.ne.s32.totalorder %s160, %s162
    %p166 = scmp.eq.s32.totalorder %s21, 0
    %p167 = por %p165, %p166
    %p168 = scmp.ne.s32.totalorder %s160, %s162
    %p169 = scmp.eq.s32.totalorder %s26, 1
    %p170 = por %p168, %p169
    %p171 = scmp.ne.s32.totalorder %s162, %s163
    %p172 = scmp.eq.s32.totalorder %s26, 0
    %p173 = por %p171, %p172
    %p174 = scmp.ne.s32.totalorder %s162, %s163
    %p175 = scmp.eq.s32.totalorder %s27, 1
    %p176 = por %p174, %p175
    %p178 = scmp.ne.s32.totalorder %s163, %s177
    %p179 = scmp.eq.s32.totalorder %s27, 0
    %p180 = por %p178, %p179
    %s182 = sadd.s32 %s181, 1
    %p185 = scmp.eq.s32.totalorder %s21, 1
    %p186 = scmp.ne.s32.totalorder %s181, %s183
    %p187 = scmp.eq.s32.totalorder %s21, 0
    %p188 = por %p186, %p187
    %p189 = scmp.ne.s32.totalorder %s181, %s183
    %p190 = scmp.eq.s32.totalorder %s26, 1
    %p191 = por %p189, %p190
    %p192 = scmp.ne.s32.totalorder %s183, %s184
    %p193 = scmp.eq.s32.totalorder %s26, 0
    %p194 = por %p192, %p193
    %p195 = scmp.ne.s32.totalorder %s183, %s184
    %p196 = scmp.eq.s32.totalorder %s27, 1
    %p197 = por %p195, %p196
    %p199 = scmp.ne.s32.totalorder %s184, %s198
    %p200 = scmp.eq.s32.totalorder %s27, 0
    %p201 = por %p199, %p200
    %s203 = sadd.s32 %s202, 1
    %p206 = scmp.eq.s32.totalorder %s21, 1
    %p207 = scmp.ne.s32.totalorder %s202, %s204
    %p208 = scmp.eq.s32.totalorder %s21, 0
    %p209 = por %p207, %p208
    %p210 = scmp.ne.s32.totalorder %s202, %s204
    %p211 = scmp.eq.s32.totalorder %s26, 1
    %p212 = por %p210, %p211
    %p213 = scmp.ne.s32.totalorder %s204, %s205
    %p214 = scmp.eq.s32.totalorder %s26, 0
    %p215 = por %p213, %p214
    %p216 = scmp.ne.s32.totalorder %s204, %s205
    %p217 = scmp.eq.s32.totalorder %s27, 1
    %p218 = por %p216, %p217
    %p220 = scmp.ne.s32.totalorder %s205, %s219
    %p221 = scmp.eq.s32.totalorder %s27, 0
    %p222 = por %p220, %p221
    %s224 = sadd.s32 %s223, 1
    %p227 = scmp.eq.s32.totalorder %s21, 1
    %p228 = scmp.ne.s32.totalorder %s223, %s225
    %p229 = scmp.eq.s32.totalorder %s21, 0
    %p230 = por %p228, %p229
    %p231 = scmp.ne.s32.totalorder %s223, %s225
    %p232 = scmp.eq.s32.totalorder %s26, 1
    %p233 = por %p231, %p232
    %p234 = scmp.ne.s32.totalorder %s225, %s226
    %p235 = scmp.eq.s32.totalorder %s26, 0
    %p236 = por %p234, %p235
    %p237 = scmp.ne.s32.totalorder %s225, %s226
    %p238 = scmp.eq.s32.totalorder %s27, 1
    %p239 = por %p237, %p238
    %p241 = scmp.ne.s32.totalorder %s226, %s240
    %p242 = scmp.eq.s32.totalorder %s27, 0
    %p243 = por %p241, %p242
    %s245 = sadd.s32 %s244, 1
    %p248 = scmp.eq.s32.totalorder %s21, 1
    %p249 = scmp.ne.s32.totalorder %s244, %s246
    %p250 = scmp.eq.s32.totalorder %s21, 0
    %p251 = por %p249, %p250
    %p252 = scmp.ne.s32.totalorder %s244, %s246
    %p253 = scmp.eq.s32.totalorder %s26, 1
    %p254 = por %p252, %p253
    %p255 = scmp.ne.s32.totalorder %s246, %s247
    %p256 = scmp.eq.s32.totalorder %s26, 0
    %p257 = por %p255, %p256
    %p258 = scmp.ne.s32.totalorder %s246, %s247
    %p259 = scmp.eq.s32.totalorder %s27, 1
    %p260 = por %p258, %p259
    %p262 = scmp.ne.s32.totalorder %s247, %s261
    %p263 = scmp.eq.s32.totalorder %s27, 0
    %p264 = por %p262, %p263
    %s266 = sadd.s32 %s265, 1
    %p269 = scmp.eq.s32.totalorder %s21, 1
    %p270 = scmp.ne.s32.totalorder %s265, %s267
    %p271 = scmp.eq.s32.totalorder %s21, 0
    %p272 = por %p270, %p271
    %p273 = scmp.ne.s32.totalorder %s265, %s267
    %p274 = scmp.eq.s32.totalorder %s26, 1
    %p275 = por %p273, %p274
    %p276 = scmp.ne.s32.totalorder %s267, %s268
    %p277 = scmp.eq.s32.totalorder %s26, 0
    %p278 = por %p276, %p277
    %p279 = scmp.ne.s32.totalorder %s267, %s268
    %p280 = scmp.eq.s32.totalorder %s27, 1
    %p281 = por %p279, %p280
    %p283 = scmp.ne.s32.totalorder %s268, %s282
    %p284 = scmp.eq.s32.totalorder %s27, 0
    %p285 = por %p283, %p284
    %s286 = ssub.s32 %s21, %s28
    %p287 = scmp.eq.s32.totalorder %s286, 0
    %s289 = sadd.s32 %s288, 1
    %s290 = scalar_select %p287, %s288, %s289
    %p293 = pneg %p287
    %p294 = scmp.eq.s32.totalorder %s21, 1
    %p295 = por %p293, %p294
    %p296 = scmp.ne.s32.totalorder %s288, %s291
    %p297 = scmp.eq.s32.totalorder %s21, 0
    %p298 = por %p296, %p297
    %p299 = scmp.ne.s32.totalorder %s288, %s291
    %p300 = scmp.eq.s32.totalorder %s26, 1
    %p301 = por %p299, %p300
    %p302 = scmp.ne.s32.totalorder %s291, %s292
    %p303 = scmp.eq.s32.totalorder %s26, 0
    %p304 = por %p302, %p303
    %p305 = scmp.ne.s32.totalorder %s291, %s292
    %p306 = scmp.eq.s32.totalorder %s27, 1
    %p307 = por %p305, %p306
    %p309 = scmp.ne.s32.totalorder %s292, %s308
    %p310 = scmp.eq.s32.totalorder %s27, 0
    %p311 = por %p309, %p310
    %s312 = ssub.s32 %s21, %s28
    %p313 = scmp.eq.s32.totalorder %s312, 0
    %s315 = sadd.s32 %s314, 1
    %s316 = scalar_select %p313, %s314, %s315
    %p319 = pneg %p313
    %p320 = scmp.eq.s32.totalorder %s21, 1
    %p321 = por %p319, %p320
    %p322 = scmp.ne.s32.totalorder %s314, %s317
    %p323 = scmp.eq.s32.totalorder %s21, 0
    %p324 = por %p322, %p323
    %p325 = scmp.ne.s32.totalorder %s314, %s317
    %p326 = scmp.eq.s32.totalorder %s26, 1
    %p327 = por %p325, %p326
    %p328 = scmp.ne.s32.totalorder %s317, %s318
    %p329 = scmp.eq.s32.totalorder %s26, 0
    %p330 = por %p328, %p329
    %p331 = scmp.ne.s32.totalorder %s317, %s318
    %p332 = scmp.eq.s32.totalorder %s27, 1
    %p333 = por %p331, %p332
    %p335 = scmp.ne.s32.totalorder %s318, %s334
    %p336 = scmp.eq.s32.totalorder %s27, 0
    %p337 = por %p335, %p336
    %s338 = ssub.s32 %s21, %s28
    %p339 = scmp.eq.s32.totalorder %s338, 0
    %s341 = sadd.s32 %s340, 1
    %s342 = scalar_select %p339, %s340, %s341
    %p345 = pneg %p339
    %p346 = scmp.eq.s32.totalorder %s21, 1
    %p347 = por %p345, %p346
    %p348 = scmp.ne.s32.totalorder %s340, %s343
    %p349 = scmp.eq.s32.totalorder %s21, 0
    %p350 = por %p348, %p349
    %p351 = scmp.ne.s32.totalorder %s340, %s343
    %p352 = scmp.eq.s32.totalorder %s26, 1
    %p353 = por %p351, %p352
    %p354 = scmp.ne.s32.totalorder %s343, %s344
    %p355 = scmp.eq.s32.totalorder %s26, 0
    %p356 = por %p354, %p355
    %p357 = scmp.ne.s32.totalorder %s343, %s344
    %p358 = scmp.eq.s32.totalorder %s27, 1
    %p359 = por %p357, %p358
    %p361 = scmp.ne.s32.totalorder %s344, %s360
    %p362 = scmp.eq.s32.totalorder %s27, 0
    %p363 = por %p361, %p362
    %p364 = scmp.le.s32.totalorder 1, %s21
    %p365 = scmp.lt.s32.totalorder %s21, 3
    %p366 = pnand %p364, %p365
    %p367 = pneg %p366
    // Predicated region
    $region9: #{resnet_vib_forward.5} parent=5 // pred_check
      _
    $region10: #{resnet_vib_forward.5} parent=5 // pred_check_branch
      %369 = sbr.rel (%p366) target = $region12
    $region11: #{resnet_vib_forward.5} parent=5 // pred_region
      %s370 = ssub.s32 %s21, 1
      // Predicated region
      $region13: #{resnet_vib_forward.5} parent=11 // pred_check
        %p371 = pneg %p68
      $region14: #{resnet_vib_forward.5} parent=11 // pred_check_branch
        %373 = sbr.rel (%p371) target = $region16
      $region15: #{resnet_vib_forward.5} parent=11 // pred_region
        _
      $region16: #{resnet_vib_forward.5} parent=11 // pred_fallthru
        _
      // Predicated region
      $region17: #{resnet_vib_forward.5} parent=11 // pred_check
        %p374 = pneg %p89
      $region18: #{resnet_vib_forward.5} parent=11 // pred_check_branch
        %376 = sbr.rel (%p374) target = $region20
      $region19: #{resnet_vib_forward.5} parent=11 // pred_region
        _
      $region20: #{resnet_vib_forward.5} parent=11 // pred_fallthru
        _
      // Predicated region
      $region21: #{resnet_vib_forward.5} parent=11 // pred_check
        %p377 = pneg %p110
      $region22: #{resnet_vib_forward.5} parent=11 // pred_check_branch
        %379 = sbr.rel (%p377) target = $region24
      $region23: #{resnet_vib_forward.5} parent=11 // pred_region
        _
      $region24: #{resnet_vib_forward.5} parent=11 // pred_fallthru
        _
      // Predicated region
      $region25: #{resnet_vib_forward.5} parent=11 // pred_check
        %p380 = pneg %p131
      $region26: #{resnet_vib_forward.5} parent=11 // pred_check_branch
        %382 = sbr.rel (%p380) target = $region28
      $region27: #{resnet_vib_forward.5} parent=11 // pred_region
        _
      $region28: #{resnet_vib_forward.5} parent=11 // pred_fallthru
        _
      // Predicated region
      $region29: #{resnet_vib_forward.5} parent=11 // pred_check
        %p383 = pneg %p152
      $region30: #{resnet_vib_forward.5} parent=11 // pred_check_branch
        %385 = sbr.rel (%p383) target = $region32
      $region31: #{resnet_vib_forward.5} parent=11 // pred_region
        _
      $region32: #{resnet_vib_forward.5} parent=11 // pred_fallthru
        _
      // Predicated region
      $region33: #{resnet_vib_forward.5} parent=11 // pred_check
        %p386 = pneg %p173
      $region34: #{resnet_vib_forward.5} parent=11 // pred_check_branch
        %388 = sbr.rel (%p386) target = $region36
      $region35: #{resnet_vib_forward.5} parent=11 // pred_region
        _
      $region36: #{resnet_vib_forward.5} parent=11 // pred_fallthru
        _
      // Predicated region
      $region37: #{resnet_vib_forward.5} parent=11 // pred_check
        %p389 = pneg %p194
      $region38: #{resnet_vib_forward.5} parent=11 // pred_check_branch
        %391 = sbr.rel (%p389) target = $region40
      $region39: #{resnet_vib_forward.5} parent=11 // pred_region
        _
      $region40: #{resnet_vib_forward.5} parent=11 // pred_fallthru
        _
      // Predicated region
      $region41: #{resnet_vib_forward.5} parent=11 // pred_check
        %p392 = pneg %p215
      $region42: #{resnet_vib_forward.5} parent=11 // pred_check_branch
        %394 = sbr.rel (%p392) target = $region44
      $region43: #{resnet_vib_forward.5} parent=11 // pred_region
        _
      $region44: #{resnet_vib_forward.5} parent=11 // pred_fallthru
        _
      // Predicated region
      $region45: #{resnet_vib_forward.5} parent=11 // pred_check
        %p395 = pneg %p236
      $region46: #{resnet_vib_forward.5} parent=11 // pred_check_branch
        %397 = sbr.rel (%p395) target = $region48
      $region47: #{resnet_vib_forward.5} parent=11 // pred_region
        _
      $region48: #{resnet_vib_forward.5} parent=11 // pred_fallthru
        _
      // Predicated region
      $region49: #{resnet_vib_forward.5} parent=11 // pred_check
        %p398 = pneg %p257
      $region50: #{resnet_vib_forward.5} parent=11 // pred_check_branch
        %400 = sbr.rel (%p398) target = $region52
      $region51: #{resnet_vib_forward.5} parent=11 // pred_region
        _
      $region52: #{resnet_vib_forward.5} parent=11 // pred_fallthru
        _
      // Predicated region
      $region53: #{resnet_vib_forward.5} parent=11 // pred_check
        %p401 = pneg %p278
      $region54: #{resnet_vib_forward.5} parent=11 // pred_check_branch
        %403 = sbr.rel (%p401) target = $region56
      $region55: #{resnet_vib_forward.5} parent=11 // pred_region
        _
      $region56: #{resnet_vib_forward.5} parent=11 // pred_fallthru
        _
    $region12: #{resnet_vib_forward.5} parent=5 // pred_fallthru
      _
    %p404 = scmp.lt.s32.totalorder %s21, 2
    // Predicated region
    $region57: #{resnet_vib_forward.5} parent=5 // pred_check
      %p405 = pneg %p404
    $region58: #{resnet_vib_forward.5} parent=5 // pred_check_branch
      %407 = sbr.rel (%p405) target = $region60
    $region59: #{resnet_vib_forward.5} parent=5 // pred_region
      // Predicated region
      $region61: #{resnet_vib_forward.5} parent=59 // pred_check
        %p408 = pneg %p41
      $region62: #{resnet_vib_forward.5} parent=59 // pred_check_branch
        %410 = sbr.rel (%p408) target = $region64
      $region63: #{resnet_vib_forward.5} parent=59 // pred_region
        %p411 = scmp.lt.s32.totalorder %s21, 1
        %s412 = scalar_select %p411, %s21, 1
        %s413 = smul.addr %s412, 16
        %s414 = smul.addr %s413, 8
        %s415 = scalar_lea.vmem %s0, %s414
      $region64: #{resnet_vib_forward.5} parent=59 // pred_fallthru
        _
      // Predicated region
      $region65: #{resnet_vib_forward.5} parent=59 // pred_check
        %p416 = pneg %p298
      $region66: #{resnet_vib_forward.5} parent=59 // pred_check_branch
        %418 = sbr.rel (%p416) target = $region68
      $region67: #{resnet_vib_forward.5} parent=59 // pred_region
        %p419 = scmp.lt.s32.totalorder %s21, 1
        %s420 = scalar_select %p419, %s21, 1
        %s421 = smul.addr %s420, 8
        %s422 = smul.addr %s421, 8
        %s423 = scalar_lea.vmem %s12, %s422
      $region68: #{resnet_vib_forward.5} parent=59 // pred_fallthru
        _
    $region60: #{resnet_vib_forward.5} parent=5 // pred_fallthru
      _
    %p424 = scmp.le.s32.totalorder 1, %s21
    %p425 = scmp.lt.s32.totalorder %s21, 3
    %p426 = pnand %p424, %p425
    %p427 = pneg %p426
    // Predicated region
    $region69: #{resnet_vib_forward.5} parent=5 // pred_check
      _
    $region70: #{resnet_vib_forward.5} parent=5 // pred_check_branch
      %429 = sbr.rel (%p426) target = $region72
    $region71: #{resnet_vib_forward.5} parent=5 // pred_region
      %s430 = ssub.s32 %s21, 1
      %p431 = scmp.lt.s32.totalorder %s26, 1
      %s432 = scalar_select %p431, %s26, 1
      %s433 = smul.addr %s432, 16
      %s434 = smul.addr %s433, 8
      %s435 = scalar_lea.vmem %s0, %s434
      %p436 = pneg %p47
      %p437 = pneg %p44
      %p438 = pneg %p68
      %p439 = pneg %p65
      %p440 = pneg %p89
      %p441 = pneg %p86
      %p442 = pneg %p110
      %p443 = pneg %p107
      %p444 = pneg %p131
      %p445 = pneg %p128
      %p446 = pneg %p152
      %p447 = pneg %p149
      %p448 = pneg %p173
      %p449 = pneg %p170
      %p450 = pneg %p194
      %p451 = pneg %p191
      %p452 = pneg %p215
      %p453 = pneg %p212
      %p454 = pneg %p236
      %p455 = pneg %p233
      %p456 = pneg %p257
      %p457 = pneg %p254
      %p458 = pneg %p278
      %p459 = pneg %p275
      %p460 = scmp.lt.s32.totalorder %s26, 1
      %s461 = scalar_select %p460, %s26, 1
      %s462 = smul.addr %s461, 8
      %s463 = smul.addr %s462, 8
      %s464 = scalar_lea.vmem %s12, %s463
      %p465 = pneg %p304
      %p466 = pneg %p301
      %p467 = pneg %p330
      %p468 = pneg %p327
      %p469 = scmp.lt.s32.totalorder %s26, 1
      %s470 = scalar_select %p469, %s26, 1
      %s471 = smul.addr %s470, 16
      %s472 = smul.addr %s471, 8
      %s473 = scalar_lea.vmem %s13, %s472
      %p474 = pneg %p356
      %p475 = pneg %p353
      %p476 = scmp.lt.s32.totalorder %s26, 1
      %s477 = scalar_select %p476, %s26, 1
      %s478 = smul.addr %s477, 2
      %s479 = smul.addr %s478, 8
      %s480 = scalar_lea.vmem %s14, %s479
      %p481 = scmp.lt.s32.totalorder %s26, 1
      %s482 = scalar_select %p481, %s26, 1
      %s483 = smul.addr %s482, 16
      %s484 = smul.addr %s483, 8
      %s485 = scalar_lea.vmem %s0, %s484
      %p486 = scmp.lt.s32.totalorder %s26, 1
      %s487 = scalar_select %p486, %s26, 1
      %s488 = smul.addr %s487, 8
      %s489 = smul.addr %s488, 8
      %s490 = scalar_lea.vmem %s12, %s489
      %p491 = scmp.lt.s32.totalorder %s26, 1
      %s492 = scalar_select %p491, %s26, 1
      %s493 = smul.addr %s492, 16
      %s494 = smul.addr %s493, 8
      %s495 = scalar_lea.vmem %s13, %s494
      %p496 = scmp.lt.s32.totalorder %s26, 1
      %s497 = scalar_select %p496, %s26, 1
      %s498 = smul.addr %s497, 2
      %s499 = smul.addr %s498, 8
      %s500 = scalar_lea.vmem %s14, %s499
      %v501 = vld [vmem:[%s1] sm:$0x1]
      %v502 = vld [vmem:[%s2] sm:$0xff]
      %v503 = vld [vmem:[%s2 + $0x8] sm:$0xff]
      %v504 = vld [vmem:[%s2 + $0x10] sm:$0xff]
      %v505 = vld [vmem:[%s2 + $0x18] sm:$0xff]
      %v506 = vld [vmem:[%s2 + $0x20] sm:$0xff]
      %v507 = vld [vmem:[%s2 + $0x28] sm:$0xff]
      %v508 = vld [vmem:[%s2 + $0x30] sm:$0xff]
      %v509 = vld [vmem:[%s2 + $0x38] sm:$0xff]
      %v510 = vld [vmem:[%s2 + $0x40] sm:$0xff]
      %v511 = vld [vmem:[%s2 + $0x48] sm:$0xff]
      %v512 = vld [vmem:[%s2 + $0x50] sm:$0xff]
      %v513 = vld [vmem:[%s2 + $0x58] sm:$0xff]
      %v514 = vld [vmem:[%s2 + $0x60] sm:$0xff]
      %v515 = vld [vmem:[%s2 + $0x68] sm:$0xff]
      %v516 = vld [vmem:[%s2 + $0x70] sm:$0xff]
      %v517 = vld [vmem:[%s2 + $0x78] sm:$0xff]
      %v518 = vld [vmem:[%s2 + $0x80] sm:$0xff]
      %v519 = vld [vmem:[%s2 + $0x88] sm:$0xff]
      %v520 = vld [vmem:[%s2 + $0x90] sm:$0xff]
      %v521 = vld [vmem:[%s2 + $0x98] sm:$0xff]
      %v522 = vld [vmem:[%s2 + $0xa0] sm:$0xff]
      %v523 = vld [vmem:[%s2 + $0xa8] sm:$0xff]
      %v524 = vld [vmem:[%s2 + $0xb0] sm:$0xff]
      %v525 = vld [vmem:[%s2 + $0xb8] sm:$0xff]
      %v526 = vld [vmem:[%s3] sm:$0xff]
      %v527 = vld [vmem:[%s3 + $0x8] sm:$0xff]
      %v528 = vld [vmem:[%s3 + $0x10] sm:$0xff]
      %v529 = vld [vmem:[%s3 + $0x18] sm:$0xff]
      %v530 = vld [vmem:[%s3 + $0x20] sm:$0xff]
      %v531 = vld [vmem:[%s3 + $0x28] sm:$0xff]
      %v532 = vld [vmem:[%s3 + $0x30] sm:$0xff]
      %v533 = vld [vmem:[%s3 + $0x38] sm:$0xff]
      %v534 = vld [vmem:[%s4] sm:$0xff]
      %v535 = vld [vmem:[%s4 + $0x8] sm:$0xff]
      %v536 = vld [vmem:[%s4 + $0x10] sm:$0xff]
      %v537 = vld [vmem:[%s4 + $0x18] sm:$0xff]
      %v538 = vld [vmem:[%s4 + $0x20] sm:$0xff]
      %v539 = vld [vmem:[%s4 + $0x28] sm:$0xff]
      %v540 = vld [vmem:[%s4 + $0x30] sm:$0xff]
      %v541 = vld [vmem:[%s4 + $0x38] sm:$0xff]
      %v542 = vld [vmem:[%s5] sm:$0xff]
      %v543 = vld [vmem:[%s5 + $0x8] sm:$0xff]
      %v544 = vld [vmem:[%s5 + $0x10] sm:$0xff]
      %v545 = vld [vmem:[%s5 + $0x18] sm:$0xff]
      %v546 = vld [vmem:[%s5 + $0x20] sm:$0xff]
      %v547 = vld [vmem:[%s5 + $0x28] sm:$0xff]
      %v548 = vld [vmem:[%s5 + $0x30] sm:$0xff]
      %v549 = vld [vmem:[%s5 + $0x38] sm:$0xff]
      %v550 = vld [vmem:[%s6] sm:$0xff]
      %v551 = vld [vmem:[%s6 + $0x8] sm:$0xff]
      %v552 = vld [vmem:[%s6 + $0x10] sm:$0xff]
      %v553 = vld [vmem:[%s6 + $0x18] sm:$0xff]
      %v554 = vld [vmem:[%s6 + $0x20] sm:$0xff]
      %v555 = vld [vmem:[%s6 + $0x28] sm:$0xff]
      %v556 = vld [vmem:[%s6 + $0x30] sm:$0xff]
      %v557 = vld [vmem:[%s6 + $0x38] sm:$0xff]
      %v558 = vld [vmem:[%s6 + $0x40] sm:$0xff]
      %v559 = vld [vmem:[%s6 + $0x48] sm:$0xff]
      %v560 = vld [vmem:[%s6 + $0x50] sm:$0xff]
      %v561 = vld [vmem:[%s6 + $0x58] sm:$0xff]
      %v562 = vld [vmem:[%s6 + $0x60] sm:$0xff]
      %v563 = vld [vmem:[%s6 + $0x68] sm:$0xff]
      %v564 = vld [vmem:[%s6 + $0x70] sm:$0xff]
      %v565 = vld [vmem:[%s6 + $0x78] sm:$0xff]
      %v566 = vld [vmem:[%s6 + $0x80] sm:$0xff]
      %v567 = vld [vmem:[%s6 + $0x88] sm:$0xff]
      %v568 = vld [vmem:[%s6 + $0x90] sm:$0xff]
      %v569 = vld [vmem:[%s6 + $0x98] sm:$0xff]
      %v570 = vld [vmem:[%s6 + $0xa0] sm:$0xff]
      %v571 = vld [vmem:[%s6 + $0xa8] sm:$0xff]
      %v572 = vld [vmem:[%s6 + $0xb0] sm:$0xff]
      %v573 = vld [vmem:[%s6 + $0xb8] sm:$0xff]
      %v574 = vld [vmem:[%s6 + $0xc0] sm:$0xff]
      %v575 = vld [vmem:[%s6 + $0xc8] sm:$0xff]
      %v576 = vld [vmem:[%s6 + $0xd0] sm:$0xff]
      %v577 = vld [vmem:[%s6 + $0xd8] sm:$0xff]
      %v578 = vld [vmem:[%s6 + $0xe0] sm:$0xff]
      %v579 = vld [vmem:[%s6 + $0xe8] sm:$0xff]
      %v580 = vld [vmem:[%s6 + $0xf0] sm:$0xff]
      %v581 = vld [vmem:[%s6 + $0xf8] sm:$0xff]
      %v582 = vld [vmem:[%s6 + $0x100] sm:$0xff]
      %v583 = vld [vmem:[%s6 + $0x108] sm:$0xff]
      %v584 = vld [vmem:[%s6 + $0x110] sm:$0xff]
      %v585 = vld [vmem:[%s6 + $0x118] sm:$0xff]
      %v586 = vld [vmem:[%s6 + $0x120] sm:$0xff]
      %v587 = vld [vmem:[%s6 + $0x128] sm:$0xff]
      %v588 = vld [vmem:[%s6 + $0x130] sm:$0xff]
      %v589 = vld [vmem:[%s6 + $0x138] sm:$0xff]
      %v590 = vld [vmem:[%s7] sm:$0xff]
      %v591 = vld [vmem:[%s7 + $0x8] sm:$0xff]
      %v592 = vld [vmem:[%s7 + $0x10] sm:$0xff]
      %v593 = vld [vmem:[%s7 + $0x18] sm:$0xff]
      %v594 = vld [vmem:[%s7 + $0x20] sm:$0xff]
      %v595 = vld [vmem:[%s7 + $0x28] sm:$0xff]
      %v596 = vld [vmem:[%s7 + $0x30] sm:$0xff]
      %v597 = vld [vmem:[%s7 + $0x38] sm:$0xff]
      %v598 = vld [vmem:[%s8] sm:$0xff]
      %v599 = vld [vmem:[%s8 + $0x8] sm:$0xff]
      %v600 = vld [vmem:[%s8 + $0x10] sm:$0xff]
      %v601 = vld [vmem:[%s8 + $0x18] sm:$0xff]
      %v602 = vld [vmem:[%s8 + $0x20] sm:$0xff]
      %v603 = vld [vmem:[%s8 + $0x28] sm:$0xff]
      %v604 = vld [vmem:[%s8 + $0x30] sm:$0xff]
      %v605 = vld [vmem:[%s8 + $0x38] sm:$0xff]
      %v606 = vld [vmem:[%s8 + $0x40] sm:$0xff]
      %v607 = vld [vmem:[%s8 + $0x48] sm:$0xff]
      %v608 = vld [vmem:[%s8 + $0x50] sm:$0xff]
      %v609 = vld [vmem:[%s8 + $0x58] sm:$0xff]
      %v610 = vld [vmem:[%s8 + $0x60] sm:$0xff]
      %v611 = vld [vmem:[%s8 + $0x68] sm:$0xff]
      %v612 = vld [vmem:[%s8 + $0x70] sm:$0xff]
      %v613 = vld [vmem:[%s8 + $0x78] sm:$0xff]
      %v614 = vld [vmem:[%s9] sm:$0xff]
      %v615 = vld [vmem:[%s9 + $0x8] sm:$0xff]
      %v616 = vld [vmem:[%s9 + $0x10] sm:$0xff]
      %v617 = vld [vmem:[%s9 + $0x18] sm:$0xff]
      %v618 = vld [vmem:[%s9 + $0x20] sm:$0xff]
      %v619 = vld [vmem:[%s9 + $0x28] sm:$0xff]
      %v620 = vld [vmem:[%s9 + $0x30] sm:$0xff]
      %v621 = vld [vmem:[%s9 + $0x38] sm:$0xff]
      %v622 = vld [vmem:[%s9 + $0x40] sm:$0xff]
      %v623 = vld [vmem:[%s9 + $0x48] sm:$0xff]
      %v624 = vld [vmem:[%s9 + $0x50] sm:$0xff]
      %v625 = vld [vmem:[%s9 + $0x58] sm:$0xff]
      %v626 = vld [vmem:[%s9 + $0x60] sm:$0xff]
      %v627 = vld [vmem:[%s9 + $0x68] sm:$0xff]
      %v628 = vld [vmem:[%s9 + $0x70] sm:$0xff]
      %v629 = vld [vmem:[%s9 + $0x78] sm:$0xff]
      %v630 = vld [vmem:[%s10] sm:$0xff]
      %v631 = vld [vmem:[%s10 + $0x8] sm:$0xff]
      %v632 = vld [vmem:[%s11] sm:$0xff]
      %v633 = vld [vmem:[%s11 + $0x8] sm:$0xff]
      %v634 = vld [vmem:[%s485] sm:$0xff]
      %v635 = vld [vmem:[%s485 + $0x8] sm:$0xff]
      %v636 = vld [vmem:[%s485 + $0x10] sm:$0xff]
      %v637 = vld [vmem:[%s485 + $0x18] sm:$0xff]
      %s638 = scalar_lea.vmem %s485, 32
      %v639 = vld [vmem:[%s638] sm:$0xff]
      %v640 = vld [vmem:[%s638 + $0x8] sm:$0xff]
      %v641 = vld [vmem:[%s638 + $0x10] sm:$0xff]
      %v642 = vld [vmem:[%s638 + $0x18] sm:$0xff]
      %s643 = scalar_lea.vmem %s485, 64
      %v644 = vld [vmem:[%s643] sm:$0xff]
      %v645 = vld [vmem:[%s643 + $0x8] sm:$0xff]
      %v646 = vld [vmem:[%s643 + $0x10] sm:$0xff]
      %v647 = vld [vmem:[%s643 + $0x18] sm:$0xff]
      %s648 = scalar_lea.vmem %s485, 96
      %v649 = vld [vmem:[%s648] sm:$0xff]
      %v650 = vld [vmem:[%s648 + $0x8] sm:$0xff]
      %v651 = vld [vmem:[%s648 + $0x10] sm:$0xff]
      %v652 = vld [vmem:[%s648 + $0x18] sm:$0xff]
      %657 = vrot.lane.b32.xlu0 %v634, 127
      %v658 = vpop.permute.xlu0 %657
      %659 = vrot.lane.b32.xlu0 %v635, 127
      %v660 = vpop.permute.xlu0 %659
      %661 = vrot.lane.b32.xlu0 %v636, 127
      %v662 = vpop.permute.xlu0 %661
      %663 = vrot.lane.b32.xlu0 %v637, 127
      %v664 = vpop.permute.xlu0 %663
      %673 = vrot.lane.b32.xlu0 %v644, 127
      %v674 = vpop.permute.xlu0 %673
      %675 = vrot.lane.b32.xlu0 %v645, 127
      %v676 = vpop.permute.xlu0 %675
      %677 = vrot.lane.b32.xlu0 %v646, 127
      %v678 = vpop.permute.xlu0 %677
      %679 = vrot.lane.b32.xlu0 %v647, 127
      %v680 = vpop.permute.xlu0 %679
      %685 = vrot.lane.b32.xlu0 %v634, 122
      %v686 = vpop.permute.xlu0 %685
      %687 = vrot.lane.b32.xlu0 %v635, 122
      %v688 = vpop.permute.xlu0 %687
      %689 = vrot.lane.b32.xlu0 %v636, 122
      %v690 = vpop.permute.xlu0 %689
      %691 = vrot.lane.b32.xlu0 %v637, 122
      %v692 = vpop.permute.xlu0 %691
      %701 = vrot.lane.b32.xlu0 %v639, 122
      %v702 = vpop.permute.xlu0 %701
      %703 = vrot.lane.b32.xlu0 %v640, 122
      %v704 = vpop.permute.xlu0 %703
      %705 = vrot.lane.b32.xlu0 %v641, 122
      %v706 = vpop.permute.xlu0 %705
      %707 = vrot.lane.b32.xlu0 %v642, 122
      %v708 = vpop.permute.xlu0 %707
      %713 = vrot.lane.b32.xlu0 %v634, 121
      %v714 = vpop.permute.xlu0 %713
      %715 = vrot.lane.b32.xlu0 %v635, 121
      %v716 = vpop.permute.xlu0 %715
      %717 = vrot.lane.b32.xlu0 %v636, 121
      %v718 = vpop.permute.xlu0 %717
      %719 = vrot.lane.b32.xlu0 %v637, 121
      %v720 = vpop.permute.xlu0 %719
      %726 = vset.pattern.permute.xlu0 0
      %727 = vperm.xlu0 %726, %v526
      %v728 = vpop.permute.xlu0 %727
      %731 = vset.pattern.permute.xlu0 0
      %732 = vperm.xlu0 %731, %v527
      %v733 = vpop.permute.xlu0 %732
      %736 = vset.pattern.permute.xlu0 0
      %737 = vperm.xlu0 %736, %v528
      %v738 = vpop.permute.xlu0 %737
      %741 = vset.pattern.permute.xlu0 0
      %742 = vperm.xlu0 %741, %v529
      %v743 = vpop.permute.xlu0 %742
      %746 = vset.pattern.permute.xlu0 0
      %747 = vperm.xlu0 %746, %v530
      %v748 = vpop.permute.xlu0 %747
      %751 = vset.pattern.permute.xlu0 0
      %752 = vperm.xlu0 %751, %v531
      %v753 = vpop.permute.xlu0 %752
      %756 = vset.pattern.permute.xlu0 0
      %757 = vperm.xlu0 %756, %v532
      %v758 = vpop.permute.xlu0 %757
      %761 = vset.pattern.permute.xlu0 0
      %762 = vperm.xlu0 %761, %v533
      %v763 = vpop.permute.xlu0 %762
      %vm765 = vcmask 261120
      %v767 = vsel %vm765, %v504, 0
      %v770 = vsel %vm765, %v507, 0
      %v773 = vsel %vm765, %v510, 0
      %v776 = vsel %vm765, %v513, 0
      %v779 = vsel %vm765, %v516, 0
      %v782 = vsel %vm765, %v519, 0
      %v785 = vsel %vm765, %v522, 0
      %v788 = vsel %vm765, %v525, 0
      %790 = vmatprep.subr.mxu0 0.0
      %791 = vmatpush1.msra.mxu0 %v634
      %792 = vmatprep.subr.mxu0 0.0
      %793 = vmatpush1.msra.mxu0 %v635
      %794 = vmatprep.subr.mxu0 0.0
      %795 = vmatpush1.msra.mxu0 %v636
      %796 = vmatprep.subr.mxu0 0.0
      %797 = vmatpush1.msra.mxu0 %v637
      %798 = vmatprep.subr.mxu0 0.0
      %799 = vmatpush1.msra.mxu0 %v639
      %800 = vmatprep.subr.mxu0 0.0
      %801 = vmatpush1.msra.mxu0 %v640
      %802 = vmatprep.subr.mxu0 0.0
      %803 = vmatpush1.msra.mxu0 %v641
      %804 = vmatprep.subr.mxu0 0.0
      %805 = vmatpush1.msra.mxu0 %v642
      %806 = vmatprep.subr.mxu0 0.0
      %807 = vmatpush1.msra.mxu0 %v658
      %808 = vmatprep.subr.mxu0 0.0
      %809 = vmatpush1.msra.mxu0 %v660
      %810 = vmatprep.subr.mxu0 0.0
      %811 = vmatpush1.msra.mxu0 %v662
      %812 = vmatprep.subr.mxu0 0.0
      %813 = vmatpush1.msra.mxu0 %v664
      %814 = vmatprep.subr.mxu0 0.0
      %815 = vmatpush1.msra.mxu0 %v644
      %816 = vmatprep.subr.mxu0 0.0
      %817 = vmatpush1.msra.mxu0 %v645
      %818 = vmatprep.subr.mxu0 0.0
      %819 = vmatpush1.msra.mxu0 %v646
      %820 = vmatprep.subr.mxu0 0.0
      %821 = vmatpush1.msra.mxu0 %v647
      %822 = vmatprep.subr.mxu0 0.0
      %823 = vmatpush1.msra.mxu0 %v649
      %824 = vmatprep.subr.mxu0 0.0
      %825 = vmatpush1.msra.mxu0 %v650
      %826 = vmatprep.subr.mxu0 0.0
      %827 = vmatpush1.msra.mxu0 %v651
      %828 = vmatprep.subr.mxu0 0.0
      %829 = vmatpush1.msra.mxu0 %v652
      %830 = vmatprep.subr.mxu0 0.0
      %831 = vmatpush1.msra.mxu0 %v674
      %832 = vmatprep.subr.mxu0 0.0
      %833 = vmatpush1.msra.mxu0 %v676
      %834 = vmatprep.subr.mxu0 0.0
      %835 = vmatpush1.msra.mxu0 %v678
      %836 = vmatprep.subr.mxu0 0.0
      %837 = vmatpush1.msra.mxu0 %v680
      %838 = vmatprep.subr.mxu0 0.0
      %839 = vmatpush1.msra.mxu0 %v686
      %840 = vmatprep.subr.mxu0 0.0
      %841 = vmatpush1.msra.mxu0 %v688
      %842 = vmatprep.subr.mxu0 0.0
      %843 = vmatpush1.msra.mxu0 %v690
      %844 = vmatprep.subr.mxu0 0.0
      %845 = vmatpush1.msra.mxu0 %v692
      %846 = vmatprep.subr.mxu0 0.0
      %847 = vmatpush1.msra.mxu0 %v702
      %848 = vmatprep.subr.mxu0 0.0
      %849 = vmatpush1.msra.mxu0 %v704
      %850 = vmatprep.subr.mxu0 0.0
      %851 = vmatpush1.msra.mxu0 %v706
      %852 = vmatprep.subr.mxu0 0.0
      %853 = vmatpush1.msra.mxu0 %v708
      %854 = vmatprep.mubr.f32.mxu0 %v503
      %855 = vmatmul.mubr.f32.gmra.mrb[0].mxu0 %v502
      %v856 = vpop.f32.mrb[0].mxu0
      %v857 = vadd.f32 %v728, %v856
      %v858 = vpop.f32.mrb[0].mxu0
      %859 = vmatprep.mubr.f32.mxu0 %v506
      %860 = vmatmul.mubr.f32.gmra.mrb[0].mxu0 %v505
      %v861 = vpop.f32.mrb[0].mxu0
      %v862 = vadd.f32 %v733, %v861
      %v863 = vpop.f32.mrb[0].mxu0
      %864 = vmatprep.mubr.f32.mxu0 %v509
      %865 = vmatmul.mubr.f32.gmra.mrb[0].mxu0 %v508
      %v866 = vpop.f32.mrb[0].mxu0
      %v867 = vadd.f32 %v738, %v866
      %v868 = vpop.f32.mrb[0].mxu0
      %869 = vmatprep.mubr.f32.mxu0 %v512
      %870 = vmatmul.mubr.f32.gmra.mrb[0].mxu0 %v511
      %v871 = vpop.f32.mrb[0].mxu0
      %v872 = vadd.f32 %v743, %v871
      %v873 = vpop.f32.mrb[0].mxu0
      %874 = vmatprep.mubr.f32.mxu0 %v515
      %875 = vmatmul.mubr.f32.gmra.mrb[0].mxu0 %v514
      %v876 = vpop.f32.mrb[0].mxu0
      %v877 = vadd.f32 %v748, %v876
      %v878 = vpop.f32.mrb[0].mxu0
      %879 = vmatprep.mubr.f32.mxu0 %v518
      %880 = vmatmul.mubr.f32.gmra.mrb[0].mxu0 %v517
      %v881 = vpop.f32.mrb[0].mxu0
      %v882 = vadd.f32 %v753, %v881
      %v883 = vpop.f32.mrb[0].mxu0
      %884 = vmatprep.mubr.f32.mxu0 %v521
      %885 = vmatmul.mubr.f32.gmra.mrb[0].mxu0 %v520
      %v886 = vpop.f32.mrb[0].mxu0
      %v887 = vadd.f32 %v758, %v886
      %v888 = vpop.f32.mrb[0].mxu0
      %889 = vmatprep.mubr.f32.mxu0 %v524
      %890 = vmatmul.mubr.f32.gmra.mrb[0].mxu0 %v523
      %v891 = vpop.f32.mrb[0].mxu0
      %v892 = vadd.f32 %v763, %v891
      %v893 = vpop.f32.mrb[0].mxu0
      %894 = vdwg.mxu0
      %895 = vmatprep.subr.mxu0 0.0
      %896 = vmatpush1.msra.mxu0 %v714
      %897 = vmatprep.subr.mxu0 0.0
      %898 = vmatpush1.msra.mxu0 %v716
      %899 = vmatprep.subr.mxu0 0.0
      %900 = vmatpush1.msra.mxu0 %v718
      %901 = vmatprep.subr.mxu0 0.0
      %902 = vmatpush1.msra.mxu0 %v720
      %903 = vmatprep.subr.mxu0 0.0
      %904 = vmatpush1.msra.mxu0 0.0
      %905 = vmatprep.subr.mxu0 0.0
      %906 = vmatpush1.msra.mxu0 0.0
      %907 = vmatprep.subr.mxu0 0.0
      %908 = vmatpush1.msra.mxu0 0.0
      %909 = vmatprep.subr.mxu0 0.0
      %910 = vmatpush1.msra.mxu0 0.0
      %911 = vmatprep.subr.mxu0 0.0
      %912 = vmatpush1.msra.mxu0 0.0
      %913 = vmatprep.subr.mxu0 0.0
      %914 = vmatpush1.msra.mxu0 0.0
      %915 = vmatprep.subr.mxu0 0.0
      %916 = vmatpush1.msra.mxu0 0.0
      %917 = vmatprep.subr.mxu0 0.0
      %918 = vmatpush1.msra.mxu0 0.0
      %919 = vmatprep.subr.mxu0 0.0
      %920 = vmatpush1.msra.mxu0 0.0
      %921 = vmatprep.subr.mxu0 0.0
      %922 = vmatpush1.msra.mxu0 0.0
      %923 = vmatprep.subr.mxu0 0.0
      %924 = vmatpush1.msra.mxu0 0.0
      %925 = vmatprep.subr.mxu0 0.0
      %926 = vmatpush1.msra.mxu0 0.0
      %927 = vmatprep.subr.mxu0 0.0
      %928 = vmatpush1.msra.mxu0 0.0
      %929 = vmatprep.subr.mxu0 0.0
      %930 = vmatpush1.msra.mxu0 0.0
      %931 = vmatprep.subr.mxu0 0.0
      %932 = vmatpush1.msra.mxu0 0.0
      %933 = vmatprep.subr.mxu0 0.0
      %934 = vmatpush1.msra.mxu0 0.0
      %935 = vmatprep.subr.mxu0 0.0
      %936 = vmatpush1.msra.mxu0 0.0
      %937 = vmatprep.subr.mxu0 0.0
      %938 = vmatpush1.msra.mxu0 0.0
      %939 = vmatprep.subr.mxu0 0.0
      %940 = vmatpush1.msra.mxu0 0.0
      %941 = vmatprep.subr.mxu0 0.0
      %942 = vmatpush1.msra.mxu0 0.0
      %943 = vmatprep.subr.mxu0 0.0
      %944 = vmatpush1.msra.mxu0 0.0
      %945 = vmatprep.subr.mxu0 0.0
      %946 = vmatpush1.msra.mxu0 0.0
      %947 = vmatprep.subr.mxu0 0.0
      %948 = vmatpush1.msra.mxu0 0.0
      %949 = vmatprep.subr.mxu0 0.0
      %950 = vmatpush1.msra.mxu0 0.0
      %951 = vmatprep.subr.mxu0 0.0
      %952 = vmatpush1.msra.mxu0 0.0
      %953 = vmatprep.subr.mxu0 0.0
      %954 = vmatpush1.msra.mxu0 0.0
      %955 = vmatprep.subr.mxu0 0.0
      %956 = vmatpush1.msra.mxu0 0.0
      %957 = vmatprep.subr.mxu0 0.0
      %958 = vmatpush1.msra.mxu0 0.0
      %959 = vmatprep.mubr.f32.mxu0 0.0
      %960 = vmatmul.mubr.f32.gmra.mrb[0].mxu0 %v767
      %v961 = vpop.f32.mrb[0].mxu0
      %v962 = vadd.f32 %v857, %v961
      %v963 = vpop.f32.mrb[0].mxu0
      %964 = vmatprep.mubr.f32.mxu0 0.0
      %965 = vmatmul.mubr.f32.gmra.mrb[0].mxu0 %v770
      %v966 = vpop.f32.mrb[0].mxu0
      %v967 = vadd.f32 %v862, %v966
      %v968 = vpop.f32.mrb[0].mxu0
      %969 = vmatprep.mubr.f32.mxu0 0.0
      %970 = vmatmul.mubr.f32.gmra.mrb[0].mxu0 %v773
      %v971 = vpop.f32.mrb[0].mxu0
      %v972 = vadd.f32 %v867, %v971
      %v973 = vpop.f32.mrb[0].mxu0
      %974 = vmatprep.mubr.f32.mxu0 0.0
      %975 = vmatmul.mubr.f32.gmra.mrb[0].mxu0 %v776
      %v976 = vpop.f32.mrb[0].mxu0
      %v977 = vadd.f32 %v872, %v976
      %v978 = vpop.f32.mrb[0].mxu0
      %979 = vmatprep.mubr.f32.mxu0 0.0
      %980 = vmatmul.mubr.f32.gmra.mrb[0].mxu0 %v779
      %v981 = vpop.f32.mrb[0].mxu0
      %v982 = vadd.f32 %v877, %v981
      %v983 = vpop.f32.mrb[0].mxu0
      %984 = vmatprep.mubr.f32.mxu0 0.0
      %985 = vmatmul.mubr.f32.gmra.mrb[0].mxu0 %v782
      %v986 = vpop.f32.mrb[0].mxu0
      %v987 = vadd.f32 %v882, %v986
      %v988 = vpop.f32.mrb[0].mxu0
      %989 = vmatprep.mubr.f32.mxu0 0.0
      %990 = vmatmul.mubr.f32.gmra.mrb[0].mxu0 %v785
      %v991 = vpop.f32.mrb[0].mxu0
      %v992 = vadd.f32 %v887, %v991
      %v993 = vpop.f32.mrb[0].mxu0
      %994 = vmatprep.mubr.f32.mxu0 0.0
      %995 = vmatmul.mubr.f32.gmra.mrb[0].mxu0 %v788
      %v996 = vpop.f32.mrb[0].mxu0
      %v997 = vadd.f32 %v892, %v996
      %v998 = vpop.f32.mrb[0].mxu0
      %999 = vdwg.mxu0
      %v1000 = vmax.f32 %v962, 0.0
      %v1001 = vmax.f32 %v967, 0.0
      %v1002 = vmax.f32 %v972, 0.0
      %v1003 = vmax.f32 %v977, 0.0
      %v1004 = vmax.f32 %v982, 0.0
      %v1005 = vmax.f32 %v987, 0.0
      %v1006 = vmax.f32 %v992, 0.0
      %v1007 = vmax.f32 %v997, 0.0
      %v1009 = vlaneseq
      %v1010 = vshrl.u32 %v1009, 7
      %v1011 = vsub.s32 0, %v1010
      %v1012 = vrot.slane %v501, %v1011
      %v1014 = vmul.f32 %v1000, %v1012
      %v1015 = vmul.f32 %v1001, %v1012
      %v1016 = vmul.f32 %v1002, %v1012
      %v1017 = vmul.f32 %v1003, %v1012
      %v1018 = vmul.f32 %v1004, %v1012
      %v1019 = vmul.f32 %v1005, %v1012
      %v1020 = vmul.f32 %v1006, %v1012
      %v1021 = vmul.f32 %v1007, %v1012
      %1030 = vrot.lane.b32.xlu0 %v1014, 7
      %v1031 = vpop.permute.xlu0 %1030
      %1032 = vrot.lane.b32.xlu0 %v1015, 7
      %v1033 = vpop.permute.xlu0 %1032
      %1034 = vrot.lane.b32.xlu0 %v1016, 7
      %v1035 = vpop.permute.xlu0 %1034
      %1036 = vrot.lane.b32.xlu0 %v1017, 7
      %v1037 = vpop.permute.xlu0 %1036
      %1038 = vrot.lane.b32.xlu0 %v1018, 7
      %v1039 = vpop.permute.xlu0 %1038
      %1040 = vrot.lane.b32.xlu0 %v1019, 7
      %v1041 = vpop.permute.xlu0 %1040
      %1042 = vrot.lane.b32.xlu0 %v1020, 7
      %v1043 = vpop.permute.xlu0 %1042
      %1044 = vrot.lane.b32.xlu0 %v1021, 7
      %v1045 = vpop.permute.xlu0 %1044
      %vm1054 = vcmask 56320
      %v1055 = vsel %vm1054, 0.0, %v1031
      %v1056 = vsel %vm1054, 0.0, %v1033
      %v1057 = vsel %vm1054, 0.0, %v1035
      %v1058 = vsel %vm1054, 0.0, %v1037
      %v1059 = vsel %vm1054, 0.0, %v1039
      %v1060 = vsel %vm1054, 0.0, %v1041
      %v1061 = vsel %vm1054, 0.0, %v1043
      %v1062 = vsel %vm1054, 0.0, %v1045
      %vm1063 = vcmask 252928
      %v1064 = vsel %vm1063, %v1055, 0.0
      %v1065 = vsel %vm1063, %v1056, 0.0
      %v1066 = vsel %vm1063, %v1057, 0.0
      %v1067 = vsel %vm1063, %v1058, 0.0
      %v1068 = vsel %vm1063, %v1059, 0.0
      %v1069 = vsel %vm1063, %v1060, 0.0
      %v1070 = vsel %vm1063, %v1061, 0.0
      %v1071 = vsel %vm1063, %v1062, 0.0
      %1080 = vrot.lane.b32.xlu0 %v1064, 127
      %v1081 = vpop.permute.xlu0 %1080
      %1082 = vrot.lane.b32.xlu0 %v1065, 127
      %v1083 = vpop.permute.xlu0 %1082
      %1084 = vrot.lane.b32.xlu0 %v1066, 127
      %v1085 = vpop.permute.xlu0 %1084
      %1086 = vrot.lane.b32.xlu0 %v1067, 127
      %v1087 = vpop.permute.xlu0 %1086
      %1088 = vrot.lane.b32.xlu0 %v1068, 127
      %v1089 = vpop.permute.xlu0 %1088
      %1090 = vrot.lane.b32.xlu0 %v1069, 127
      %v1091 = vpop.permute.xlu0 %1090
      %1092 = vrot.lane.b32.xlu0 %v1070, 127
      %v1093 = vpop.permute.xlu0 %1092
      %1094 = vrot.lane.b32.xlu0 %v1071, 127
      %v1095 = vpop.permute.xlu0 %1094
      %1104 = vrot.lane.b32.xlu0 %v1064, 126
      %v1105 = vpop.permute.xlu0 %1104
      %1106 = vrot.lane.b32.xlu0 %v1065, 126
      %v1107 = vpop.permute.xlu0 %1106
      %1108 = vrot.lane.b32.xlu0 %v1066, 126
      %v1109 = vpop.permute.xlu0 %1108
      %1110 = vrot.lane.b32.xlu0 %v1067, 126
      %v1111 = vpop.permute.xlu0 %1110
      %1112 = vrot.lane.b32.xlu0 %v1068, 126
      %v1113 = vpop.permute.xlu0 %1112
      %1114 = vrot.lane.b32.xlu0 %v1069, 126
      %v1115 = vpop.permute.xlu0 %1114
      %1116 = vrot.lane.b32.xlu0 %v1070, 126
      %v1117 = vpop.permute.xlu0 %1116
      %1118 = vrot.lane.b32.xlu0 %v1071, 126
      %v1119 = vpop.permute.xlu0 %1118
      %1128 = vrot.lane.b32.xlu0 %v1064, 122
      %v1129 = vpop.permute.xlu0 %1128
      %1130 = vrot.lane.b32.xlu0 %v1065, 122
      %v1131 = vpop.permute.xlu0 %1130
      %1132 = vrot.lane.b32.xlu0 %v1066, 122
      %v1133 = vpop.permute.xlu0 %1132
      %1134 = vrot.lane.b32.xlu0 %v1067, 122
      %v1135 = vpop.permute.xlu0 %1134
      %1136 = vrot.lane.b32.xlu0 %v1068, 122
      %v1137 = vpop.permute.xlu0 %1136
      %1138 = vrot.lane.b32.xlu0 %v1069, 122
      %v1139 = vpop.permute.xlu0 %1138
      %1140 = vrot.lane.b32.xlu0 %v1070, 122
      %v1141 = vpop.permute.xlu0 %1140
      %1142 = vrot.lane.b32.xlu0 %v1071, 122
      %v1143 = vpop.permute.xlu0 %1142
      %1152 = vrot.lane.b32.xlu0 %v1064, 121
      %v1153 = vpop.permute.xlu0 %1152
      %1154 = vrot.lane.b32.xlu0 %v1065, 121
      %v1155 = vpop.permute.xlu0 %1154
      %1156 = vrot.lane.b32.xlu0 %v1066, 121
      %v1157 = vpop.permute.xlu0 %1156
      %1158 = vrot.lane.b32.xlu0 %v1067, 121
      %v1159 = vpop.permute.xlu0 %1158
      %1160 = vrot.lane.b32.xlu0 %v1068, 121
      %v1161 = vpop.permute.xlu0 %1160
      %1162 = vrot.lane.b32.xlu0 %v1069, 121
      %v1163 = vpop.permute.xlu0 %1162
      %1164 = vrot.lane.b32.xlu0 %v1070, 121
      %v1165 = vpop.permute.xlu0 %1164
      %1166 = vrot.lane.b32.xlu0 %v1071, 121
      %v1167 = vpop.permute.xlu0 %1166
      %1176 = vrot.lane.b32.xlu0 %v1064, 120
      %v1177 = vpop.permute.xlu0 %1176
      %1178 = vrot.lane.b32.xlu0 %v1065, 120
      %v1179 = vpop.permute.xlu0 %1178
      %1180 = vrot.lane.b32.xlu0 %v1066, 120
      %v1181 = vpop.permute.xlu0 %1180
      %1182 = vrot.lane.b32.xlu0 %v1067, 120
      %v1183 = vpop.permute.xlu0 %1182
      %1184 = vrot.lane.b32.xlu0 %v1068, 120
      %v1185 = vpop.permute.xlu0 %1184
      %1186 = vrot.lane.b32.xlu0 %v1069, 120
      %v1187 = vpop.permute.xlu0 %1186
      %1188 = vrot.lane.b32.xlu0 %v1070, 120
      %v1189 = vpop.permute.xlu0 %1188
      %1190 = vrot.lane.b32.xlu0 %v1071, 120
      %v1191 = vpop.permute.xlu0 %1190
      %1200 = vrot.lane.b32.xlu0 %v1064, 116
      %v1201 = vpop.permute.xlu0 %1200
      %1202 = vrot.lane.b32.xlu0 %v1065, 116
      %v1203 = vpop.permute.xlu0 %1202
      %1204 = vrot.lane.b32.xlu0 %v1066, 116
      %v1205 = vpop.permute.xlu0 %1204
      %1206 = vrot.lane.b32.xlu0 %v1067, 116
      %v1207 = vpop.permute.xlu0 %1206
      %1208 = vrot.lane.b32.xlu0 %v1068, 116
      %v1209 = vpop.permute.xlu0 %1208
      %1210 = vrot.lane.b32.xlu0 %v1069, 116
      %v1211 = vpop.permute.xlu0 %1210
      %1212 = vrot.lane.b32.xlu0 %v1070, 116
      %v1213 = vpop.permute.xlu0 %1212
      %1214 = vrot.lane.b32.xlu0 %v1071, 116
      %v1215 = vpop.permute.xlu0 %1214
      %1224 = vrot.lane.b32.xlu0 %v1064, 115
      %v1225 = vpop.permute.xlu0 %1224
      %1226 = vrot.lane.b32.xlu0 %v1065, 115
      %v1227 = vpop.permute.xlu0 %1226
      %1228 = vrot.lane.b32.xlu0 %v1066, 115
      %v1229 = vpop.permute.xlu0 %1228
      %1230 = vrot.lane.b32.xlu0 %v1067, 115
      %v1231 = vpop.permute.xlu0 %1230
      %1232 = vrot.lane.b32.xlu0 %v1068, 115
      %v1233 = vpop.permute.xlu0 %1232
      %1234 = vrot.lane.b32.xlu0 %v1069, 115
      %v1235 = vpop.permute.xlu0 %1234
      %1236 = vrot.lane.b32.xlu0 %v1070, 115
      %v1237 = vpop.permute.xlu0 %1236
      %1238 = vrot.lane.b32.xlu0 %v1071, 115
      %v1239 = vpop.permute.xlu0 %1238
      %1248 = vrot.lane.b32.xlu0 %v1064, 114
      %v1249 = vpop.permute.xlu0 %1248
      %1250 = vrot.lane.b32.xlu0 %v1065, 114
      %v1251 = vpop.permute.xlu0 %1250
      %1252 = vrot.lane.b32.xlu0 %v1066, 114
      %v1253 = vpop.permute.xlu0 %1252
      %1254 = vrot.lane.b32.xlu0 %v1067, 114
      %v1255 = vpop.permute.xlu0 %1254
      %1256 = vrot.lane.b32.xlu0 %v1068, 114
      %v1257 = vpop.permute.xlu0 %1256
      %1258 = vrot.lane.b32.xlu0 %v1069, 114
      %v1259 = vpop.permute.xlu0 %1258
      %1260 = vrot.lane.b32.xlu0 %v1070, 114
      %v1261 = vpop.permute.xlu0 %1260
      %1262 = vrot.lane.b32.xlu0 %v1071, 114
      %v1263 = vpop.permute.xlu0 %1262
      %1273 = vset.pattern.permute.xlu0 0
      %1274 = vperm.xlu0 %1273, %v590
      %v1275 = vpop.permute.xlu0 %1274
      %1278 = vset.pattern.permute.xlu0 0
      %1279 = vperm.xlu0 %1278, %v591
      %v1280 = vpop.permute.xlu0 %1279
      %1283 = vset.pattern.permute.xlu0 0
      %1284 = vperm.xlu0 %1283, %v592
      %v1285 = vpop.permute.xlu0 %1284
      %1288 = vset.pattern.permute.xlu0 0
      %1289 = vperm.xlu0 %1288, %v593
      %v1290 = vpop.permute.xlu0 %1289
      %1293 = vset.pattern.permute.xlu0 0
      %1294 = vperm.xlu0 %1293, %v594
      %v1295 = vpop.permute.xlu0 %1294
      %1298 = vset.pattern.permute.xlu0 0
      %1299 = vperm.xlu0 %1298, %v595
      %v1300 = vpop.permute.xlu0 %1299
      %1303 = vset.pattern.permute.xlu0 0
      %1304 = vperm.xlu0 %1303, %v596
      %v1305 = vpop.permute.xlu0 %1304
      %1308 = vset.pattern.permute.xlu0 0
      %1309 = vperm.xlu0 %1308, %v597
      %v1310 = vpop.permute.xlu0 %1309
      %vm1312 = vcmask 523264
      %v1314 = vsel %vm1312, %v554, 0
      %v1317 = vsel %vm1312, %v559, 0
      %v1320 = vsel %vm1312, %v564, 0
      %v1323 = vsel %vm1312, %v569, 0
      %v1326 = vsel %vm1312, %v574, 0
      %v1329 = vsel %vm1312, %v579, 0
      %v1332 = vsel %vm1312, %v584, 0
      %v1335 = vsel %vm1312, %v589, 0
      %1337 = vmatprep.subr.mxu0 0.0
      %1338 = vmatpush1.msra.mxu0 %v1064
      %1339 = vmatprep.subr.mxu0 0.0
      %1340 = vmatpush1.msra.mxu0 %v1065
      %1341 = vmatprep.subr.mxu0 0.0
      %1342 = vmatpush1.msra.mxu0 %v1066
      %1343 = vmatprep.subr.mxu0 0.0
      %1344 = vmatpush1.msra.mxu0 %v1067
      %1345 = vmatprep.subr.mxu0 0.0
      %1346 = vmatpush1.msra.mxu0 %v1068
      %1347 = vmatprep.subr.mxu0 0.0
      %1348 = vmatpush1.msra.mxu0 %v1069
      %1349 = vmatprep.subr.mxu0 0.0
      %1350 = vmatpush1.msra.mxu0 %v1070
      %1351 = vmatprep.subr.mxu0 0.0
      %1352 = vmatpush1.msra.mxu0 %v1071
      %1353 = vmatprep.subr.mxu0 0.0
      %1354 = vmatpush1.msra.mxu0 %v1081
      %1355 = vmatprep.subr.mxu0 0.0
      %1356 = vmatpush1.msra.mxu0 %v1083
      %1357 = vmatprep.subr.mxu0 0.0
      %1358 = vmatpush1.msra.mxu0 %v1085
      %1359 = vmatprep.subr.mxu0 0.0
      %1360 = vmatpush1.msra.mxu0 %v1087
      %1361 = vmatprep.subr.mxu0 0.0
      %1362 = vmatpush1.msra.mxu0 %v1089
      %1363 = vmatprep.subr.mxu0 0.0
      %1364 = vmatpush1.msra.mxu0 %v1091
      %1365 = vmatprep.subr.mxu0 0.0
      %1366 = vmatpush1.msra.mxu0 %v1093
      %1367 = vmatprep.subr.mxu0 0.0
      %1368 = vmatpush1.msra.mxu0 %v1095
      %1369 = vmatprep.subr.mxu0 0.0
      %1370 = vmatpush1.msra.mxu0 %v1105
      %1371 = vmatprep.subr.mxu0 0.0
      %1372 = vmatpush1.msra.mxu0 %v1107
      %1373 = vmatprep.subr.mxu0 0.0
      %1374 = vmatpush1.msra.mxu0 %v1109
      %1375 = vmatprep.subr.mxu0 0.0
      %1376 = vmatpush1.msra.mxu0 %v1111
      %1377 = vmatprep.subr.mxu0 0.0
      %1378 = vmatpush1.msra.mxu0 %v1113
      %1379 = vmatprep.subr.mxu0 0.0
      %1380 = vmatpush1.msra.mxu0 %v1115
      %1381 = vmatprep.subr.mxu0 0.0
      %1382 = vmatpush1.msra.mxu0 %v1117
      %1383 = vmatprep.subr.mxu0 0.0
      %1384 = vmatpush1.msra.mxu0 %v1119
      %1385 = vmatprep.subr.mxu0 0.0
      %1386 = vmatpush1.msra.mxu0 %v1129
      %1387 = vmatprep.subr.mxu0 0.0
      %1388 = vmatpush1.msra.mxu0 %v1131
      %1389 = vmatprep.subr.mxu0 0.0
      %1390 = vmatpush1.msra.mxu0 %v1133
      %1391 = vmatprep.subr.mxu0 0.0
      %1392 = vmatpush1.msra.mxu0 %v1135
      %1393 = vmatprep.subr.mxu0 0.0
      %1394 = vmatpush1.msra.mxu0 %v1137
      %1395 = vmatprep.subr.mxu0 0.0
      %1396 = vmatpush1.msra.mxu0 %v1139
      %1397 = vmatprep.subr.mxu0 0.0
      %1398 = vmatpush1.msra.mxu0 %v1141
      %1399 = vmatprep.subr.mxu0 0.0
      %1400 = vmatpush1.msra.mxu0 %v1143
      %1401 = vmatprep.mubr.f32.mxu0 %v551
      %1402 = vmatmul.mubr.f32.gmra.mrb[0].mxu0 %v550
      %v1403 = vpop.f32.mrb[0].mxu0
      %v1404 = vadd.f32 %v1275, %v1403
      %v1405 = vpop.f32.mrb[0].mxu0
      %1406 = vmatprep.mubr.f32.mxu0 %v556
      %1407 = vmatmul.mubr.f32.gmra.mrb[0].mxu0 %v555
      %v1408 = vpop.f32.mrb[0].mxu0
      %v1409 = vadd.f32 %v1280, %v1408
      %v1410 = vpop.f32.mrb[0].mxu0
      %1411 = vmatprep.mubr.f32.mxu0 %v561
      %1412 = vmatmul.mubr.f32.gmra.mrb[0].mxu0 %v560
      %v1413 = vpop.f32.mrb[0].mxu0
      %v1414 = vadd.f32 %v1285, %v1413
      %v1415 = vpop.f32.mrb[0].mxu0
      %1416 = vmatprep.mubr.f32.mxu0 %v566
      %1417 = vmatmul.mubr.f32.gmra.mrb[0].mxu0 %v565
      %v1418 = vpop.f32.mrb[0].mxu0
      %v1419 = vadd.f32 %v1290, %v1418
      %v1420 = vpop.f32.mrb[0].mxu0
      %1421 = vmatprep.mubr.f32.mxu0 %v571
      %1422 = vmatmul.mubr.f32.gmra.mrb[0].mxu0 %v570
      %v1423 = vpop.f32.mrb[0].mxu0
      %v1424 = vadd.f32 %v1295, %v1423
      %v1425 = vpop.f32.mrb[0].mxu0
      %1426 = vmatprep.mubr.f32.mxu0 %v576
      %1427 = vmatmul.mubr.f32.gmra.mrb[0].mxu0 %v575
      %v1428 = vpop.f32.mrb[0].mxu0
      %v1429 = vadd.f32 %v1300, %v1428
      %v1430 = vpop.f32.mrb[0].mxu0
      %1431 = vmatprep.mubr.f32.mxu0 %v581
      %1432 = vmatmul.mubr.f32.gmra.mrb[0].mxu0 %v580
      %v1433 = vpop.f32.mrb[0].mxu0
      %v1434 = vadd.f32 %v1305, %v1433
      %v1435 = vpop.f32.mrb[0].mxu0
      %1436 = vmatprep.mubr.f32.mxu0 %v586
      %1437 = vmatmul.mubr.f32.gmra.mrb[0].mxu0 %v585
      %v1438 = vpop.f32.mrb[0].mxu0
      %v1439 = vadd.f32 %v1310, %v1438
      %v1440 = vpop.f32.mrb[0].mxu0
      %1441 = vdwg.mxu0
      %1442 = vmatprep.subr.mxu0 0.0
      %1443 = vmatpush1.msra.mxu0 %v1153
      %1444 = vmatprep.subr.mxu0 0.0
      %1445 = vmatpush1.msra.mxu0 %v1155
      %1446 = vmatprep.subr.mxu0 0.0
      %1447 = vmatpush1.msra.mxu0 %v1157
      %1448 = vmatprep.subr.mxu0 0.0
      %1449 = vmatpush1.msra.mxu0 %v1159
      %1450 = vmatprep.subr.mxu0 0.0
      %1451 = vmatpush1.msra.mxu0 %v1161
      %1452 = vmatprep.subr.mxu0 0.0
      %1453 = vmatpush1.msra.mxu0 %v1163
      %1454 = vmatprep.subr.mxu0 0.0
      %1455 = vmatpush1.msra.mxu0 %v1165
      %1456 = vmatprep.subr.mxu0 0.0
      %1457 = vmatpush1.msra.mxu0 %v1167
      %1458 = vmatprep.subr.mxu0 0.0
      %1459 = vmatpush1.msra.mxu0 %v1177
      %1460 = vmatprep.subr.mxu0 0.0
      %1461 = vmatpush1.msra.mxu0 %v1179
      %1462 = vmatprep.subr.mxu0 0.0
      %1463 = vmatpush1.msra.mxu0 %v1181
      %1464 = vmatprep.subr.mxu0 0.0
      %1465 = vmatpush1.msra.mxu0 %v1183
      %1466 = vmatprep.subr.mxu0 0.0
      %1467 = vmatpush1.msra.mxu0 %v1185
      %1468 = vmatprep.subr.mxu0 0.0
      %1469 = vmatpush1.msra.mxu0 %v1187
      %1470 = vmatprep.subr.mxu0 0.0
      %1471 = vmatpush1.msra.mxu0 %v1189
      %1472 = vmatprep.subr.mxu0 0.0
      %1473 = vmatpush1.msra.mxu0 %v1191
      %1474 = vmatprep.subr.mxu0 0.0
      %1475 = vmatpush1.msra.mxu0 %v1201
      %1476 = vmatprep.subr.mxu0 0.0
      %1477 = vmatpush1.msra.mxu0 %v1203
      %1478 = vmatprep.subr.mxu0 0.0
      %1479 = vmatpush1.msra.mxu0 %v1205
      %1480 = vmatprep.subr.mxu0 0.0
      %1481 = vmatpush1.msra.mxu0 %v1207
      %1482 = vmatprep.subr.mxu0 0.0
      %1483 = vmatpush1.msra.mxu0 %v1209
      %1484 = vmatprep.subr.mxu0 0.0
      %1485 = vmatpush1.msra.mxu0 %v1211
      %1486 = vmatprep.subr.mxu0 0.0
      %1487 = vmatpush1.msra.mxu0 %v1213
      %1488 = vmatprep.subr.mxu0 0.0
      %1489 = vmatpush1.msra.mxu0 %v1215
      %1490 = vmatprep.subr.mxu0 0.0
      %1491 = vmatpush1.msra.mxu0 %v1225
      %1492 = vmatprep.subr.mxu0 0.0
      %1493 = vmatpush1.msra.mxu0 %v1227
      %1494 = vmatprep.subr.mxu0 0.0
      %1495 = vmatpush1.msra.mxu0 %v1229
      %1496 = vmatprep.subr.mxu0 0.0
      %1497 = vmatpush1.msra.mxu0 %v1231
      %1498 = vmatprep.subr.mxu0 0.0
      %1499 = vmatpush1.msra.mxu0 %v1233
      %1500 = vmatprep.subr.mxu0 0.0
      %1501 = vmatpush1.msra.mxu0 %v1235
      %1502 = vmatprep.subr.mxu0 0.0
      %1503 = vmatpush1.msra.mxu0 %v1237
      %1504 = vmatprep.subr.mxu0 0.0
      %1505 = vmatpush1.msra.mxu0 %v1239
      %1506 = vmatprep.mubr.f32.mxu0 %v553
      %1507 = vmatmul.mubr.f32.gmra.mrb[0].mxu0 %v552
      %v1508 = vpop.f32.mrb[0].mxu0
      %v1509 = vadd.f32 %v1404, %v1508
      %v1510 = vpop.f32.mrb[0].mxu0
      %1511 = vmatprep.mubr.f32.mxu0 %v558
      %1512 = vmatmul.mubr.f32.gmra.mrb[0].mxu0 %v557
      %v1513 = vpop.f32.mrb[0].mxu0
      %v1514 = vadd.f32 %v1409, %v1513
      %v1515 = vpop.f32.mrb[0].mxu0
      %1516 = vmatprep.mubr.f32.mxu0 %v563
      %1517 = vmatmul.mubr.f32.gmra.mrb[0].mxu0 %v562
      %v1518 = vpop.f32.mrb[0].mxu0
      %v1519 = vadd.f32 %v1414, %v1518
      %v1520 = vpop.f32.mrb[0].mxu0
      %1521 = vmatprep.mubr.f32.mxu0 %v568
      %1522 = vmatmul.mubr.f32.gmra.mrb[0].mxu0 %v567
      %v1523 = vpop.f32.mrb[0].mxu0
      %v1524 = vadd.f32 %v1419, %v1523
      %v1525 = vpop.f32.mrb[0].mxu0
      %1526 = vmatprep.mubr.f32.mxu0 %v573
      %1527 = vmatmul.mubr.f32.gmra.mrb[0].mxu0 %v572
      %v1528 = vpop.f32.mrb[0].mxu0
      %v1529 = vadd.f32 %v1424, %v1528
      %v1530 = vpop.f32.mrb[0].mxu0
      %1531 = vmatprep.mubr.f32.mxu0 %v578
      %1532 = vmatmul.mubr.f32.gmra.mrb[0].mxu0 %v577
      %v1533 = vpop.f32.mrb[0].mxu0
      %v1534 = vadd.f32 %v1429, %v1533
      %v1535 = vpop.f32.mrb[0].mxu0
      %1536 = vmatprep.mubr.f32.mxu0 %v583
      %1537 = vmatmul.mubr.f32.gmra.mrb[0].mxu0 %v582
      %v1538 = vpop.f32.mrb[0].mxu0
      %v1539 = vadd.f32 %v1434, %v1538
      %v1540 = vpop.f32.mrb[0].mxu0
      %1541 = vmatprep.mubr.f32.mxu0 %v588
      %1542 = vmatmul.mubr.f32.gmra.mrb[0].mxu0 %v587
      %v1543 = vpop.f32.mrb[0].mxu0
      %v1544 = vadd.f32 %v1439, %v1543
      %v1545 = vpop.f32.mrb[0].mxu0
      %1546 = vdwg.mxu0
      %1547 = vmatprep.subr.mxu0 0.0
      %1548 = vmatpush1.msra.mxu0 %v1249
      %1549 = vmatprep.subr.mxu0 0.0
      %1550 = vmatpush1.msra.mxu0 %v1251
      %1551 = vmatprep.subr.mxu0 0.0
      %1552 = vmatpush1.msra.mxu0 %v1253
      %1553 = vmatprep.subr.mxu0 0.0
      %1554 = vmatpush1.msra.mxu0 %v1255
      %1555 = vmatprep.subr.mxu0 0.0
      %1556 = vmatpush1.msra.mxu0 %v1257
      %1557 = vmatprep.subr.mxu0 0.0
      %1558 = vmatpush1.msra.mxu0 %v1259
      %1559 = vmatprep.subr.mxu0 0.0
      %1560 = vmatpush1.msra.mxu0 %v1261
      %1561 = vmatprep.subr.mxu0 0.0
      %1562 = vmatpush1.msra.mxu0 %v1263
      %1563 = vmatprep.subr.mxu0 0.0
      %1564 = vmatpush1.msra.mxu0 0.0
      %1565 = vmatprep.subr.mxu0 0.0
      %1566 = vmatpush1.msra.mxu0 0.0
      %1567 = vmatprep.subr.mxu0 0.0
      %1568 = vmatpush1.msra.mxu0 0.0
      %1569 = vmatprep.subr.mxu0 0.0
      %1570 = vmatpush1.msra.mxu0 0.0
      %1571 = vmatprep.subr.mxu0 0.0
      %1572 = vmatpush1.msra.mxu0 0.0
      %1573 = vmatprep.subr.mxu0 0.0
      %1574 = vmatpush1.msra.mxu0 0.0
      %1575 = vmatprep.subr.mxu0 0.0
      %1576 = vmatpush1.msra.mxu0 0.0
      %1577 = vmatprep.subr.mxu0 0.0
      %1578 = vmatpush1.msra.mxu0 0.0
      %1579 = vmatprep.subr.mxu0 0.0
      %1580 = vmatpush1.msra.mxu0 0.0
      %1581 = vmatprep.subr.mxu0 0.0
      %1582 = vmatpush1.msra.mxu0 0.0
      %1583 = vmatprep.subr.mxu0 0.0
      %1584 = vmatpush1.msra.mxu0 0.0
      %1585 = vmatprep.subr.mxu0 0.0
      %1586 = vmatpush1.msra.mxu0 0.0
      %1587 = vmatprep.subr.mxu0 0.0
      %1588 = vmatpush1.msra.mxu0 0.0
      %1589 = vmatprep.subr.mxu0 0.0
      %1590 = vmatpush1.msra.mxu0 0.0
      %1591 = vmatprep.subr.mxu0 0.0
      %1592 = vmatpush1.msra.mxu0 0.0
      %1593 = vmatprep.subr.mxu0 0.0
      %1594 = vmatpush1.msra.mxu0 0.0
      %1595 = vmatprep.subr.mxu0 0.0
      %1596 = vmatpush1.msra.mxu0 0.0
      %1597 = vmatprep.subr.mxu0 0.0
      %1598 = vmatpush1.msra.mxu0 0.0
      %1599 = vmatprep.subr.mxu0 0.0
      %1600 = vmatpush1.msra.mxu0 0.0
      %1601 = vmatprep.subr.mxu0 0.0
      %1602 = vmatpush1.msra.mxu0 0.0
      %1603 = vmatprep.subr.mxu0 0.0
      %1604 = vmatpush1.msra.mxu0 0.0
      %1605 = vmatprep.subr.mxu0 0.0
      %1606 = vmatpush1.msra.mxu0 0.0
      %1607 = vmatprep.subr.mxu0 0.0
      %1608 = vmatpush1.msra.mxu0 0.0
      %1609 = vmatprep.subr.mxu0 0.0
      %1610 = vmatpush1.msra.mxu0 0.0
      %1611 = vmatprep.mubr.f32.mxu0 0.0
      %1612 = vmatmul.mubr.f32.gmra.mrb[0].mxu0 %v1314
      %v1613 = vpop.f32.mrb[0].mxu0
      %v1614 = vadd.f32 %v1509, %v1613
      %v1615 = vpop.f32.mrb[0].mxu0
      %1616 = vmatprep.mubr.f32.mxu0 0.0
      %1617 = vmatmul.mubr.f32.gmra.mrb[0].mxu0 %v1317
      %v1618 = vpop.f32.mrb[0].mxu0
      %v1619 = vadd.f32 %v1514, %v1618
      %v1620 = vpop.f32.mrb[0].mxu0
      %1621 = vmatprep.mubr.f32.mxu0 0.0
      %1622 = vmatmul.mubr.f32.gmra.mrb[0].mxu0 %v1320
      %v1623 = vpop.f32.mrb[0].mxu0
      %v1624 = vadd.f32 %v1519, %v1623
      %v1625 = vpop.f32.mrb[0].mxu0
      %1626 = vmatprep.mubr.f32.mxu0 0.0
      %1627 = vmatmul.mubr.f32.gmra.mrb[0].mxu0 %v1323
      %v1628 = vpop.f32.mrb[0].mxu0
      %v1629 = vadd.f32 %v1524, %v1628
      %v1630 = vpop.f32.mrb[0].mxu0
      %1631 = vmatprep.mubr.f32.mxu0 0.0
      %1632 = vmatmul.mubr.f32.gmra.mrb[0].mxu0 %v1326
      %v1633 = vpop.f32.mrb[0].mxu0
      %v1634 = vadd.f32 %v1529, %v1633
      %v1635 = vpop.f32.mrb[0].mxu0
      %1636 = vmatprep.mubr.f32.mxu0 0.0
      %1637 = vmatmul.mubr.f32.gmra.mrb[0].mxu0 %v1329
      %v1638 = vpop.f32.mrb[0].mxu0
      %v1639 = vadd.f32 %v1534, %v1638
      %v1640 = vpop.f32.mrb[0].mxu0
      %1641 = vmatprep.mubr.f32.mxu0 0.0
      %1642 = vmatmul.mubr.f32.gmra.mrb[0].mxu0 %v1332
      %v1643 = vpop.f32.mrb[0].mxu0
      %v1644 = vadd.f32 %v1539, %v1643
      %v1645 = vpop.f32.mrb[0].mxu0
      %1646 = vmatprep.mubr.f32.mxu0 0.0
      %1647 = vmatmul.mubr.f32.gmra.mrb[0].mxu0 %v1335
      %v1648 = vpop.f32.mrb[0].mxu0
      %v1649 = vadd.f32 %v1544, %v1648
      %v1650 = vpop.f32.mrb[0].mxu0
      %1651 = vdwg.mxu0
      %1653 = vset.pattern.permute.xlu0 0
      %1654 = vperm.xlu0 %1653, %v542
      %v1655 = vpop.permute.xlu0 %1654
      %1658 = vset.pattern.permute.xlu0 0
      %1659 = vperm.xlu0 %1658, %v543
      %v1660 = vpop.permute.xlu0 %1659
      %1663 = vset.pattern.permute.xlu0 0
      %1664 = vperm.xlu0 %1663, %v544
      %v1665 = vpop.permute.xlu0 %1664
      %1668 = vset.pattern.permute.xlu0 0
      %1669 = vperm.xlu0 %1668, %v545
      %v1670 = vpop.permute.xlu0 %1669
      %1673 = vset.pattern.permute.xlu0 0
      %1674 = vperm.xlu0 %1673, %v546
      %v1675 = vpop.permute.xlu0 %1674
      %1678 = vset.pattern.permute.xlu0 0
      %1679 = vperm.xlu0 %1678, %v547
      %v1680 = vpop.permute.xlu0 %1679
      %1683 = vset.pattern.permute.xlu0 0
      %1684 = vperm.xlu0 %1683, %v548
      %v1685 = vpop.permute.xlu0 %1684
      %1688 = vset.pattern.permute.xlu0 0
      %1689 = vperm.xlu0 %1688, %v549
      %v1690 = vpop.permute.xlu0 %1689
      %v1693 = vsel %vm765, %v534, 0
      %v1696 = vsel %vm765, %v535, 0
      %v1699 = vsel %vm765, %v536, 0
      %v1702 = vsel %vm765, %v537, 0
      %v1705 = vsel %vm765, %v538, 0
      %v1708 = vsel %vm765, %v539, 0
      %v1711 = vsel %vm765, %v540, 0
      %v1714 = vsel %vm765, %v541, 0
      %1716 = vmatprep.subr.mxu0 0.0
      %1717 = vmatpush1.msra.mxu0 %v649
      %1718 = vmatprep.subr.mxu0 0.0
      %1719 = vmatpush1.msra.mxu0 %v650
      %1720 = vmatprep.subr.mxu0 0.0
      %1721 = vmatpush1.msra.mxu0 %v651
      %1722 = vmatprep.subr.mxu0 0.0
      %1723 = vmatpush1.msra.mxu0 %v652
      %1724 = vmatprep.subr.mxu0 0.0
      %1725 = vmatpush1.msra.mxu0 0.0
      %1726 = vmatprep.subr.mxu0 0.0
      %1727 = vmatpush1.msra.mxu0 0.0
      %1728 = vmatprep.subr.mxu0 0.0
      %1729 = vmatpush1.msra.mxu0 0.0
      %1730 = vmatprep.subr.mxu0 0.0
      %1731 = vmatpush1.msra.mxu0 0.0
      %1732 = vmatprep.subr.mxu0 0.0
      %1733 = vmatpush1.msra.mxu0 0.0
      %1734 = vmatprep.subr.mxu0 0.0
      %1735 = vmatpush1.msra.mxu0 0.0
      %1736 = vmatprep.subr.mxu0 0.0
      %1737 = vmatpush1.msra.mxu0 0.0
      %1738 = vmatprep.subr.mxu0 0.0
      %1739 = vmatpush1.msra.mxu0 0.0
      %1740 = vmatprep.subr.mxu0 0.0
      %1741 = vmatpush1.msra.mxu0 0.0
      %1742 = vmatprep.subr.mxu0 0.0
      %1743 = vmatpush1.msra.mxu0 0.0
      %1744 = vmatprep.subr.mxu0 0.0
      %1745 = vmatpush1.msra.mxu0 0.0
      %1746 = vmatprep.subr.mxu0 0.0
      %1747 = vmatpush1.msra.mxu0 0.0
      %1748 = vmatprep.subr.mxu0 0.0
      %1749 = vmatpush1.msra.mxu0 0.0
      %1750 = vmatprep.subr.mxu0 0.0
      %1751 = vmatpush1.msra.mxu0 0.0
      %1752 = vmatprep.subr.mxu0 0.0
      %1753 = vmatpush1.msra.mxu0 0.0
      %1754 = vmatprep.subr.mxu0 0.0
      %1755 = vmatpush1.msra.mxu0 0.0
      %1756 = vmatprep.subr.mxu0 0.0
      %1757 = vmatpush1.msra.mxu0 0.0
      %1758 = vmatprep.subr.mxu0 0.0
      %1759 = vmatpush1.msra.mxu0 0.0
      %1760 = vmatprep.subr.mxu0 0.0
      %1761 = vmatpush1.msra.mxu0 0.0
      %1762 = vmatprep.subr.mxu0 0.0
      %1763 = vmatpush1.msra.mxu0 0.0
      %1764 = vmatprep.subr.mxu0 0.0
      %1765 = vmatpush1.msra.mxu0 0.0
      %1766 = vmatprep.subr.mxu0 0.0
      %1767 = vmatpush1.msra.mxu0 0.0
      %1768 = vmatprep.subr.mxu0 0.0
      %1769 = vmatpush1.msra.mxu0 0.0
      %1770 = vmatprep.subr.mxu0 0.0
      %1771 = vmatpush1.msra.mxu0 0.0
      %1772 = vmatprep.subr.mxu0 0.0
      %1773 = vmatpush1.msra.mxu0 0.0
      %1774 = vmatprep.subr.mxu0 0.0
      %1775 = vmatpush1.msra.mxu0 0.0
      %1776 = vmatprep.subr.mxu0 0.0
      %1777 = vmatpush1.msra.mxu0 0.0
      %1778 = vmatprep.subr.mxu0 0.0
      %1779 = vmatpush1.msra.mxu0 0.0
      %1780 = vmatprep.mubr.f32.mxu0 0.0
      %1781 = vmatmul.mubr.f32.gmra.mrb[0].mxu0 %v1693
      %v1782 = vpop.f32.mrb[0].mxu0
      %v1783 = vadd.f32 %v1655, %v1782
      %v1784 = vpop.f32.mrb[0].mxu0
      %1785 = vmatprep.mubr.f32.mxu0 0.0
      %1786 = vmatmul.mubr.f32.gmra.mrb[0].mxu0 %v1696
      %v1787 = vpop.f32.mrb[0].mxu0
      %v1788 = vadd.f32 %v1660, %v1787
      %v1789 = vpop.f32.mrb[0].mxu0
      %1790 = vmatprep.mubr.f32.mxu0 0.0
      %1791 = vmatmul.mubr.f32.gmra.mrb[0].mxu0 %v1699
      %v1792 = vpop.f32.mrb[0].mxu0
      %v1793 = vadd.f32 %v1665, %v1792
      %v1794 = vpop.f32.mrb[0].mxu0
      %1795 = vmatprep.mubr.f32.mxu0 0.0
      %1796 = vmatmul.mubr.f32.gmra.mrb[0].mxu0 %v1702
      %v1797 = vpop.f32.mrb[0].mxu0
      %v1798 = vadd.f32 %v1670, %v1797
      %v1799 = vpop.f32.mrb[0].mxu0
      %1800 = vmatprep.mubr.f32.mxu0 0.0
      %1801 = vmatmul.mubr.f32.gmra.mrb[0].mxu0 %v1705
      %v1802 = vpop.f32.mrb[0].mxu0
      %v1803 = vadd.f32 %v1675, %v1802
      %v1804 = vpop.f32.mrb[0].mxu0
      %1805 = vmatprep.mubr.f32.mxu0 0.0
      %1806 = vmatmul.mubr.f32.gmra.mrb[0].mxu0 %v1708
      %v1807 = vpop.f32.mrb[0].mxu0
      %v1808 = vadd.f32 %v1680, %v1807
      %v1809 = vpop.f32.mrb[0].mxu0
      %1810 = vmatprep.mubr.f32.mxu0 0.0
      %1811 = vmatmul.mubr.f32.gmra.mrb[0].mxu0 %v1711
      %v1812 = vpop.f32.mrb[0].mxu0
      %v1813 = vadd.f32 %v1685, %v1812
      %v1814 = vpop.f32.mrb[0].mxu0
      %1815 = vmatprep.mubr.f32.mxu0 0.0
      %1816 = vmatmul.mubr.f32.gmra.mrb[0].mxu0 %v1714
      %v1817 = vpop.f32.mrb[0].mxu0
      %v1818 = vadd.f32 %v1690, %v1817
      %v1819 = vpop.f32.mrb[0].mxu0
      %1820 = vdwg.mxu0
      %v1821 = vadd.f32 %v1614, %v1783
      %v1822 = vadd.f32 %v1619, %v1788
      %v1823 = vadd.f32 %v1624, %v1793
      %v1824 = vadd.f32 %v1629, %v1798
      %v1825 = vadd.f32 %v1634, %v1803
      %v1826 = vadd.f32 %v1639, %v1808
      %v1827 = vadd.f32 %v1644, %v1813
      %v1828 = vadd.f32 %v1649, %v1818
      %v1829 = vmax.f32 %v1821, 0.0
      %v1830 = vmax.f32 %v1822, 0.0
      %v1831 = vmax.f32 %v1823, 0.0
      %v1832 = vmax.f32 %v1824, 0.0
      %v1833 = vmax.f32 %v1825, 0.0
      %v1834 = vmax.f32 %v1826, 0.0
      %v1835 = vmax.f32 %v1827, 0.0
      %v1836 = vmax.f32 %v1828, 0.0
      %v1837 = vmul.f32 %v1829, %v1012
      %v1838 = vmul.f32 %v1830, %v1012
      %v1839 = vmul.f32 %v1831, %v1012
      %v1840 = vmul.f32 %v1832, %v1012
      %v1841 = vmul.f32 %v1833, %v1012
      %v1842 = vmul.f32 %v1834, %v1012
      %v1843 = vmul.f32 %v1835, %v1012
      %v1844 = vmul.f32 %v1836, %v1012
      %vm1845 = vcmask 195584
      %v1846 = vsel %vm1845, %v1837, 0.0
      %1847 = vadd.xlane.f32.xlu0 %v1846
      %v1848 = vpop.xlane.xlu0 %1847
      %v1849 = vsel %vm1845, %v1838, 0.0
      %1850 = vadd.xlane.f32.xlu0 %v1849
      %v1851 = vpop.xlane.xlu0 %1850
      %v1852 = vsel %vm1845, %v1839, 0.0
      %1853 = vadd.xlane.f32.xlu0 %v1852
      %v1854 = vpop.xlane.xlu0 %1853
      %v1855 = vsel %vm1845, %v1840, 0.0
      %1856 = vadd.xlane.f32.xlu0 %v1855
      %v1857 = vpop.xlane.xlu0 %1856
      %v1858 = vsel %vm1845, %v1841, 0.0
      %1859 = vadd.xlane.f32.xlu0 %v1858
      %v1860 = vpop.xlane.xlu0 %1859
      %v1861 = vsel %vm1845, %v1842, 0.0
      %1862 = vadd.xlane.f32.xlu0 %v1861
      %v1863 = vpop.xlane.xlu0 %1862
      %v1864 = vsel %vm1845, %v1843, 0.0
      %1865 = vadd.xlane.f32.xlu0 %v1864
      %v1866 = vpop.xlane.xlu0 %1865
      %v1867 = vsel %vm1845, %v1844, 0.0
      %1868 = vadd.xlane.f32.xlu0 %v1867
      %v1869 = vpop.xlane.xlu0 %1868
      %v1870 = vmul.f32 %v1848, 0.0625
      %v1871 = vmul.f32 %v1851, 0.0625
      %v1872 = vmul.f32 %v1854, 0.0625
      %v1873 = vmul.f32 %v1857, 0.0625
      %v1874 = vmul.f32 %v1860, 0.0625
      %v1875 = vmul.f32 %v1863, 0.0625
      %v1876 = vmul.f32 %v1866, 0.0625
      %v1877 = vmul.f32 %v1869, 0.0625
      %v1879 = vsel %vm1312, %v598, 0
      %v1882 = vsel %vm1312, %v599, 0
      %v1885 = vsel %vm1312, %v600, 0
      %v1888 = vsel %vm1312, %v601, 0
      %v1891 = vsel %vm1312, %v602, 0
      %v1894 = vsel %vm1312, %v603, 0
      %v1897 = vsel %vm1312, %v604, 0
      %v1900 = vsel %vm1312, %v605, 0
      %v1903 = vsel %vm1312, %v606, 0
      %v1906 = vsel %vm1312, %v607, 0
      %v1909 = vsel %vm1312, %v608, 0
      %v1912 = vsel %vm1312, %v609, 0
      %v1915 = vsel %vm1312, %v610, 0
      %v1918 = vsel %vm1312, %v611, 0
      %v1921 = vsel %vm1312, %v612, 0
      %v1924 = vsel %vm1312, %v613, 0
      %1926 = vmatprep.subr.mxu0 0.0
      %1927 = vmatpush1.msra.mxu0 %v1870
      %1928 = vmatprep.subr.mxu0 0.0
      %1929 = vmatpush1.msra.mxu0 %v1871
      %1930 = vmatprep.subr.mxu0 0.0
      %1931 = vmatpush1.msra.mxu0 %v1872
      %1932 = vmatprep.subr.mxu0 0.0
      %1933 = vmatpush1.msra.mxu0 %v1873
      %1934 = vmatprep.subr.mxu0 0.0
      %1935 = vmatpush1.msra.mxu0 %v1874
      %1936 = vmatprep.subr.mxu0 0.0
      %1937 = vmatpush1.msra.mxu0 %v1875
      %1938 = vmatprep.subr.mxu0 0.0
      %1939 = vmatpush1.msra.mxu0 %v1876
      %1940 = vmatprep.subr.mxu0 0.0
      %1941 = vmatpush1.msra.mxu0 %v1877
      %1942 = vmatprep.subr.mxu0 0.0
      %1943 = vmatpush1.msra.mxu0 0.0
      %1944 = vmatprep.subr.mxu0 0.0
      %1945 = vmatpush1.msra.mxu0 0.0
      %1946 = vmatprep.subr.mxu0 0.0
      %1947 = vmatpush1.msra.mxu0 0.0
      %1948 = vmatprep.subr.mxu0 0.0
      %1949 = vmatpush1.msra.mxu0 0.0
      %1950 = vmatprep.subr.mxu0 0.0
      %1951 = vmatpush1.msra.mxu0 0.0
      %1952 = vmatprep.subr.mxu0 0.0
      %1953 = vmatpush1.msra.mxu0 0.0
      %1954 = vmatprep.subr.mxu0 0.0
      %1955 = vmatpush1.msra.mxu0 0.0
      %1956 = vmatprep.subr.mxu0 0.0
      %1957 = vmatpush1.msra.mxu0 0.0
      %1958 = vmatprep.subr.mxu0 0.0
      %1959 = vmatpush1.msra.mxu0 0.0
      %1960 = vmatprep.subr.mxu0 0.0
      %1961 = vmatpush1.msra.mxu0 0.0
      %1962 = vmatprep.subr.mxu0 0.0
      %1963 = vmatpush1.msra.mxu0 0.0
      %1964 = vmatprep.subr.mxu0 0.0
      %1965 = vmatpush1.msra.mxu0 0.0
      %1966 = vmatprep.subr.mxu0 0.0
      %1967 = vmatpush1.msra.mxu0 0.0
      %1968 = vmatprep.subr.mxu0 0.0
      %1969 = vmatpush1.msra.mxu0 0.0
      %1970 = vmatprep.subr.mxu0 0.0
      %1971 = vmatpush1.msra.mxu0 0.0
      %1972 = vmatprep.subr.mxu0 0.0
      %1973 = vmatpush1.msra.mxu0 0.0
      %1974 = vmatprep.subr.mxu0 0.0
      %1975 = vmatpush1.msra.mxu0 0.0
      %1976 = vmatprep.subr.mxu0 0.0
      %1977 = vmatpush1.msra.mxu0 0.0
      %1978 = vmatprep.subr.mxu0 0.0
      %1979 = vmatpush1.msra.mxu0 0.0
      %1980 = vmatprep.subr.mxu0 0.0
      %1981 = vmatpush1.msra.mxu0 0.0
      %1982 = vmatprep.subr.mxu0 0.0
      %1983 = vmatpush1.msra.mxu0 0.0
      %1984 = vmatprep.subr.mxu0 0.0
      %1985 = vmatpush1.msra.mxu0 0.0
      %1986 = vmatprep.subr.mxu0 0.0
      %1987 = vmatpush1.msra.mxu0 0.0
      %1988 = vmatprep.subr.mxu0 0.0
      %1989 = vmatpush1.msra.mxu0 0.0
      %1990 = vmatprep.mubr.f32.mxu0 0.0
      %1991 = vmatmul.mubr.f32.gmra.mrb[0].mxu0 %v1879
      %v1992 = vpop.f32.mrb[0].mxu0
      %v1993 = vadd.f32 %v614, %v1992
      %v1994 = vpop.f32.mrb[0].mxu0
      %1995 = vmatprep.mubr.f32.mxu0 0.0
      %1996 = vmatmul.mubr.f32.gmra.mrb[0].mxu0 %v1882
      %v1997 = vpop.f32.mrb[0].mxu0
      %v1998 = vadd.f32 %v615, %v1997
      %v1999 = vpop.f32.mrb[0].mxu0
      %2000 = vmatprep.mubr.f32.mxu0 0.0
      %2001 = vmatmul.mubr.f32.gmra.mrb[0].mxu0 %v1885
      %v2002 = vpop.f32.mrb[0].mxu0
      %v2003 = vadd.f32 %v616, %v2002
      %v2004 = vpop.f32.mrb[0].mxu0
      %2005 = vmatprep.mubr.f32.mxu0 0.0
      %2006 = vmatmul.mubr.f32.gmra.mrb[0].mxu0 %v1888
      %v2007 = vpop.f32.mrb[0].mxu0
      %v2008 = vadd.f32 %v617, %v2007
      %v2009 = vpop.f32.mrb[0].mxu0
      %2010 = vmatprep.mubr.f32.mxu0 0.0
      %2011 = vmatmul.mubr.f32.gmra.mrb[0].mxu0 %v1891
      %v2012 = vpop.f32.mrb[0].mxu0
      %v2013 = vadd.f32 %v618, %v2012
      %v2014 = vpop.f32.mrb[0].mxu0
      %2015 = vmatprep.mubr.f32.mxu0 0.0
      %2016 = vmatmul.mubr.f32.gmra.mrb[0].mxu0 %v1894
      %v2017 = vpop.f32.mrb[0].mxu0
      %v2018 = vadd.f32 %v619, %v2017
      %v2019 = vpop.f32.mrb[0].mxu0
      %2020 = vmatprep.mubr.f32.mxu0 0.0
      %2021 = vmatmul.mubr.f32.gmra.mrb[0].mxu0 %v1897
      %v2022 = vpop.f32.mrb[0].mxu0
      %v2023 = vadd.f32 %v620, %v2022
      %v2024 = vpop.f32.mrb[0].mxu0
      %2025 = vmatprep.mubr.f32.mxu0 0.0
      %2026 = vmatmul.mubr.f32.gmra.mrb[0].mxu0 %v1900
      %v2027 = vpop.f32.mrb[0].mxu0
      %v2028 = vadd.f32 %v621, %v2027
      %v2029 = vpop.f32.mrb[0].mxu0
      %2030 = vmatprep.mubr.f32.mxu0 0.0
      %2031 = vmatmul.mubr.f32.gmra.mrb[0].mxu0 %v1903
      %v2032 = vpop.f32.mrb[0].mxu0
      %v2033 = vadd.f32 %v622, %v2032
      %v2034 = vpop.f32.mrb[0].mxu0
      %2035 = vmatprep.mubr.f32.mxu0 0.0
      %2036 = vmatmul.mubr.f32.gmra.mrb[0].mxu0 %v1906
      %v2037 = vpop.f32.mrb[0].mxu0
      %v2038 = vadd.f32 %v623, %v2037
      %v2039 = vpop.f32.mrb[0].mxu0
      %2040 = vmatprep.mubr.f32.mxu0 0.0
      %2041 = vmatmul.mubr.f32.gmra.mrb[0].mxu0 %v1909
      %v2042 = vpop.f32.mrb[0].mxu0
      %v2043 = vadd.f32 %v624, %v2042
      %v2044 = vpop.f32.mrb[0].mxu0
      %2045 = vmatprep.mubr.f32.mxu0 0.0
      %2046 = vmatmul.mubr.f32.gmra.mrb[0].mxu0 %v1912
      %v2047 = vpop.f32.mrb[0].mxu0
      %v2048 = vadd.f32 %v625, %v2047
      %v2049 = vpop.f32.mrb[0].mxu0
      %2050 = vmatprep.mubr.f32.mxu0 0.0
      %2051 = vmatmul.mubr.f32.gmra.mrb[0].mxu0 %v1915
      %v2052 = vpop.f32.mrb[0].mxu0
      %v2053 = vadd.f32 %v626, %v2052
      %v2054 = vpop.f32.mrb[0].mxu0
      %2055 = vmatprep.mubr.f32.mxu0 0.0
      %2056 = vmatmul.mubr.f32.gmra.mrb[0].mxu0 %v1918
      %v2057 = vpop.f32.mrb[0].mxu0
      %v2058 = vadd.f32 %v627, %v2057
      %v2059 = vpop.f32.mrb[0].mxu0
      %2060 = vmatprep.mubr.f32.mxu0 0.0
      %2061 = vmatmul.mubr.f32.gmra.mrb[0].mxu0 %v1921
      %v2062 = vpop.f32.mrb[0].mxu0
      %v2063 = vadd.f32 %v628, %v2062
      %v2064 = vpop.f32.mrb[0].mxu0
      %2065 = vmatprep.mubr.f32.mxu0 0.0
      %2066 = vmatmul.mubr.f32.gmra.mrb[0].mxu0 %v1924
      %v2067 = vpop.f32.mrb[0].mxu0
      %v2068 = vadd.f32 %v629, %v2067
      %v2069 = vpop.f32.mrb[0].mxu0
      %2070 = vdwg.mxu0
      %v2071 = vld [vmem:[%s490] sm:$0xff]
      %v2072 = vld [vmem:[%s490 + $0x8] sm:$0xff]
      %v2073 = vld [vmem:[%s490 + $0x10] sm:$0xff]
      %v2074 = vld [vmem:[%s490 + $0x18] sm:$0xff]
      %v2075 = vld [vmem:[%s490 + $0x20] sm:$0xff]
      %v2076 = vld [vmem:[%s490 + $0x28] sm:$0xff]
      %v2077 = vld [vmem:[%s490 + $0x30] sm:$0xff]
      %v2078 = vld [vmem:[%s490 + $0x38] sm:$0xff]
      %v2079 = vmul.f32 %v2033, 0.5
      %v2080 = vmul.f32 %v2038, 0.5
      %v2081 = vmul.f32 %v2043, 0.5
      %v2082 = vmul.f32 %v2048, 0.5
      %v2083 = vmul.f32 %v2053, 0.5
      %v2084 = vmul.f32 %v2058, 0.5
      %v2085 = vmul.f32 %v2063, 0.5
      %v2086 = vmul.f32 %v2068, 0.5
      %v2087 = vmul.f32 %v2079, 1.442695
      %v2088 = vpow.pop %v2087
      %v2089 = vmul.f32 %v2080, 1.442695
      %v2090 = vpow.pop %v2089
      %v2091 = vmul.f32 %v2081, 1.442695
      %v2092 = vpow.pop %v2091
      %v2093 = vmul.f32 %v2082, 1.442695
      %v2094 = vpow.pop %v2093
      %v2095 = vmul.f32 %v2083, 1.442695
      %v2096 = vpow.pop %v2095
      %v2097 = vmul.f32 %v2084, 1.442695
      %v2098 = vpow.pop %v2097
      %v2099 = vmul.f32 %v2085, 1.442695
      %v2100 = vpow.pop %v2099
      %v2101 = vmul.f32 %v2086, 1.442695
      %v2102 = vpow.pop %v2101
      %v2103 = vmul.f32 %v2071, %v2088
      %v2104 = vmul.f32 %v2072, %v2090
      %v2105 = vmul.f32 %v2073, %v2092
      %v2106 = vmul.f32 %v2074, %v2094
      %v2107 = vmul.f32 %v2075, %v2096
      %v2108 = vmul.f32 %v2076, %v2098
      %v2109 = vmul.f32 %v2077, %v2100
      %v2110 = vmul.f32 %v2078, %v2102
      %v2111 = vadd.f32 %v2103, %v1993
      %v2112 = vadd.f32 %v2104, %v1998
      %v2113 = vadd.f32 %v2105, %v2003
      %v2114 = vadd.f32 %v2106, %v2008
      %v2115 = vadd.f32 %v2107, %v2013
      %v2116 = vadd.f32 %v2108, %v2018
      %v2117 = vadd.f32 %v2109, %v2023
      %v2118 = vadd.f32 %v2110, %v2028
      %v2120 = vsel %vm1312, %v630, 0
      %v2123 = vsel %vm1312, %v631, 0
      %2125 = vmatprep.subr.mxu0 0.0
      %2126 = vmatpush1.msra.mxu0 %v2111
      %2127 = vmatprep.subr.mxu0 0.0
      %2128 = vmatpush1.msra.mxu0 %v2112
      %2129 = vmatprep.subr.mxu0 0.0
      %2130 = vmatpush1.msra.mxu0 %v2113
      %2131 = vmatprep.subr.mxu0 0.0
      %2132 = vmatpush1.msra.mxu0 %v2114
      %2133 = vmatprep.subr.mxu0 0.0
      %2134 = vmatpush1.msra.mxu0 %v2115
      %2135 = vmatprep.subr.mxu0 0.0
      %2136 = vmatpush1.msra.mxu0 %v2116
      %2137 = vmatprep.subr.mxu0 0.0
      %2138 = vmatpush1.msra.mxu0 %v2117
      %2139 = vmatprep.subr.mxu0 0.0
      %2140 = vmatpush1.msra.mxu0 %v2118
      %2141 = vmatprep.subr.mxu0 0.0
      %2142 = vmatpush1.msra.mxu0 0.0
      %2143 = vmatprep.subr.mxu0 0.0
      %2144 = vmatpush1.msra.mxu0 0.0
      %2145 = vmatprep.subr.mxu0 0.0
      %2146 = vmatpush1.msra.mxu0 0.0
      %2147 = vmatprep.subr.mxu0 0.0
      %2148 = vmatpush1.msra.mxu0 0.0
      %2149 = vmatprep.subr.mxu0 0.0
      %2150 = vmatpush1.msra.mxu0 0.0
      %2151 = vmatprep.subr.mxu0 0.0
      %2152 = vmatpush1.msra.mxu0 0.0
      %2153 = vmatprep.subr.mxu0 0.0
      %2154 = vmatpush1.msra.mxu0 0.0
      %2155 = vmatprep.subr.mxu0 0.0
      %2156 = vmatpush1.msra.mxu0 0.0
      %2157 = vmatprep.subr.mxu0 0.0
      %2158 = vmatpush1.msra.mxu0 0.0
      %2159 = vmatprep.subr.mxu0 0.0
      %2160 = vmatpush1.msra.mxu0 0.0
      %2161 = vmatprep.subr.mxu0 0.0
      %2162 = vmatpush1.msra.mxu0 0.0
      %2163 = vmatprep.subr.mxu0 0.0
      %2164 = vmatpush1.msra.mxu0 0.0
      %2165 = vmatprep.subr.mxu0 0.0
      %2166 = vmatpush1.msra.mxu0 0.0
      %2167 = vmatprep.subr.mxu0 0.0
      %2168 = vmatpush1.msra.mxu0 0.0
      %2169 = vmatprep.subr.mxu0 0.0
      %2170 = vmatpush1.msra.mxu0 0.0
      %2171 = vmatprep.subr.mxu0 0.0
      %2172 = vmatpush1.msra.mxu0 0.0
      %2173 = vmatprep.subr.mxu0 0.0
      %2174 = vmatpush1.msra.mxu0 0.0
      %2175 = vmatprep.subr.mxu0 0.0
      %2176 = vmatpush1.msra.mxu0 0.0
      %2177 = vmatprep.subr.mxu0 0.0
      %2178 = vmatpush1.msra.mxu0 0.0
      %2179 = vmatprep.subr.mxu0 0.0
      %2180 = vmatpush1.msra.mxu0 0.0
      %2181 = vmatprep.subr.mxu0 0.0
      %2182 = vmatpush1.msra.mxu0 0.0
      %2183 = vmatprep.subr.mxu0 0.0
      %2184 = vmatpush1.msra.mxu0 0.0
      %2185 = vmatprep.subr.mxu0 0.0
      %2186 = vmatpush1.msra.mxu0 0.0
      %2187 = vmatprep.subr.mxu0 0.0
      %2188 = vmatpush1.msra.mxu0 0.0
      %2189 = vmatprep.mubr.f32.mxu0 0.0
      %2190 = vmatmul.mubr.f32.gmra.mrb[0].mxu0 %v2120
      %v2191 = vpop.f32.mrb[0].mxu0
      %v2192 = vadd.f32 %v632, %v2191
      %v2193 = vpop.f32.mrb[0].mxu0
      %2194 = vmatprep.mubr.f32.mxu0 0.0
      %2195 = vmatmul.mubr.f32.gmra.mrb[0].mxu0 %v2123
      %v2196 = vpop.f32.mrb[0].mxu0
      %v2197 = vadd.f32 %v633, %v2196
      %v2198 = vpop.f32.mrb[0].mxu0
      %2199 = vdwg.mxu0
      %vm2200 = vcmask 7168
      %2201 = vst.msk [vmem:[%s495] sm:$0xff] %vm2200, %v1993
      %2202 = vst.msk [vmem:[%s495 + $0x8] sm:$0xff] %vm2200, %v1998
      %2203 = vst.msk [vmem:[%s495 + $0x10] sm:$0xff] %vm2200, %v2003
      %2204 = vst.msk [vmem:[%s495 + $0x18] sm:$0xff] %vm2200, %v2008
      %2205 = vst.msk [vmem:[%s495 + $0x20] sm:$0xff] %vm2200, %v2013
      %2206 = vst.msk [vmem:[%s495 + $0x28] sm:$0xff] %vm2200, %v2018
      %2207 = vst.msk [vmem:[%s495 + $0x30] sm:$0xff] %vm2200, %v2023
      %2208 = vst.msk [vmem:[%s495 + $0x38] sm:$0xff] %vm2200, %v2028
      %2209 = vst.msk [vmem:[%s495 + $0x40] sm:$0xff] %vm2200, %v2033
      %2210 = vst.msk [vmem:[%s495 + $0x48] sm:$0xff] %vm2200, %v2038
      %2211 = vst.msk [vmem:[%s495 + $0x50] sm:$0xff] %vm2200, %v2043
      %2212 = vst.msk [vmem:[%s495 + $0x58] sm:$0xff] %vm2200, %v2048
      %2213 = vst.msk [vmem:[%s495 + $0x60] sm:$0xff] %vm2200, %v2053
      %2214 = vst.msk [vmem:[%s495 + $0x68] sm:$0xff] %vm2200, %v2058
      %2215 = vst.msk [vmem:[%s495 + $0x70] sm:$0xff] %vm2200, %v2063
      %2216 = vst.msk [vmem:[%s495 + $0x78] sm:$0xff] %vm2200, %v2068
      %2217 = vst.msk [vmem:[%s500] sm:$0xff] %vm2200, %v2192
      %2218 = vst.msk [vmem:[%s500 + $0x8] sm:$0xff] %vm2200, %v2197
      %p2219 = scmp.lt.s32.totalorder %s26, 1
      %s2220 = scalar_select %p2219, %s26, 1
      %s2221 = smul.addr %s2220, 16
      %s2222 = smul.addr %s2221, 8
      %s2223 = scalar_lea.vmem %s13, %s2222
      %p2224 = scmp.lt.s32.totalorder %s26, 1
      %s2225 = scalar_select %p2224, %s26, 1
      %s2226 = smul.addr %s2225, 2
      %s2227 = smul.addr %s2226, 8
      %s2228 = scalar_lea.vmem %s14, %s2227
      // Predicated region
      $region73: #{resnet_vib_forward.5} parent=71 // pred_check
        %p2229 = pneg %p327
      $region74: #{resnet_vib_forward.5} parent=71 // pred_check_branch
        %2231 = sbr.rel (%p2229) target = $region76
      $region75: #{resnet_vib_forward.5} parent=71 // pred_region
        _
      $region76: #{resnet_vib_forward.5} parent=71 // pred_fallthru
        _
      // Predicated region
      $region77: #{resnet_vib_forward.5} parent=71 // pred_check
        %p2232 = pneg %p353
      $region78: #{resnet_vib_forward.5} parent=71 // pred_check_branch
        %2234 = sbr.rel (%p2232) target = $region80
      $region79: #{resnet_vib_forward.5} parent=71 // pred_region
        _
      $region80: #{resnet_vib_forward.5} parent=71 // pred_fallthru
        _
    $region72: #{resnet_vib_forward.5} parent=5 // pred_fallthru
      _
    %p2235 = scmp.le.s32.totalorder 2, %s21
    // Predicated region
    $region81: #{resnet_vib_forward.5} parent=5 // pred_check
      %p2236 = pneg %p2235
    $region82: #{resnet_vib_forward.5} parent=5 // pred_check_branch
      %2238 = sbr.rel (%p2236) target = $region84
    $region83: #{resnet_vib_forward.5} parent=5 // pred_region
      %s2239 = ssub.s32 %s21, 2
      // Predicated region
      $region85: #{resnet_vib_forward.5} parent=83 // pred_check
        %p2240 = pneg %p333
      $region86: #{resnet_vib_forward.5} parent=83 // pred_check_branch
        %2242 = sbr.rel (%p2240) target = $region88
      $region87: #{resnet_vib_forward.5} parent=83 // pred_region
        %p2243 = scmp.lt.s32.totalorder %s27, 1
        %s2244 = scalar_select %p2243, %s27, 1
        %s2245 = smul.addr %s2244, 16
        %s2246 = smul.addr %s2245, 8
        %s2247 = scalar_lea.vmem %s13, %s2246
      $region88: #{resnet_vib_forward.5} parent=83 // pred_fallthru
        _
      // Predicated region
      $region89: #{resnet_vib_forward.5} parent=83 // pred_check
        %p2248 = pneg %p359
      $region90: #{resnet_vib_forward.5} parent=83 // pred_check_branch
        %2250 = sbr.rel (%p2248) target = $region92
      $region91: #{resnet_vib_forward.5} parent=83 // pred_region
        %p2251 = scmp.lt.s32.totalorder %s27, 1
        %s2252 = scalar_select %p2251, %s27, 1
        %s2253 = smul.addr %s2252, 2
        %s2254 = smul.addr %s2253, 8
        %s2255 = scalar_lea.vmem %s14, %s2254
      $region92: #{resnet_vib_forward.5} parent=83 // pred_fallthru
        _
    $region84: #{resnet_vib_forward.5} parent=5 // pred_fallthru
      _
  $region6: #{resnet_vib_forward.5} parent=0 // loop_footer
    %s25 = sadd.s32 1, %s21
  $region7: #{resnet_vib_forward.5} parent=0 // loop_footer_branch
    %20 = sbr.rel target = $region3
  $region8: #{resnet_vib_forward.5} parent=0 // loop_exit
    _

</llo_original>
